<compile_context>
chip_gen: v7x
topology: tpu7x:2x2x1
jax: 0.10.0
libtpu: 0.0.40
codegen_flags: <defaults>
</compile_context>

<pallas_src>
import functools

import jax
import jax.numpy as jnp
from jax.experimental import pallas as pl
from jax.experimental.pallas import tpu as pltpu

_SELU_ALPHA = 1.6732632423543772
_SELU_SCALE = 1.0507009873554805


def _selu(y):
    # Negative branch on clamped input so exp never overflows in the untaken
    # branch of jnp.where (both branches are evaluated).
    neg = _SELU_ALPHA * (jnp.exp(jnp.minimum(y, 0.0)) - 1.0)
    return _SELU_SCALE * jnp.where(y > 0.0, y, neg)


def _round_up(x, m):
    return ((x + m - 1) // m) * m


# ----------------------------------------------------------------------------
# Single fused kernel.  Gate order matches torch.nn.LSTM: [i, f, g, o].
# ----------------------------------------------------------------------------
def _seq2seq_kernel(*refs, T, B, H, L, enc_in, dec_in):
    x_ref = refs[0]
    enc_slab_refs = refs[1:1 + L]            # (enc_in[l] + H, 4H) bf16
    enc_fcw_ref = refs[1 + L]                # (H, Ep) bf16
    dec_slab_refs = refs[2 + L:2 + 2 * L]    # (dec_in[l] + H, 4H) bf16
    biases_ref = refs[2 + 2 * L]             # (2L, 4H) f32 folded b_ih+b_hh
    enc_fcb_ref = refs[3 + 2 * L]            # (1, Ep) f32
    w1_ref = refs[4 + 2 * L]                 # (1, H)  f32
    w0b_ref = refs[5 + 2 * L]                # (O, B+1) f32 [w0 | fused bias]
    out_ref = refs[6 + 2 * L]                # (O, T)  f32
    s_sc = refs[7 + 2 * L]                   # (B, T)  f32 scratch

    f32 = jnp.float32
    bf16 = jnp.bfloat16

    # Hoisted lane constants: sigmoid(x) = 0.5*tanh(0.5*x) + 0.5 on the i/f/o
    # lane blocks, plain tanh(x) on the g block -> one EUP pass per step.
    lane = jax.lax.broadcasted_iota(jnp.int32, (1, 4 * H), 1)
    is_g = jnp.logical_and(lane >= 2 * H, lane < 3 * H)
    g_sc = jnp.where(is_g, 1.0, 0.5).astype(f32)
    g_sh = jnp.where(is_g, 0.0, 0.5).astype(f32)

    def gate_step(pre_t, h, c, whh_bf):
        # Only h @ Whh^T (bf16 MXU, f32 accumulate) sits on the carry chain.
        gates = pre_t + jnp.dot(h.astype(bf16), whh_bf,
                                preferred_element_type=f32)
        act = jnp.tanh(gates * g_sc) * g_sc + g_sh
        i_g = act[:, 0 * H:1 * H]
        f_g = act[:, 1 * H:2 * H]
        g_g = act[:, 2 * H:3 * H]
        o_g = act[:, 3 * H:4 * H]
        c_new = f_g * c + i_g * g_g
        h_new = o_g * jnp.tanh(c_new)
        return h_new, c_new

    # Hoisted weight loads (one VMEM read each, reused across the unrolled loop).
    enc_fcw = enc_fcw_ref[...]
    enc_fcb = enc_fcb_ref[...]
    dec_wih0 = dec_slab_refs[0][0:dec_in[0], :]
    dec_bias0 = biases_ref[L:L + 1, :]
    w1 = w1_ref[...]

    # ---- encoder LSTM stack (time loop fully unrolled) ----
    pre = None
    dec_pre0 = []          # decoder layer-0 pre, produced inside the encoder loop
    enc_finals = []
    for l in range(L):
        in_p = enc_in[l]
        slab = enc_slab_refs[l]
        whh = slab[in_p:in_p + H, :]
        last = l == L - 1
        if l == 0:
            # Layer-0 input projection hoisted off the recurrence: one batched
            # bf16 matmul over all timesteps, bias folded in.
            wih0 = slab[0:in_p, :]
            pre_full = (jnp.dot(x_ref[...], wih0, preferred_element_type=f32)
                        + biases_ref[0:1, :])
            pre = [pre_full[t * B:(t + 1) * B, :] for t in range(T)]
        if not last:
            wih_next = enc_slab_refs[l + 1][0:enc_in[l + 1], :]
            bias_next = biases_ref[l + 1:l + 2, :]
        h = jnp.zeros((B, H), f32)
        c = jnp.zeros((B, H), f32)
        next_pre = []
        for t in range(T):
            h, c = gate_step(pre[t], h, c, whh)
            h_bf = h.astype(bf16)
            if not last:
                # Next encoder layer's input projection, fused (off carry chain).
                next_pre.append(
                    jnp.dot(h_bf, wih_next, preferred_element_type=f32)
                    + bias_next)
            else:
                # Encoder fc + SELU and decoder layer-0 input projection fused
                # into the encoder time loop (both off the carry chain).
                enc_t = _selu(jnp.dot(h_bf, enc_fcw,
                                      preferred_element_type=f32) + enc_fcb)
                dec_pre0.append(
                    jnp.dot(enc_t.astype(bf16), dec_wih0,
                            preferred_element_type=f32) + dec_bias0)
        enc_finals.append((h, c))
        if not last:
            pre = next_pre

    # ---- decoder LSTM stack, seeded with encoder final (h, c) per layer ----
    pre = dec_pre0
    for l in range(L):
        in_p = dec_in[l]
        whh = dec_slab_refs[l][in_p:in_p + H, :]
        last = l == L - 1
        if not last:
            wih_next = dec_slab_refs[l + 1][0:dec_in[l + 1], :]
            bias_next = biases_ref[L + l + 1:L + l + 2, :]
        h, c = enc_finals[l]
        next_pre = []
        for t in range(T):
            h, c = gate_step(pre[t], h, c, whh)
            if not last:
                next_pre.append(
                    jnp.dot(h.astype(bf16), wih_next,
                            preferred_element_type=f32) + bias_next)
            else:
                # fc_1 folded per step: s_t[b] = sum_h h_t[b,h] * w1[h]
                # (VPU multiply + XLU lane reduce, off the carry chain).
                s_sc[:, t:t + 1] = jnp.sum(h * w1, axis=1, keepdims=True)
        if not last:
            pre = next_pre

    # ---- fc_0 over the batch dim (torch transpose_(0,2)) + fused bias + selu ----
    #   out[o, t] = selu( sum_b W0[o,b] * s_sc[b,t] + (b0[o]*sum(w1) + b1) )
    w0b = w0b_ref[...]
    out = (jnp.dot(w0b[:, 0:B], s_sc[...], preferred_element_type=f32)
           + w0b[:, B:B + 1])
    out_ref[...] = _selu(out)


# ----------------------------------------------------------------------------
# Wrapper: parameter packing (plain-JAX glue, tiny) + single grid-less
# pallas_call (no pipelining / no double buffering for a one-shot kernel).
# ----------------------------------------------------------------------------
def seq2seq_forward(params, input_batch):
    B, T, D = input_batch.shape
    H = params["enc_lstm"][0]["w_hh"].shape[1]
    E = params["enc_fc"]["w"].shape[0]
    O = params["dec_fc0"]["w"].shape[0]
    L = len(params["enc_lstm"])
    if params["dec_fc0"]["w"].shape[1] != B:
        raise ValueError(
            "fc_0 acts along the batch dim (reference transpose_(0,2)); "
            "batch size must equal input_length.")

    Bp = _round_up(B, 8)       # sublane-align the per-step batch rows
    Dp = _round_up(D, 8)       # sublane-align layer-0 weight slab slices
    Ep = _round_up(E, 8)

    # time-major flatten, zero-padded: row index = t*Bp + b.
    x = jnp.transpose(input_batch, (1, 0, 2))                       # (T, B, D)
    x = jnp.pad(x, ((0, 0), (0, Bp - B), (0, Dp - D)))
    x2d = x.reshape(T * Bp, Dp).astype(jnp.bfloat16)

    def pack_lstm(layer, in_pad):
        w_ih_t = jnp.transpose(layer["w_ih"])                       # (in, 4H)
        w_ih_t = jnp.pad(w_ih_t, ((0, in_pad - w_ih_t.shape[0]), (0, 0)))
        w_hh_t = jnp.transpose(layer["w_hh"])                       # (H, 4H)
        slab = jnp.concatenate([w_ih_t, w_hh_t], axis=0).astype(jnp.bfloat16)
        bias = (layer["b_ih"] + layer["b_hh"]).reshape(1, 4 * H)    # f32 folded
        return slab, bias

    enc_in_pads = tuple([Dp] + [H] * (L - 1))
    dec_in_pads = tuple([Ep] + [H] * (L - 1))
    enc_packed = [pack_lstm(l, p) for l, p in zip(params["enc_lstm"], enc_in_pads)]
    dec_packed = [pack_lstm(l, p) for l, p in zip(params["dec_lstm"], dec_in_pads)]
    enc_slabs = [s for s, _ in enc_packed]
    dec_slabs = [s for s, _ in dec_packed]
    biases = jnp.concatenate([b for _, b in enc_packed]
                             + [b for _, b in dec_packed], axis=0)  # (2L, 4H) f32

    enc_fc_w = jnp.pad(jnp.transpose(params["enc_fc"]["w"]),
                       ((0, 0), (0, Ep - E))).astype(jnp.bfloat16)  # (H, Ep)
    enc_fc_b = jnp.pad(params["enc_fc"]["b"].reshape(1, E),
                       ((0, 0), (0, Ep - E)))                       # (1, Ep) f32

    # fc_0 / fc_1 commute (linear over different axes):
    #   out[:, t] = selu( W0 @ (h_t @ w1^T) + (b0*sum(w1) + b1) )
    w1 = params["dec_fc1"]["w"].reshape(1, H)                       # (1, H) f32
    fused_bias = (params["dec_fc0"]["b"] * jnp.sum(w1)
                  + params["dec_fc1"]["b"][0]).reshape(O, 1)
    w0 = jnp.pad(params["dec_fc0"]["w"], ((0, 0), (0, Bp - B)))     # zero pad cols
    w0b = jnp.concatenate([w0, fused_bias], axis=1)                 # (O, Bp+1) f32

    args = [x2d, *enc_slabs, enc_fc_w, *dec_slabs, biases, enc_fc_b, w1, w0b]

    kernel = functools.partial(_seq2seq_kernel, T=T, B=Bp, H=H, L=L,
                               enc_in=enc_in_pads, dec_in=dec_in_pads)
    out_ot = pl.pallas_call(
        kernel,
        out_shape=jax.ShapeDtypeStruct((O, T), jnp.float32),
        scratch_shapes=[pltpu.VMEM((Bp, T), jnp.float32)],
    )(*args)
    return out_ot.reshape(O, T, 1)


# ----------------------------------------------------------------------------
# Parameter init (deterministic, torch-style uniform(-1/sqrt(H), 1/sqrt(H)))
# ----------------------------------------------------------------------------
def _uniform(key, shape, bound):
    return jax.random.uniform(key, shape, jnp.float32, -bound, bound)


def init_lstm_layer(key, input_dim, hidden):
    k = 1.0 / float(hidden) ** 0.5
    ks = jax.random.split(key, 4)
    return dict(
        w_ih=_uniform(ks[0], (4 * hidden, input_dim), k),
        w_hh=_uniform(ks[1], (4 * hidden, hidden), k),
        b_ih=_uniform(ks[2], (4 * hidden,), k),
        b_hh=_uniform(ks[3], (4 * hidden,), k),
    )


def init_linear(key, in_dim, out_dim):
    k = 1.0 / float(in_dim) ** 0.5
    ks = jax.random.split(key, 2)
    return dict(w=_uniform(ks[0], (out_dim, in_dim), k),
                b=_uniform(ks[1], (out_dim,), k))


def init_seq2seq(key, input_length, output_length, input_size, hidden_size,
                 encoder_size, layer_dim):
    keys = jax.random.split(key, 2 * layer_dim + 3)
    enc_layers = [init_lstm_layer(keys[l],
                                  input_size if l == 0 else hidden_size,
                                  hidden_size) for l in range(layer_dim)]
    dec_layers = [init_lstm_layer(keys[layer_dim + l],
                                  encoder_size if l == 0 else hidden_size,
                                  hidden_size) for l in range(layer_dim)]
    return dict(
        enc_lstm=enc_layers,
        enc_fc=init_linear(keys[2 * layer_dim], hidden_size, encoder_size),
        dec_lstm=dec_layers,
        dec_fc0=init_linear(keys[2 * layer_dim + 1], input_length, output_length),
        dec_fc1=init_linear(keys[2 * layer_dim + 2], hidden_size, 1),
    )


if __name__ == "__main__":
    # batch must equal input_length because the reference fc_0 acts on dim-0
    # of the batch-first rnn output (transpose_(0, 2)).
    B, T, D = 8, 12, 4
    hidden_size, encoder_size = 32, 16
    input_length, output_length = B, 6
    layer_dim = 1

    key = jax.random.PRNGKey(0)
    k_params, k_x = jax.random.split(key)
    params = init_seq2seq(k_params, input_length, output_length, D,
                          hidden_size, encoder_size, layer_dim)
    x = jax.random.normal(k_x, (B, T, D), dtype=jnp.float32)

    fwd = jax.jit(seq2seq_forward)
    out = jax.block_until_ready(fwd(params, x))
    assert out.shape == (output_length, T, 1), out.shape
    assert bool(jnp.all(jnp.isfinite(out)))
    print("KERNEL_OK")
</pallas_src>

<mosaic_0001>
module attributes {stable_mosaic.version = 11 : i64} {
  func.func @_seq2seq_kernel(%arg0: memref<96x8xbf16, #tpu.memory_space<vmem>>, %arg1: memref<40x128xbf16, #tpu.memory_space<vmem>>, %arg2: memref<32x16xbf16, #tpu.memory_space<vmem>>, %arg3: memref<48x128xbf16, #tpu.memory_space<vmem>>, %arg4: memref<2x128xf32, #tpu.memory_space<vmem>>, %arg5: memref<1x16xf32, #tpu.memory_space<vmem>>, %arg6: memref<1x32xf32, #tpu.memory_space<vmem>>, %arg7: memref<6x9xf32, #tpu.memory_space<vmem>>, %arg8: memref<6x12xf32, #tpu.memory_space<vmem>>, %arg9: memref<8x12xf32, #tpu.memory_space<vmem>>) attributes {dimension_semantics = [], scalar_prefetch = 0 : i64, scratch_operands = 1 : i64, tpu.core_type = #tpu.core_type<tc>} {
    %0 = tpu.iota {dimensions = array<i32: 1>} : vector<1x128xi32>
    %c64_i32 = arith.constant 64 : i32
    %1 = vector.broadcast %c64_i32 : i32 to vector<1x128xi32>
    %2 = arith.cmpi sge, %0, %1 : vector<1x128xi32>
    %c96_i32 = arith.constant 96 : i32
    %3 = vector.broadcast %c96_i32 : i32 to vector<1x128xi32>
    %4 = arith.cmpi slt, %0, %3 : vector<1x128xi32>
    %5 = arith.andi %2, %4 : vector<1x128xi1>
    %cst = arith.constant 1.000000e+00 : f32
    %cst_0 = arith.constant 5.000000e-01 : f32
    %6 = vector.broadcast %cst : f32 to vector<1x128xf32>
    %7 = vector.broadcast %cst_0 : f32 to vector<1x128xf32>
    %8 = arith.select %5, %6, %7 : vector<1x128xi1>, vector<1x128xf32>
    %cst_1 = arith.constant 0.000000e+00 : f32
    %cst_2 = arith.constant 5.000000e-01 : f32
    %9 = vector.broadcast %cst_1 : f32 to vector<1x128xf32>
    %10 = vector.broadcast %cst_2 : f32 to vector<1x128xf32>
    %11 = arith.select %5, %9, %10 : vector<1x128xi1>, vector<1x128xf32>
    %c0 = arith.constant 0 : index
    %c0_3 = arith.constant 0 : index
    %12 = vector.load %arg2[%c0, %c0_3] : memref<32x16xbf16, #tpu.memory_space<vmem>>, vector<32x16xbf16>
    %c0_4 = arith.constant 0 : index
    %c0_5 = arith.constant 0 : index
    %13 = vector.load %arg5[%c0_4, %c0_5] : memref<1x16xf32, #tpu.memory_space<vmem>>, vector<1x16xf32>
    %c0_6 = arith.constant 0 : index
    %c0_7 = arith.constant 0 : index
    %14 = vector.load %arg3[%c0_6, %c0_7] : memref<48x128xbf16, #tpu.memory_space<vmem>>, vector<16x128xbf16>
    %c1 = arith.constant 1 : index
    %c0_8 = arith.constant 0 : index
    %15 = vector.load %arg4[%c1, %c0_8] : memref<2x128xf32, #tpu.memory_space<vmem>>, vector<1x128xf32>
    %c0_9 = arith.constant 0 : index
    %c0_10 = arith.constant 0 : index
    %16 = vector.load %arg6[%c0_9, %c0_10] : memref<1x32xf32, #tpu.memory_space<vmem>>, vector<1x32xf32>
    %c8 = arith.constant 8 : index
    %c0_11 = arith.constant 0 : index
    %17 = vector.load %arg1[%c8, %c0_11] : memref<40x128xbf16, #tpu.memory_space<vmem>>, vector<32x128xbf16>
    %c0_12 = arith.constant 0 : index
    %c0_13 = arith.constant 0 : index
    %18 = vector.load %arg1[%c0_12, %c0_13] : memref<40x128xbf16, #tpu.memory_space<vmem>>, vector<8x128xbf16>
    %c0_14 = arith.constant 0 : index
    %c0_15 = arith.constant 0 : index
    %19 = vector.load %arg0[%c0_14, %c0_15] : memref<96x8xbf16, #tpu.memory_space<vmem>>, vector<96x8xbf16>
    %cst_16 = arith.constant dense<0.000000e+00> : vector<96x128xf32>
    %20 = tpu.matmul %19, %18, %cst_16 {dimension_numbers = #tpu.dot_dimension_numbers<[1], [0], [0], [1], [0, 0, 1, 1], [], []>} : vector<96x8xbf16>, vector<8x128xbf16>, vector<96x128xf32> -> vector<96x128xf32>
    %c0_17 = arith.constant 0 : index
    %c0_18 = arith.constant 0 : index
    %21 = vector.load %arg4[%c0_17, %c0_18] : memref<2x128xf32, #tpu.memory_space<vmem>>, vector<1x128xf32>
    %22 = vector.broadcast %21 : vector<1x128xf32> to vector<96x128xf32>
    %23 = arith.addf %20, %22 : vector<96x128xf32>
    %24 = vector.extract_strided_slice %23 {offsets = [0, 0], sizes = [8, 128], strides = [1, 1]} : vector<96x128xf32> to vector<8x128xf32>
    %25 = vector.extract_strided_slice %23 {offsets = [8, 0], sizes = [8, 128], strides = [1, 1]} : vector<96x128xf32> to vector<8x128xf32>
    %26 = vector.extract_strided_slice %23 {offsets = [16, 0], sizes = [8, 128], strides = [1, 1]} : vector<96x128xf32> to vector<8x128xf32>
    %27 = vector.extract_strided_slice %23 {offsets = [24, 0], sizes = [8, 128], strides = [1, 1]} : vector<96x128xf32> to vector<8x128xf32>
    %28 = vector.extract_strided_slice %23 {offsets = [32, 0], sizes = [8, 128], strides = [1, 1]} : vector<96x128xf32> to vector<8x128xf32>
    %29 = vector.extract_strided_slice %23 {offsets = [40, 0], sizes = [8, 128], strides = [1, 1]} : vector<96x128xf32> to vector<8x128xf32>
    %30 = vector.extract_strided_slice %23 {offsets = [48, 0], sizes = [8, 128], strides = [1, 1]} : vector<96x128xf32> to vector<8x128xf32>
    %31 = vector.extract_strided_slice %23 {offsets = [56, 0], sizes = [8, 128], strides = [1, 1]} : vector<96x128xf32> to vector<8x128xf32>
    %32 = vector.extract_strided_slice %23 {offsets = [64, 0], sizes = [8, 128], strides = [1, 1]} : vector<96x128xf32> to vector<8x128xf32>
    %33 = vector.extract_strided_slice %23 {offsets = [72, 0], sizes = [8, 128], strides = [1, 1]} : vector<96x128xf32> to vector<8x128xf32>
    %34 = vector.extract_strided_slice %23 {offsets = [80, 0], sizes = [8, 128], strides = [1, 1]} : vector<96x128xf32> to vector<8x128xf32>
    %35 = vector.extract_strided_slice %23 {offsets = [88, 0], sizes = [8, 128], strides = [1, 1]} : vector<96x128xf32> to vector<8x128xf32>
    %cst_19 = arith.constant 0.000000e+00 : f32
    %36 = vector.broadcast %cst_19 : f32 to vector<8x32xf32>
    %cst_20 = arith.constant 0.000000e+00 : f32
    %37 = vector.broadcast %cst_20 : f32 to vector<8x32xf32>
    %38 = arith.truncf %36 : vector<8x32xf32> to vector<8x32xbf16>
    %cst_21 = arith.constant dense<0.000000e+00> : vector<8x128xf32>
    %39 = tpu.matmul %38, %17, %cst_21 {dimension_numbers = #tpu.dot_dimension_numbers<[1], [0], [0], [1], [0, 0, 1, 1], [], []>} : vector<8x32xbf16>, vector<32x128xbf16>, vector<8x128xf32> -> vector<8x128xf32>
    %40 = arith.addf %24, %39 : vector<8x128xf32>
    %41 = vector.broadcast %8 : vector<1x128xf32> to vector<8x128xf32>
    %42 = arith.mulf %40, %41 : vector<8x128xf32>
    %43 = math.tanh %42 : vector<8x128xf32>
    %44 = vector.broadcast %8 : vector<1x128xf32> to vector<8x128xf32>
    %45 = arith.mulf %43, %44 : vector<8x128xf32>
    %46 = vector.broadcast %11 : vector<1x128xf32> to vector<8x128xf32>
    %47 = arith.addf %45, %46 : vector<8x128xf32>
    %48 = vector.extract_strided_slice %47 {offsets = [0, 0], sizes = [8, 32], strides = [1, 1]} : vector<8x128xf32> to vector<8x32xf32>
    %49 = vector.extract_strided_slice %47 {offsets = [0, 32], sizes = [8, 32], strides = [1, 1]} : vector<8x128xf32> to vector<8x32xf32>
    %50 = vector.extract_strided_slice %47 {offsets = [0, 64], sizes = [8, 32], strides = [1, 1]} : vector<8x128xf32> to vector<8x32xf32>
    %51 = vector.extract_strided_slice %47 {offsets = [0, 96], sizes = [8, 32], strides = [1, 1]} : vector<8x128xf32> to vector<8x32xf32>
    %52 = arith.mulf %49, %37 : vector<8x32xf32>
    %53 = arith.mulf %48, %50 : vector<8x32xf32>
    %54 = arith.addf %52, %53 : vector<8x32xf32>
    %55 = math.tanh %54 : vector<8x32xf32>
    %56 = arith.mulf %51, %55 : vector<8x32xf32>
    %57 = arith.truncf %56 : vector<8x32xf32> to vector<8x32xbf16>
    %cst_22 = arith.constant dense<0.000000e+00> : vector<8x16xf32>
    %58 = tpu.matmul %57, %12, %cst_22 {dimension_numbers = #tpu.dot_dimension_numbers<[1], [0], [0], [1], [0, 0, 1, 1], [], []>} : vector<8x32xbf16>, vector<32x16xbf16>, vector<8x16xf32> -> vector<8x16xf32>
    %59 = vector.broadcast %13 : vector<1x16xf32> to vector<8x16xf32>
    %60 = arith.addf %58, %59 : vector<8x16xf32>
    %cst_23 = arith.constant 0.000000e+00 : f32
    %61 = vector.broadcast %cst_23 : f32 to vector<8x16xf32>
    %62 = arith.minimumf %60, %61 : vector<8x16xf32>
    %63 = math.exp %62 : vector<8x16xf32>
    %cst_24 = arith.constant 1.000000e+00 : f32
    %64 = vector.broadcast %cst_24 : f32 to vector<8x16xf32>
    %65 = arith.subf %63, %64 : vector<8x16xf32>
    %cst_25 = arith.constant 1.67326319 : f32
    %66 = vector.broadcast %cst_25 : f32 to vector<8x16xf32>
    %67 = arith.mulf %66, %65 : vector<8x16xf32>
    %cst_26 = arith.constant 0.000000e+00 : f32
    %68 = vector.broadcast %cst_26 : f32 to vector<8x16xf32>
    %69 = arith.cmpf ogt, %60, %68 : vector<8x16xf32>
    %70 = arith.select %69, %60, %67 : vector<8x16xi1>, vector<8x16xf32>
    %cst_27 = arith.constant 1.05070102 : f32
    %71 = vector.broadcast %cst_27 : f32 to vector<8x16xf32>
    %72 = arith.mulf %71, %70 : vector<8x16xf32>
    %73 = arith.truncf %72 : vector<8x16xf32> to vector<8x16xbf16>
    %cst_28 = arith.constant dense<0.000000e+00> : vector<8x128xf32>
    %74 = tpu.matmul %73, %14, %cst_28 {dimension_numbers = #tpu.dot_dimension_numbers<[1], [0], [0], [1], [0, 0, 1, 1], [], []>} : vector<8x16xbf16>, vector<16x128xbf16>, vector<8x128xf32> -> vector<8x128xf32>
    %75 = vector.broadcast %15 : vector<1x128xf32> to vector<8x128xf32>
    %76 = arith.addf %74, %75 : vector<8x128xf32>
    %77 = arith.truncf %56 : vector<8x32xf32> to vector<8x32xbf16>
    %cst_29 = arith.constant dense<0.000000e+00> : vector<8x128xf32>
    %78 = tpu.matmul %77, %17, %cst_29 {dimension_numbers = #tpu.dot_dimension_numbers<[1], [0], [0], [1], [0, 0, 1, 1], [], []>} : vector<8x32xbf16>, vector<32x128xbf16>, vector<8x128xf32> -> vector<8x128xf32>
    %79 = arith.addf %25, %78 : vector<8x128xf32>
    %80 = vector.broadcast %8 : vector<1x128xf32> to vector<8x128xf32>
    %81 = arith.mulf %79, %80 : vector<8x128xf32>
    %82 = math.tanh %81 : vector<8x128xf32>
    %83 = vector.broadcast %8 : vector<1x128xf32> to vector<8x128xf32>
    %84 = arith.mulf %82, %83 : vector<8x128xf32>
    %85 = vector.broadcast %11 : vector<1x128xf32> to vector<8x128xf32>
    %86 = arith.addf %84, %85 : vector<8x128xf32>
    %87 = vector.extract_strided_slice %86 {offsets = [0, 0], sizes = [8, 32], strides = [1, 1]} : vector<8x128xf32> to vector<8x32xf32>
    %88 = vector.extract_strided_slice %86 {offsets = [0, 32], sizes = [8, 32], strides = [1, 1]} : vector<8x128xf32> to vector<8x32xf32>
    %89 = vector.extract_strided_slice %86 {offsets = [0, 64], sizes = [8, 32], strides = [1, 1]} : vector<8x128xf32> to vector<8x32xf32>
    %90 = vector.extract_strided_slice %86 {offsets = [0, 96], sizes = [8, 32], strides = [1, 1]} : vector<8x128xf32> to vector<8x32xf32>
    %91 = arith.mulf %88, %54 : vector<8x32xf32>
    %92 = arith.mulf %87, %89 : vector<8x32xf32>
    %93 = arith.addf %91, %92 : vector<8x32xf32>
    %94 = math.tanh %93 : vector<8x32xf32>
    %95 = arith.mulf %90, %94 : vector<8x32xf32>
    %96 = arith.truncf %95 : vector<8x32xf32> to vector<8x32xbf16>
    %cst_30 = arith.constant dense<0.000000e+00> : vector<8x16xf32>
    %97 = tpu.matmul %96, %12, %cst_30 {dimension_numbers = #tpu.dot_dimension_numbers<[1], [0], [0], [1], [0, 0, 1, 1], [], []>} : vector<8x32xbf16>, vector<32x16xbf16>, vector<8x16xf32> -> vector<8x16xf32>
    %98 = vector.broadcast %13 : vector<1x16xf32> to vector<8x16xf32>
    %99 = arith.addf %97, %98 : vector<8x16xf32>
    %cst_31 = arith.constant 0.000000e+00 : f32
    %100 = vector.broadcast %cst_31 : f32 to vector<8x16xf32>
    %101 = arith.minimumf %99, %100 : vector<8x16xf32>
    %102 = math.exp %101 : vector<8x16xf32>
    %cst_32 = arith.constant 1.000000e+00 : f32
    %103 = vector.broadcast %cst_32 : f32 to vector<8x16xf32>
    %104 = arith.subf %102, %103 : vector<8x16xf32>
    %cst_33 = arith.constant 1.67326319 : f32
    %105 = vector.broadcast %cst_33 : f32 to vector<8x16xf32>
    %106 = arith.mulf %105, %104 : vector<8x16xf32>
    %cst_34 = arith.constant 0.000000e+00 : f32
    %107 = vector.broadcast %cst_34 : f32 to vector<8x16xf32>
    %108 = arith.cmpf ogt, %99, %107 : vector<8x16xf32>
    %109 = arith.select %108, %99, %106 : vector<8x16xi1>, vector<8x16xf32>
    %cst_35 = arith.constant 1.05070102 : f32
    %110 = vector.broadcast %cst_35 : f32 to vector<8x16xf32>
    %111 = arith.mulf %110, %109 : vector<8x16xf32>
    %112 = arith.truncf %111 : vector<8x16xf32> to vector<8x16xbf16>
    %cst_36 = arith.constant dense<0.000000e+00> : vector<8x128xf32>
    %113 = tpu.matmul %112, %14, %cst_36 {dimension_numbers = #tpu.dot_dimension_numbers<[1], [0], [0], [1], [0, 0, 1, 1], [], []>} : vector<8x16xbf16>, vector<16x128xbf16>, vector<8x128xf32> -> vector<8x128xf32>
    %114 = vector.broadcast %15 : vector<1x128xf32> to vector<8x128xf32>
    %115 = arith.addf %113, %114 : vector<8x128xf32>
    %116 = arith.truncf %95 : vector<8x32xf32> to vector<8x32xbf16>
    %cst_37 = arith.constant dense<0.000000e+00> : vector<8x128xf32>
    %117 = tpu.matmul %116, %17, %cst_37 {dimension_numbers = #tpu.dot_dimension_numbers<[1], [0], [0], [1], [0, 0, 1, 1], [], []>} : vector<8x32xbf16>, vector<32x128xbf16>, vector<8x128xf32> -> vector<8x128xf32>
    %118 = arith.addf %26, %117 : vector<8x128xf32>
    %119 = vector.broadcast %8 : vector<1x128xf32> to vector<8x128xf32>
    %120 = arith.mulf %118, %119 : vector<8x128xf32>
    %121 = math.tanh %120 : vector<8x128xf32>
    %122 = vector.broadcast %8 : vector<1x128xf32> to vector<8x128xf32>
    %123 = arith.mulf %121, %122 : vector<8x128xf32>
    %124 = vector.broadcast %11 : vector<1x128xf32> to vector<8x128xf32>
    %125 = arith.addf %123, %124 : vector<8x128xf32>
    %126 = vector.extract_strided_slice %125 {offsets = [0, 0], sizes = [8, 32], strides = [1, 1]} : vector<8x128xf32> to vector<8x32xf32>
    %127 = vector.extract_strided_slice %125 {offsets = [0, 32], sizes = [8, 32], strides = [1, 1]} : vector<8x128xf32> to vector<8x32xf32>
    %128 = vector.extract_strided_slice %125 {offsets = [0, 64], sizes = [8, 32], strides = [1, 1]} : vector<8x128xf32> to vector<8x32xf32>
    %129 = vector.extract_strided_slice %125 {offsets = [0, 96], sizes = [8, 32], strides = [1, 1]} : vector<8x128xf32> to vector<8x32xf32>
    %130 = arith.mulf %127, %93 : vector<8x32xf32>
    %131 = arith.mulf %126, %128 : vector<8x32xf32>
    %132 = arith.addf %130, %131 : vector<8x32xf32>
    %133 = math.tanh %132 : vector<8x32xf32>
    %134 = arith.mulf %129, %133 : vector<8x32xf32>
    %135 = arith.truncf %134 : vector<8x32xf32> to vector<8x32xbf16>
    %cst_38 = arith.constant dense<0.000000e+00> : vector<8x16xf32>
    %136 = tpu.matmul %135, %12, %cst_38 {dimension_numbers = #tpu.dot_dimension_numbers<[1], [0], [0], [1], [0, 0, 1, 1], [], []>} : vector<8x32xbf16>, vector<32x16xbf16>, vector<8x16xf32> -> vector<8x16xf32>
    %137 = vector.broadcast %13 : vector<1x16xf32> to vector<8x16xf32>
    %138 = arith.addf %136, %137 : vector<8x16xf32>
    %cst_39 = arith.constant 0.000000e+00 : f32
    %139 = vector.broadcast %cst_39 : f32 to vector<8x16xf32>
    %140 = arith.minimumf %138, %139 : vector<8x16xf32>
    %141 = math.exp %140 : vector<8x16xf32>
    %cst_40 = arith.constant 1.000000e+00 : f32
    %142 = vector.broadcast %cst_40 : f32 to vector<8x16xf32>
    %143 = arith.subf %141, %142 : vector<8x16xf32>
    %cst_41 = arith.constant 1.67326319 : f32
    %144 = vector.broadcast %cst_41 : f32 to vector<8x16xf32>
    %145 = arith.mulf %144, %143 : vector<8x16xf32>
    %cst_42 = arith.constant 0.000000e+00 : f32
    %146 = vector.broadcast %cst_42 : f32 to vector<8x16xf32>
    %147 = arith.cmpf ogt, %138, %146 : vector<8x16xf32>
    %148 = arith.select %147, %138, %145 : vector<8x16xi1>, vector<8x16xf32>
    %cst_43 = arith.constant 1.05070102 : f32
    %149 = vector.broadcast %cst_43 : f32 to vector<8x16xf32>
    %150 = arith.mulf %149, %148 : vector<8x16xf32>
    %151 = arith.truncf %150 : vector<8x16xf32> to vector<8x16xbf16>
    %cst_44 = arith.constant dense<0.000000e+00> : vector<8x128xf32>
    %152 = tpu.matmul %151, %14, %cst_44 {dimension_numbers = #tpu.dot_dimension_numbers<[1], [0], [0], [1], [0, 0, 1, 1], [], []>} : vector<8x16xbf16>, vector<16x128xbf16>, vector<8x128xf32> -> vector<8x128xf32>
    %153 = vector.broadcast %15 : vector<1x128xf32> to vector<8x128xf32>
    %154 = arith.addf %152, %153 : vector<8x128xf32>
    %155 = arith.truncf %134 : vector<8x32xf32> to vector<8x32xbf16>
    %cst_45 = arith.constant dense<0.000000e+00> : vector<8x128xf32>
    %156 = tpu.matmul %155, %17, %cst_45 {dimension_numbers = #tpu.dot_dimension_numbers<[1], [0], [0], [1], [0, 0, 1, 1], [], []>} : vector<8x32xbf16>, vector<32x128xbf16>, vector<8x128xf32> -> vector<8x128xf32>
    %157 = arith.addf %27, %156 : vector<8x128xf32>
    %158 = vector.broadcast %8 : vector<1x128xf32> to vector<8x128xf32>
    %159 = arith.mulf %157, %158 : vector<8x128xf32>
    %160 = math.tanh %159 : vector<8x128xf32>
    %161 = vector.broadcast %8 : vector<1x128xf32> to vector<8x128xf32>
    %162 = arith.mulf %160, %161 : vector<8x128xf32>
    %163 = vector.broadcast %11 : vector<1x128xf32> to vector<8x128xf32>
    %164 = arith.addf %162, %163 : vector<8x128xf32>
    %165 = vector.extract_strided_slice %164 {offsets = [0, 0], sizes = [8, 32], strides = [1, 1]} : vector<8x128xf32> to vector<8x32xf32>
    %166 = vector.extract_strided_slice %164 {offsets = [0, 32], sizes = [8, 32], strides = [1, 1]} : vector<8x128xf32> to vector<8x32xf32>
    %167 = vector.extract_strided_slice %164 {offsets = [0, 64], sizes = [8, 32], strides = [1, 1]} : vector<8x128xf32> to vector<8x32xf32>
    %168 = vector.extract_strided_slice %164 {offsets = [0, 96], sizes = [8, 32], strides = [1, 1]} : vector<8x128xf32> to vector<8x32xf32>
    %169 = arith.mulf %166, %132 : vector<8x32xf32>
    %170 = arith.mulf %165, %167 : vector<8x32xf32>
    %171 = arith.addf %169, %170 : vector<8x32xf32>
    %172 = math.tanh %171 : vector<8x32xf32>
    %173 = arith.mulf %168, %172 : vector<8x32xf32>
    %174 = arith.truncf %173 : vector<8x32xf32> to vector<8x32xbf16>
    %cst_46 = arith.constant dense<0.000000e+00> : vector<8x16xf32>
    %175 = tpu.matmul %174, %12, %cst_46 {dimension_numbers = #tpu.dot_dimension_numbers<[1], [0], [0], [1], [0, 0, 1, 1], [], []>} : vector<8x32xbf16>, vector<32x16xbf16>, vector<8x16xf32> -> vector<8x16xf32>
    %176 = vector.broadcast %13 : vector<1x16xf32> to vector<8x16xf32>
    %177 = arith.addf %175, %176 : vector<8x16xf32>
    %cst_47 = arith.constant 0.000000e+00 : f32
    %178 = vector.broadcast %cst_47 : f32 to vector<8x16xf32>
    %179 = arith.minimumf %177, %178 : vector<8x16xf32>
    %180 = math.exp %179 : vector<8x16xf32>
    %cst_48 = arith.constant 1.000000e+00 : f32
    %181 = vector.broadcast %cst_48 : f32 to vector<8x16xf32>
    %182 = arith.subf %180, %181 : vector<8x16xf32>
    %cst_49 = arith.constant 1.67326319 : f32
    %183 = vector.broadcast %cst_49 : f32 to vector<8x16xf32>
    %184 = arith.mulf %183, %182 : vector<8x16xf32>
    %cst_50 = arith.constant 0.000000e+00 : f32
    %185 = vector.broadcast %cst_50 : f32 to vector<8x16xf32>
    %186 = arith.cmpf ogt, %177, %185 : vector<8x16xf32>
    %187 = arith.select %186, %177, %184 : vector<8x16xi1>, vector<8x16xf32>
    %cst_51 = arith.constant 1.05070102 : f32
    %188 = vector.broadcast %cst_51 : f32 to vector<8x16xf32>
    %189 = arith.mulf %188, %187 : vector<8x16xf32>
    %190 = arith.truncf %189 : vector<8x16xf32> to vector<8x16xbf16>
    %cst_52 = arith.constant dense<0.000000e+00> : vector<8x128xf32>
    %191 = tpu.matmul %190, %14, %cst_52 {dimension_numbers = #tpu.dot_dimension_numbers<[1], [0], [0], [1], [0, 0, 1, 1], [], []>} : vector<8x16xbf16>, vector<16x128xbf16>, vector<8x128xf32> -> vector<8x128xf32>
    %192 = vector.broadcast %15 : vector<1x128xf32> to vector<8x128xf32>
    %193 = arith.addf %191, %192 : vector<8x128xf32>
    %194 = arith.truncf %173 : vector<8x32xf32> to vector<8x32xbf16>
    %cst_53 = arith.constant dense<0.000000e+00> : vector<8x128xf32>
    %195 = tpu.matmul %194, %17, %cst_53 {dimension_numbers = #tpu.dot_dimension_numbers<[1], [0], [0], [1], [0, 0, 1, 1], [], []>} : vector<8x32xbf16>, vector<32x128xbf16>, vector<8x128xf32> -> vector<8x128xf32>
    %196 = arith.addf %28, %195 : vector<8x128xf32>
    %197 = vector.broadcast %8 : vector<1x128xf32> to vector<8x128xf32>
    %198 = arith.mulf %196, %197 : vector<8x128xf32>
    %199 = math.tanh %198 : vector<8x128xf32>
    %200 = vector.broadcast %8 : vector<1x128xf32> to vector<8x128xf32>
    %201 = arith.mulf %199, %200 : vector<8x128xf32>
    %202 = vector.broadcast %11 : vector<1x128xf32> to vector<8x128xf32>
    %203 = arith.addf %201, %202 : vector<8x128xf32>
    %204 = vector.extract_strided_slice %203 {offsets = [0, 0], sizes = [8, 32], strides = [1, 1]} : vector<8x128xf32> to vector<8x32xf32>
    %205 = vector.extract_strided_slice %203 {offsets = [0, 32], sizes = [8, 32], strides = [1, 1]} : vector<8x128xf32> to vector<8x32xf32>
    %206 = vector.extract_strided_slice %203 {offsets = [0, 64], sizes = [8, 32], strides = [1, 1]} : vector<8x128xf32> to vector<8x32xf32>
    %207 = vector.extract_strided_slice %203 {offsets = [0, 96], sizes = [8, 32], strides = [1, 1]} : vector<8x128xf32> to vector<8x32xf32>
    %208 = arith.mulf %205, %171 : vector<8x32xf32>
    %209 = arith.mulf %204, %206 : vector<8x32xf32>
    %210 = arith.addf %208, %209 : vector<8x32xf32>
    %211 = math.tanh %210 : vector<8x32xf32>
    %212 = arith.mulf %207, %211 : vector<8x32xf32>
    %213 = arith.truncf %212 : vector<8x32xf32> to vector<8x32xbf16>
    %cst_54 = arith.constant dense<0.000000e+00> : vector<8x16xf32>
    %214 = tpu.matmul %213, %12, %cst_54 {dimension_numbers = #tpu.dot_dimension_numbers<[1], [0], [0], [1], [0, 0, 1, 1], [], []>} : vector<8x32xbf16>, vector<32x16xbf16>, vector<8x16xf32> -> vector<8x16xf32>
    %215 = vector.broadcast %13 : vector<1x16xf32> to vector<8x16xf32>
    %216 = arith.addf %214, %215 : vector<8x16xf32>
    %cst_55 = arith.constant 0.000000e+00 : f32
    %217 = vector.broadcast %cst_55 : f32 to vector<8x16xf32>
    %218 = arith.minimumf %216, %217 : vector<8x16xf32>
    %219 = math.exp %218 : vector<8x16xf32>
    %cst_56 = arith.constant 1.000000e+00 : f32
    %220 = vector.broadcast %cst_56 : f32 to vector<8x16xf32>
    %221 = arith.subf %219, %220 : vector<8x16xf32>
    %cst_57 = arith.constant 1.67326319 : f32
    %222 = vector.broadcast %cst_57 : f32 to vector<8x16xf32>
    %223 = arith.mulf %222, %221 : vector<8x16xf32>
    %cst_58 = arith.constant 0.000000e+00 : f32
    %224 = vector.broadcast %cst_58 : f32 to vector<8x16xf32>
    %225 = arith.cmpf ogt, %216, %224 : vector<8x16xf32>
    %226 = arith.select %225, %216, %223 : vector<8x16xi1>, vector<8x16xf32>
    %cst_59 = arith.constant 1.05070102 : f32
    %227 = vector.broadcast %cst_59 : f32 to vector<8x16xf32>
    %228 = arith.mulf %227, %226 : vector<8x16xf32>
    %229 = arith.truncf %228 : vector<8x16xf32> to vector<8x16xbf16>
    %cst_60 = arith.constant dense<0.000000e+00> : vector<8x128xf32>
    %230 = tpu.matmul %229, %14, %cst_60 {dimension_numbers = #tpu.dot_dimension_numbers<[1], [0], [0], [1], [0, 0, 1, 1], [], []>} : vector<8x16xbf16>, vector<16x128xbf16>, vector<8x128xf32> -> vector<8x128xf32>
    %231 = vector.broadcast %15 : vector<1x128xf32> to vector<8x128xf32>
    %232 = arith.addf %230, %231 : vector<8x128xf32>
    %233 = arith.truncf %212 : vector<8x32xf32> to vector<8x32xbf16>
    %cst_61 = arith.constant dense<0.000000e+00> : vector<8x128xf32>
    %234 = tpu.matmul %233, %17, %cst_61 {dimension_numbers = #tpu.dot_dimension_numbers<[1], [0], [0], [1], [0, 0, 1, 1], [], []>} : vector<8x32xbf16>, vector<32x128xbf16>, vector<8x128xf32> -> vector<8x128xf32>
    %235 = arith.addf %29, %234 : vector<8x128xf32>
    %236 = vector.broadcast %8 : vector<1x128xf32> to vector<8x128xf32>
    %237 = arith.mulf %235, %236 : vector<8x128xf32>
    %238 = math.tanh %237 : vector<8x128xf32>
    %239 = vector.broadcast %8 : vector<1x128xf32> to vector<8x128xf32>
    %240 = arith.mulf %238, %239 : vector<8x128xf32>
    %241 = vector.broadcast %11 : vector<1x128xf32> to vector<8x128xf32>
    %242 = arith.addf %240, %241 : vector<8x128xf32>
    %243 = vector.extract_strided_slice %242 {offsets = [0, 0], sizes = [8, 32], strides = [1, 1]} : vector<8x128xf32> to vector<8x32xf32>
    %244 = vector.extract_strided_slice %242 {offsets = [0, 32], sizes = [8, 32], strides = [1, 1]} : vector<8x128xf32> to vector<8x32xf32>
    %245 = vector.extract_strided_slice %242 {offsets = [0, 64], sizes = [8, 32], strides = [1, 1]} : vector<8x128xf32> to vector<8x32xf32>
    %246 = vector.extract_strided_slice %242 {offsets = [0, 96], sizes = [8, 32], strides = [1, 1]} : vector<8x128xf32> to vector<8x32xf32>
    %247 = arith.mulf %244, %210 : vector<8x32xf32>
    %248 = arith.mulf %243, %245 : vector<8x32xf32>
    %249 = arith.addf %247, %248 : vector<8x32xf32>
    %250 = math.tanh %249 : vector<8x32xf32>
    %251 = arith.mulf %246, %250 : vector<8x32xf32>
    %252 = arith.truncf %251 : vector<8x32xf32> to vector<8x32xbf16>
    %cst_62 = arith.constant dense<0.000000e+00> : vector<8x16xf32>
    %253 = tpu.matmul %252, %12, %cst_62 {dimension_numbers = #tpu.dot_dimension_numbers<[1], [0], [0], [1], [0, 0, 1, 1], [], []>} : vector<8x32xbf16>, vector<32x16xbf16>, vector<8x16xf32> -> vector<8x16xf32>
    %254 = vector.broadcast %13 : vector<1x16xf32> to vector<8x16xf32>
    %255 = arith.addf %253, %254 : vector<8x16xf32>
    %cst_63 = arith.constant 0.000000e+00 : f32
    %256 = vector.broadcast %cst_63 : f32 to vector<8x16xf32>
    %257 = arith.minimumf %255, %256 : vector<8x16xf32>
    %258 = math.exp %257 : vector<8x16xf32>
    %cst_64 = arith.constant 1.000000e+00 : f32
    %259 = vector.broadcast %cst_64 : f32 to vector<8x16xf32>
    %260 = arith.subf %258, %259 : vector<8x16xf32>
    %cst_65 = arith.constant 1.67326319 : f32
    %261 = vector.broadcast %cst_65 : f32 to vector<8x16xf32>
    %262 = arith.mulf %261, %260 : vector<8x16xf32>
    %cst_66 = arith.constant 0.000000e+00 : f32
    %263 = vector.broadcast %cst_66 : f32 to vector<8x16xf32>
    %264 = arith.cmpf ogt, %255, %263 : vector<8x16xf32>
    %265 = arith.select %264, %255, %262 : vector<8x16xi1>, vector<8x16xf32>
    %cst_67 = arith.constant 1.05070102 : f32
    %266 = vector.broadcast %cst_67 : f32 to vector<8x16xf32>
    %267 = arith.mulf %266, %265 : vector<8x16xf32>
    %268 = arith.truncf %267 : vector<8x16xf32> to vector<8x16xbf16>
    %cst_68 = arith.constant dense<0.000000e+00> : vector<8x128xf32>
    %269 = tpu.matmul %268, %14, %cst_68 {dimension_numbers = #tpu.dot_dimension_numbers<[1], [0], [0], [1], [0, 0, 1, 1], [], []>} : vector<8x16xbf16>, vector<16x128xbf16>, vector<8x128xf32> -> vector<8x128xf32>
    %270 = vector.broadcast %15 : vector<1x128xf32> to vector<8x128xf32>
    %271 = arith.addf %269, %270 : vector<8x128xf32>
    %272 = arith.truncf %251 : vector<8x32xf32> to vector<8x32xbf16>
    %cst_69 = arith.constant dense<0.000000e+00> : vector<8x128xf32>
    %273 = tpu.matmul %272, %17, %cst_69 {dimension_numbers = #tpu.dot_dimension_numbers<[1], [0], [0], [1], [0, 0, 1, 1], [], []>} : vector<8x32xbf16>, vector<32x128xbf16>, vector<8x128xf32> -> vector<8x128xf32>
    %274 = arith.addf %30, %273 : vector<8x128xf32>
    %275 = vector.broadcast %8 : vector<1x128xf32> to vector<8x128xf32>
    %276 = arith.mulf %274, %275 : vector<8x128xf32>
    %277 = math.tanh %276 : vector<8x128xf32>
    %278 = vector.broadcast %8 : vector<1x128xf32> to vector<8x128xf32>
    %279 = arith.mulf %277, %278 : vector<8x128xf32>
    %280 = vector.broadcast %11 : vector<1x128xf32> to vector<8x128xf32>
    %281 = arith.addf %279, %280 : vector<8x128xf32>
    %282 = vector.extract_strided_slice %281 {offsets = [0, 0], sizes = [8, 32], strides = [1, 1]} : vector<8x128xf32> to vector<8x32xf32>
    %283 = vector.extract_strided_slice %281 {offsets = [0, 32], sizes = [8, 32], strides = [1, 1]} : vector<8x128xf32> to vector<8x32xf32>
    %284 = vector.extract_strided_slice %281 {offsets = [0, 64], sizes = [8, 32], strides = [1, 1]} : vector<8x128xf32> to vector<8x32xf32>
    %285 = vector.extract_strided_slice %281 {offsets = [0, 96], sizes = [8, 32], strides = [1, 1]} : vector<8x128xf32> to vector<8x32xf32>
    %286 = arith.mulf %283, %249 : vector<8x32xf32>
    %287 = arith.mulf %282, %284 : vector<8x32xf32>
    %288 = arith.addf %286, %287 : vector<8x32xf32>
    %289 = math.tanh %288 : vector<8x32xf32>
    %290 = arith.mulf %285, %289 : vector<8x32xf32>
    %291 = arith.truncf %290 : vector<8x32xf32> to vector<8x32xbf16>
    %cst_70 = arith.constant dense<0.000000e+00> : vector<8x16xf32>
    %292 = tpu.matmul %291, %12, %cst_70 {dimension_numbers = #tpu.dot_dimension_numbers<[1], [0], [0], [1], [0, 0, 1, 1], [], []>} : vector<8x32xbf16>, vector<32x16xbf16>, vector<8x16xf32> -> vector<8x16xf32>
    %293 = vector.broadcast %13 : vector<1x16xf32> to vector<8x16xf32>
    %294 = arith.addf %292, %293 : vector<8x16xf32>
    %cst_71 = arith.constant 0.000000e+00 : f32
    %295 = vector.broadcast %cst_71 : f32 to vector<8x16xf32>
    %296 = arith.minimumf %294, %295 : vector<8x16xf32>
    %297 = math.exp %296 : vector<8x16xf32>
    %cst_72 = arith.constant 1.000000e+00 : f32
    %298 = vector.broadcast %cst_72 : f32 to vector<8x16xf32>
    %299 = arith.subf %297, %298 : vector<8x16xf32>
    %cst_73 = arith.constant 1.67326319 : f32
    %300 = vector.broadcast %cst_73 : f32 to vector<8x16xf32>
    %301 = arith.mulf %300, %299 : vector<8x16xf32>
    %cst_74 = arith.constant 0.000000e+00 : f32
    %302 = vector.broadcast %cst_74 : f32 to vector<8x16xf32>
    %303 = arith.cmpf ogt, %294, %302 : vector<8x16xf32>
    %304 = arith.select %303, %294, %301 : vector<8x16xi1>, vector<8x16xf32>
    %cst_75 = arith.constant 1.05070102 : f32
    %305 = vector.broadcast %cst_75 : f32 to vector<8x16xf32>
    %306 = arith.mulf %305, %304 : vector<8x16xf32>
    %307 = arith.truncf %306 : vector<8x16xf32> to vector<8x16xbf16>
    %cst_76 = arith.constant dense<0.000000e+00> : vector<8x128xf32>
    %308 = tpu.matmul %307, %14, %cst_76 {dimension_numbers = #tpu.dot_dimension_numbers<[1], [0], [0], [1], [0, 0, 1, 1], [], []>} : vector<8x16xbf16>, vector<16x128xbf16>, vector<8x128xf32> -> vector<8x128xf32>
    %309 = vector.broadcast %15 : vector<1x128xf32> to vector<8x128xf32>
    %310 = arith.addf %308, %309 : vector<8x128xf32>
    %311 = arith.truncf %290 : vector<8x32xf32> to vector<8x32xbf16>
    %cst_77 = arith.constant dense<0.000000e+00> : vector<8x128xf32>
    %312 = tpu.matmul %311, %17, %cst_77 {dimension_numbers = #tpu.dot_dimension_numbers<[1], [0], [0], [1], [0, 0, 1, 1], [], []>} : vector<8x32xbf16>, vector<32x128xbf16>, vector<8x128xf32> -> vector<8x128xf32>
    %313 = arith.addf %31, %312 : vector<8x128xf32>
    %314 = vector.broadcast %8 : vector<1x128xf32> to vector<8x128xf32>
    %315 = arith.mulf %313, %314 : vector<8x128xf32>
    %316 = math.tanh %315 : vector<8x128xf32>
    %317 = vector.broadcast %8 : vector<1x128xf32> to vector<8x128xf32>
    %318 = arith.mulf %316, %317 : vector<8x128xf32>
    %319 = vector.broadcast %11 : vector<1x128xf32> to vector<8x128xf32>
    %320 = arith.addf %318, %319 : vector<8x128xf32>
    %321 = vector.extract_strided_slice %320 {offsets = [0, 0], sizes = [8, 32], strides = [1, 1]} : vector<8x128xf32> to vector<8x32xf32>
    %322 = vector.extract_strided_slice %320 {offsets = [0, 32], sizes = [8, 32], strides = [1, 1]} : vector<8x128xf32> to vector<8x32xf32>
    %323 = vector.extract_strided_slice %320 {offsets = [0, 64], sizes = [8, 32], strides = [1, 1]} : vector<8x128xf32> to vector<8x32xf32>
    %324 = vector.extract_strided_slice %320 {offsets = [0, 96], sizes = [8, 32], strides = [1, 1]} : vector<8x128xf32> to vector<8x32xf32>
    %325 = arith.mulf %322, %288 : vector<8x32xf32>
    %326 = arith.mulf %321, %323 : vector<8x32xf32>
    %327 = arith.addf %325, %326 : vector<8x32xf32>
    %328 = math.tanh %327 : vector<8x32xf32>
    %329 = arith.mulf %324, %328 : vector<8x32xf32>
    %330 = arith.truncf %329 : vector<8x32xf32> to vector<8x32xbf16>
    %cst_78 = arith.constant dense<0.000000e+00> : vector<8x16xf32>
    %331 = tpu.matmul %330, %12, %cst_78 {dimension_numbers = #tpu.dot_dimension_numbers<[1], [0], [0], [1], [0, 0, 1, 1], [], []>} : vector<8x32xbf16>, vector<32x16xbf16>, vector<8x16xf32> -> vector<8x16xf32>
    %332 = vector.broadcast %13 : vector<1x16xf32> to vector<8x16xf32>
    %333 = arith.addf %331, %332 : vector<8x16xf32>
    %cst_79 = arith.constant 0.000000e+00 : f32
    %334 = vector.broadcast %cst_79 : f32 to vector<8x16xf32>
    %335 = arith.minimumf %333, %334 : vector<8x16xf32>
    %336 = math.exp %335 : vector<8x16xf32>
    %cst_80 = arith.constant 1.000000e+00 : f32
    %337 = vector.broadcast %cst_80 : f32 to vector<8x16xf32>
    %338 = arith.subf %336, %337 : vector<8x16xf32>
    %cst_81 = arith.constant 1.67326319 : f32
    %339 = vector.broadcast %cst_81 : f32 to vector<8x16xf32>
    %340 = arith.mulf %339, %338 : vector<8x16xf32>
    %cst_82 = arith.constant 0.000000e+00 : f32
    %341 = vector.broadcast %cst_82 : f32 to vector<8x16xf32>
    %342 = arith.cmpf ogt, %333, %341 : vector<8x16xf32>
    %343 = arith.select %342, %333, %340 : vector<8x16xi1>, vector<8x16xf32>
    %cst_83 = arith.constant 1.05070102 : f32
    %344 = vector.broadcast %cst_83 : f32 to vector<8x16xf32>
    %345 = arith.mulf %344, %343 : vector<8x16xf32>
    %346 = arith.truncf %345 : vector<8x16xf32> to vector<8x16xbf16>
    %cst_84 = arith.constant dense<0.000000e+00> : vector<8x128xf32>
    %347 = tpu.matmul %346, %14, %cst_84 {dimension_numbers = #tpu.dot_dimension_numbers<[1], [0], [0], [1], [0, 0, 1, 1], [], []>} : vector<8x16xbf16>, vector<16x128xbf16>, vector<8x128xf32> -> vector<8x128xf32>
    %348 = vector.broadcast %15 : vector<1x128xf32> to vector<8x128xf32>
    %349 = arith.addf %347, %348 : vector<8x128xf32>
    %350 = arith.truncf %329 : vector<8x32xf32> to vector<8x32xbf16>
    %cst_85 = arith.constant dense<0.000000e+00> : vector<8x128xf32>
    %351 = tpu.matmul %350, %17, %cst_85 {dimension_numbers = #tpu.dot_dimension_numbers<[1], [0], [0], [1], [0, 0, 1, 1], [], []>} : vector<8x32xbf16>, vector<32x128xbf16>, vector<8x128xf32> -> vector<8x128xf32>
    %352 = arith.addf %32, %351 : vector<8x128xf32>
    %353 = vector.broadcast %8 : vector<1x128xf32> to vector<8x128xf32>
    %354 = arith.mulf %352, %353 : vector<8x128xf32>
    %355 = math.tanh %354 : vector<8x128xf32>
    %356 = vector.broadcast %8 : vector<1x128xf32> to vector<8x128xf32>
    %357 = arith.mulf %355, %356 : vector<8x128xf32>
    %358 = vector.broadcast %11 : vector<1x128xf32> to vector<8x128xf32>
    %359 = arith.addf %357, %358 : vector<8x128xf32>
    %360 = vector.extract_strided_slice %359 {offsets = [0, 0], sizes = [8, 32], strides = [1, 1]} : vector<8x128xf32> to vector<8x32xf32>
    %361 = vector.extract_strided_slice %359 {offsets = [0, 32], sizes = [8, 32], strides = [1, 1]} : vector<8x128xf32> to vector<8x32xf32>
    %362 = vector.extract_strided_slice %359 {offsets = [0, 64], sizes = [8, 32], strides = [1, 1]} : vector<8x128xf32> to vector<8x32xf32>
    %363 = vector.extract_strided_slice %359 {offsets = [0, 96], sizes = [8, 32], strides = [1, 1]} : vector<8x128xf32> to vector<8x32xf32>
    %364 = arith.mulf %361, %327 : vector<8x32xf32>
    %365 = arith.mulf %360, %362 : vector<8x32xf32>
    %366 = arith.addf %364, %365 : vector<8x32xf32>
    %367 = math.tanh %366 : vector<8x32xf32>
    %368 = arith.mulf %363, %367 : vector<8x32xf32>
    %369 = arith.truncf %368 : vector<8x32xf32> to vector<8x32xbf16>
    %cst_86 = arith.constant dense<0.000000e+00> : vector<8x16xf32>
    %370 = tpu.matmul %369, %12, %cst_86 {dimension_numbers = #tpu.dot_dimension_numbers<[1], [0], [0], [1], [0, 0, 1, 1], [], []>} : vector<8x32xbf16>, vector<32x16xbf16>, vector<8x16xf32> -> vector<8x16xf32>
    %371 = vector.broadcast %13 : vector<1x16xf32> to vector<8x16xf32>
    %372 = arith.addf %370, %371 : vector<8x16xf32>
    %cst_87 = arith.constant 0.000000e+00 : f32
    %373 = vector.broadcast %cst_87 : f32 to vector<8x16xf32>
    %374 = arith.minimumf %372, %373 : vector<8x16xf32>
    %375 = math.exp %374 : vector<8x16xf32>
    %cst_88 = arith.constant 1.000000e+00 : f32
    %376 = vector.broadcast %cst_88 : f32 to vector<8x16xf32>
    %377 = arith.subf %375, %376 : vector<8x16xf32>
    %cst_89 = arith.constant 1.67326319 : f32
    %378 = vector.broadcast %cst_89 : f32 to vector<8x16xf32>
    %379 = arith.mulf %378, %377 : vector<8x16xf32>
    %cst_90 = arith.constant 0.000000e+00 : f32
    %380 = vector.broadcast %cst_90 : f32 to vector<8x16xf32>
    %381 = arith.cmpf ogt, %372, %380 : vector<8x16xf32>
    %382 = arith.select %381, %372, %379 : vector<8x16xi1>, vector<8x16xf32>
    %cst_91 = arith.constant 1.05070102 : f32
    %383 = vector.broadcast %cst_91 : f32 to vector<8x16xf32>
    %384 = arith.mulf %383, %382 : vector<8x16xf32>
    %385 = arith.truncf %384 : vector<8x16xf32> to vector<8x16xbf16>
    %cst_92 = arith.constant dense<0.000000e+00> : vector<8x128xf32>
    %386 = tpu.matmul %385, %14, %cst_92 {dimension_numbers = #tpu.dot_dimension_numbers<[1], [0], [0], [1], [0, 0, 1, 1], [], []>} : vector<8x16xbf16>, vector<16x128xbf16>, vector<8x128xf32> -> vector<8x128xf32>
    %387 = vector.broadcast %15 : vector<1x128xf32> to vector<8x128xf32>
    %388 = arith.addf %386, %387 : vector<8x128xf32>
    %389 = arith.truncf %368 : vector<8x32xf32> to vector<8x32xbf16>
    %cst_93 = arith.constant dense<0.000000e+00> : vector<8x128xf32>
    %390 = tpu.matmul %389, %17, %cst_93 {dimension_numbers = #tpu.dot_dimension_numbers<[1], [0], [0], [1], [0, 0, 1, 1], [], []>} : vector<8x32xbf16>, vector<32x128xbf16>, vector<8x128xf32> -> vector<8x128xf32>
    %391 = arith.addf %33, %390 : vector<8x128xf32>
    %392 = vector.broadcast %8 : vector<1x128xf32> to vector<8x128xf32>
    %393 = arith.mulf %391, %392 : vector<8x128xf32>
    %394 = math.tanh %393 : vector<8x128xf32>
    %395 = vector.broadcast %8 : vector<1x128xf32> to vector<8x128xf32>
    %396 = arith.mulf %394, %395 : vector<8x128xf32>
    %397 = vector.broadcast %11 : vector<1x128xf32> to vector<8x128xf32>
    %398 = arith.addf %396, %397 : vector<8x128xf32>
    %399 = vector.extract_strided_slice %398 {offsets = [0, 0], sizes = [8, 32], strides = [1, 1]} : vector<8x128xf32> to vector<8x32xf32>
    %400 = vector.extract_strided_slice %398 {offsets = [0, 32], sizes = [8, 32], strides = [1, 1]} : vector<8x128xf32> to vector<8x32xf32>
    %401 = vector.extract_strided_slice %398 {offsets = [0, 64], sizes = [8, 32], strides = [1, 1]} : vector<8x128xf32> to vector<8x32xf32>
    %402 = vector.extract_strided_slice %398 {offsets = [0, 96], sizes = [8, 32], strides = [1, 1]} : vector<8x128xf32> to vector<8x32xf32>
    %403 = arith.mulf %400, %366 : vector<8x32xf32>
    %404 = arith.mulf %399, %401 : vector<8x32xf32>
    %405 = arith.addf %403, %404 : vector<8x32xf32>
    %406 = math.tanh %405 : vector<8x32xf32>
    %407 = arith.mulf %402, %406 : vector<8x32xf32>
    %408 = arith.truncf %407 : vector<8x32xf32> to vector<8x32xbf16>
    %cst_94 = arith.constant dense<0.000000e+00> : vector<8x16xf32>
    %409 = tpu.matmul %408, %12, %cst_94 {dimension_numbers = #tpu.dot_dimension_numbers<[1], [0], [0], [1], [0, 0, 1, 1], [], []>} : vector<8x32xbf16>, vector<32x16xbf16>, vector<8x16xf32> -> vector<8x16xf32>
    %410 = vector.broadcast %13 : vector<1x16xf32> to vector<8x16xf32>
    %411 = arith.addf %409, %410 : vector<8x16xf32>
    %cst_95 = arith.constant 0.000000e+00 : f32
    %412 = vector.broadcast %cst_95 : f32 to vector<8x16xf32>
    %413 = arith.minimumf %411, %412 : vector<8x16xf32>
    %414 = math.exp %413 : vector<8x16xf32>
    %cst_96 = arith.constant 1.000000e+00 : f32
    %415 = vector.broadcast %cst_96 : f32 to vector<8x16xf32>
    %416 = arith.subf %414, %415 : vector<8x16xf32>
    %cst_97 = arith.constant 1.67326319 : f32
    %417 = vector.broadcast %cst_97 : f32 to vector<8x16xf32>
    %418 = arith.mulf %417, %416 : vector<8x16xf32>
    %cst_98 = arith.constant 0.000000e+00 : f32
    %419 = vector.broadcast %cst_98 : f32 to vector<8x16xf32>
    %420 = arith.cmpf ogt, %411, %419 : vector<8x16xf32>
    %421 = arith.select %420, %411, %418 : vector<8x16xi1>, vector<8x16xf32>
    %cst_99 = arith.constant 1.05070102 : f32
    %422 = vector.broadcast %cst_99 : f32 to vector<8x16xf32>
    %423 = arith.mulf %422, %421 : vector<8x16xf32>
    %424 = arith.truncf %423 : vector<8x16xf32> to vector<8x16xbf16>
    %cst_100 = arith.constant dense<0.000000e+00> : vector<8x128xf32>
    %425 = tpu.matmul %424, %14, %cst_100 {dimension_numbers = #tpu.dot_dimension_numbers<[1], [0], [0], [1], [0, 0, 1, 1], [], []>} : vector<8x16xbf16>, vector<16x128xbf16>, vector<8x128xf32> -> vector<8x128xf32>
    %426 = vector.broadcast %15 : vector<1x128xf32> to vector<8x128xf32>
    %427 = arith.addf %425, %426 : vector<8x128xf32>
    %428 = arith.truncf %407 : vector<8x32xf32> to vector<8x32xbf16>
    %cst_101 = arith.constant dense<0.000000e+00> : vector<8x128xf32>
    %429 = tpu.matmul %428, %17, %cst_101 {dimension_numbers = #tpu.dot_dimension_numbers<[1], [0], [0], [1], [0, 0, 1, 1], [], []>} : vector<8x32xbf16>, vector<32x128xbf16>, vector<8x128xf32> -> vector<8x128xf32>
    %430 = arith.addf %34, %429 : vector<8x128xf32>
    %431 = vector.broadcast %8 : vector<1x128xf32> to vector<8x128xf32>
    %432 = arith.mulf %430, %431 : vector<8x128xf32>
    %433 = math.tanh %432 : vector<8x128xf32>
    %434 = vector.broadcast %8 : vector<1x128xf32> to vector<8x128xf32>
    %435 = arith.mulf %433, %434 : vector<8x128xf32>
    %436 = vector.broadcast %11 : vector<1x128xf32> to vector<8x128xf32>
    %437 = arith.addf %435, %436 : vector<8x128xf32>
    %438 = vector.extract_strided_slice %437 {offsets = [0, 0], sizes = [8, 32], strides = [1, 1]} : vector<8x128xf32> to vector<8x32xf32>
    %439 = vector.extract_strided_slice %437 {offsets = [0, 32], sizes = [8, 32], strides = [1, 1]} : vector<8x128xf32> to vector<8x32xf32>
    %440 = vector.extract_strided_slice %437 {offsets = [0, 64], sizes = [8, 32], strides = [1, 1]} : vector<8x128xf32> to vector<8x32xf32>
    %441 = vector.extract_strided_slice %437 {offsets = [0, 96], sizes = [8, 32], strides = [1, 1]} : vector<8x128xf32> to vector<8x32xf32>
    %442 = arith.mulf %439, %405 : vector<8x32xf32>
    %443 = arith.mulf %438, %440 : vector<8x32xf32>
    %444 = arith.addf %442, %443 : vector<8x32xf32>
    %445 = math.tanh %444 : vector<8x32xf32>
    %446 = arith.mulf %441, %445 : vector<8x32xf32>
    %447 = arith.truncf %446 : vector<8x32xf32> to vector<8x32xbf16>
    %cst_102 = arith.constant dense<0.000000e+00> : vector<8x16xf32>
    %448 = tpu.matmul %447, %12, %cst_102 {dimension_numbers = #tpu.dot_dimension_numbers<[1], [0], [0], [1], [0, 0, 1, 1], [], []>} : vector<8x32xbf16>, vector<32x16xbf16>, vector<8x16xf32> -> vector<8x16xf32>
    %449 = vector.broadcast %13 : vector<1x16xf32> to vector<8x16xf32>
    %450 = arith.addf %448, %449 : vector<8x16xf32>
    %cst_103 = arith.constant 0.000000e+00 : f32
    %451 = vector.broadcast %cst_103 : f32 to vector<8x16xf32>
    %452 = arith.minimumf %450, %451 : vector<8x16xf32>
    %453 = math.exp %452 : vector<8x16xf32>
    %cst_104 = arith.constant 1.000000e+00 : f32
    %454 = vector.broadcast %cst_104 : f32 to vector<8x16xf32>
    %455 = arith.subf %453, %454 : vector<8x16xf32>
    %cst_105 = arith.constant 1.67326319 : f32
    %456 = vector.broadcast %cst_105 : f32 to vector<8x16xf32>
    %457 = arith.mulf %456, %455 : vector<8x16xf32>
    %cst_106 = arith.constant 0.000000e+00 : f32
    %458 = vector.broadcast %cst_106 : f32 to vector<8x16xf32>
    %459 = arith.cmpf ogt, %450, %458 : vector<8x16xf32>
    %460 = arith.select %459, %450, %457 : vector<8x16xi1>, vector<8x16xf32>
    %cst_107 = arith.constant 1.05070102 : f32
    %461 = vector.broadcast %cst_107 : f32 to vector<8x16xf32>
    %462 = arith.mulf %461, %460 : vector<8x16xf32>
    %463 = arith.truncf %462 : vector<8x16xf32> to vector<8x16xbf16>
    %cst_108 = arith.constant dense<0.000000e+00> : vector<8x128xf32>
    %464 = tpu.matmul %463, %14, %cst_108 {dimension_numbers = #tpu.dot_dimension_numbers<[1], [0], [0], [1], [0, 0, 1, 1], [], []>} : vector<8x16xbf16>, vector<16x128xbf16>, vector<8x128xf32> -> vector<8x128xf32>
    %465 = vector.broadcast %15 : vector<1x128xf32> to vector<8x128xf32>
    %466 = arith.addf %464, %465 : vector<8x128xf32>
    %467 = arith.truncf %446 : vector<8x32xf32> to vector<8x32xbf16>
    %cst_109 = arith.constant dense<0.000000e+00> : vector<8x128xf32>
    %468 = tpu.matmul %467, %17, %cst_109 {dimension_numbers = #tpu.dot_dimension_numbers<[1], [0], [0], [1], [0, 0, 1, 1], [], []>} : vector<8x32xbf16>, vector<32x128xbf16>, vector<8x128xf32> -> vector<8x128xf32>
    %469 = arith.addf %35, %468 : vector<8x128xf32>
    %470 = vector.broadcast %8 : vector<1x128xf32> to vector<8x128xf32>
    %471 = arith.mulf %469, %470 : vector<8x128xf32>
    %472 = math.tanh %471 : vector<8x128xf32>
    %473 = vector.broadcast %8 : vector<1x128xf32> to vector<8x128xf32>
    %474 = arith.mulf %472, %473 : vector<8x128xf32>
    %475 = vector.broadcast %11 : vector<1x128xf32> to vector<8x128xf32>
    %476 = arith.addf %474, %475 : vector<8x128xf32>
    %477 = vector.extract_strided_slice %476 {offsets = [0, 0], sizes = [8, 32], strides = [1, 1]} : vector<8x128xf32> to vector<8x32xf32>
    %478 = vector.extract_strided_slice %476 {offsets = [0, 32], sizes = [8, 32], strides = [1, 1]} : vector<8x128xf32> to vector<8x32xf32>
    %479 = vector.extract_strided_slice %476 {offsets = [0, 64], sizes = [8, 32], strides = [1, 1]} : vector<8x128xf32> to vector<8x32xf32>
    %480 = vector.extract_strided_slice %476 {offsets = [0, 96], sizes = [8, 32], strides = [1, 1]} : vector<8x128xf32> to vector<8x32xf32>
    %481 = arith.mulf %478, %444 : vector<8x32xf32>
    %482 = arith.mulf %477, %479 : vector<8x32xf32>
    %483 = arith.addf %481, %482 : vector<8x32xf32>
    %484 = math.tanh %483 : vector<8x32xf32>
    %485 = arith.mulf %480, %484 : vector<8x32xf32>
    %486 = arith.truncf %485 : vector<8x32xf32> to vector<8x32xbf16>
    %cst_110 = arith.constant dense<0.000000e+00> : vector<8x16xf32>
    %487 = tpu.matmul %486, %12, %cst_110 {dimension_numbers = #tpu.dot_dimension_numbers<[1], [0], [0], [1], [0, 0, 1, 1], [], []>} : vector<8x32xbf16>, vector<32x16xbf16>, vector<8x16xf32> -> vector<8x16xf32>
    %488 = vector.broadcast %13 : vector<1x16xf32> to vector<8x16xf32>
    %489 = arith.addf %487, %488 : vector<8x16xf32>
    %cst_111 = arith.constant 0.000000e+00 : f32
    %490 = vector.broadcast %cst_111 : f32 to vector<8x16xf32>
    %491 = arith.minimumf %489, %490 : vector<8x16xf32>
    %492 = math.exp %491 : vector<8x16xf32>
    %cst_112 = arith.constant 1.000000e+00 : f32
    %493 = vector.broadcast %cst_112 : f32 to vector<8x16xf32>
    %494 = arith.subf %492, %493 : vector<8x16xf32>
    %cst_113 = arith.constant 1.67326319 : f32
    %495 = vector.broadcast %cst_113 : f32 to vector<8x16xf32>
    %496 = arith.mulf %495, %494 : vector<8x16xf32>
    %cst_114 = arith.constant 0.000000e+00 : f32
    %497 = vector.broadcast %cst_114 : f32 to vector<8x16xf32>
    %498 = arith.cmpf ogt, %489, %497 : vector<8x16xf32>
    %499 = arith.select %498, %489, %496 : vector<8x16xi1>, vector<8x16xf32>
    %cst_115 = arith.constant 1.05070102 : f32
    %500 = vector.broadcast %cst_115 : f32 to vector<8x16xf32>
    %501 = arith.mulf %500, %499 : vector<8x16xf32>
    %502 = arith.truncf %501 : vector<8x16xf32> to vector<8x16xbf16>
    %cst_116 = arith.constant dense<0.000000e+00> : vector<8x128xf32>
    %503 = tpu.matmul %502, %14, %cst_116 {dimension_numbers = #tpu.dot_dimension_numbers<[1], [0], [0], [1], [0, 0, 1, 1], [], []>} : vector<8x16xbf16>, vector<16x128xbf16>, vector<8x128xf32> -> vector<8x128xf32>
    %504 = vector.broadcast %15 : vector<1x128xf32> to vector<8x128xf32>
    %505 = arith.addf %503, %504 : vector<8x128xf32>
    %c16 = arith.constant 16 : index
    %c0_117 = arith.constant 0 : index
    %506 = vector.load %arg3[%c16, %c0_117] : memref<48x128xbf16, #tpu.memory_space<vmem>>, vector<32x128xbf16>
    %507 = arith.truncf %485 : vector<8x32xf32> to vector<8x32xbf16>
    %cst_118 = arith.constant dense<0.000000e+00> : vector<8x128xf32>
    %508 = tpu.matmul %507, %506, %cst_118 {dimension_numbers = #tpu.dot_dimension_numbers<[1], [0], [0], [1], [0, 0, 1, 1], [], []>} : vector<8x32xbf16>, vector<32x128xbf16>, vector<8x128xf32> -> vector<8x128xf32>
    %509 = arith.addf %76, %508 : vector<8x128xf32>
    %510 = vector.broadcast %8 : vector<1x128xf32> to vector<8x128xf32>
    %511 = arith.mulf %509, %510 : vector<8x128xf32>
    %512 = math.tanh %511 : vector<8x128xf32>
    %513 = vector.broadcast %8 : vector<1x128xf32> to vector<8x128xf32>
    %514 = arith.mulf %512, %513 : vector<8x128xf32>
    %515 = vector.broadcast %11 : vector<1x128xf32> to vector<8x128xf32>
    %516 = arith.addf %514, %515 : vector<8x128xf32>
    %517 = vector.extract_strided_slice %516 {offsets = [0, 0], sizes = [8, 32], strides = [1, 1]} : vector<8x128xf32> to vector<8x32xf32>
    %518 = vector.extract_strided_slice %516 {offsets = [0, 32], sizes = [8, 32], strides = [1, 1]} : vector<8x128xf32> to vector<8x32xf32>
    %519 = vector.extract_strided_slice %516 {offsets = [0, 64], sizes = [8, 32], strides = [1, 1]} : vector<8x128xf32> to vector<8x32xf32>
    %520 = vector.extract_strided_slice %516 {offsets = [0, 96], sizes = [8, 32], strides = [1, 1]} : vector<8x128xf32> to vector<8x32xf32>
    %521 = arith.mulf %518, %483 : vector<8x32xf32>
    %522 = arith.mulf %517, %519 : vector<8x32xf32>
    %523 = arith.addf %521, %522 : vector<8x32xf32>
    %524 = math.tanh %523 : vector<8x32xf32>
    %525 = arith.mulf %520, %524 : vector<8x32xf32>
    %526 = vector.broadcast %16 : vector<1x32xf32> to vector<8x32xf32>
    %527 = arith.mulf %525, %526 : vector<8x32xf32>
    %cst_119 = arith.constant dense<0.000000e+00> : vector<8xf32>
    %528 = vector.multi_reduction <add>, %527, %cst_119 [1] : vector<8x32xf32> to vector<8xf32>
    %529 = vector.shape_cast %528 : vector<8xf32> to vector<8x1xf32>
    %c0_120 = arith.constant 0 : index
    %c0_121 = arith.constant 0 : index
    %530 = vector.load %arg9[%c0_120, %c0_121] : memref<8x12xf32, #tpu.memory_space<vmem>>, vector<8x1xf32>
    tpu.vector_store %arg9[%c0_120, %c0_121], %529 {strides = array<i32>} : memref<8x12xf32, #tpu.memory_space<vmem>>, vector<8x1xf32>,
    %531 = arith.truncf %525 : vector<8x32xf32> to vector<8x32xbf16>
    %cst_122 = arith.constant dense<0.000000e+00> : vector<8x128xf32>
    %532 = tpu.matmul %531, %506, %cst_122 {dimension_numbers = #tpu.dot_dimension_numbers<[1], [0], [0], [1], [0, 0, 1, 1], [], []>} : vector<8x32xbf16>, vector<32x128xbf16>, vector<8x128xf32> -> vector<8x128xf32>
    %533 = arith.addf %115, %532 : vector<8x128xf32>
    %534 = vector.broadcast %8 : vector<1x128xf32> to vector<8x128xf32>
    %535 = arith.mulf %533, %534 : vector<8x128xf32>
    %536 = math.tanh %535 : vector<8x128xf32>
    %537 = vector.broadcast %8 : vector<1x128xf32> to vector<8x128xf32>
    %538 = arith.mulf %536, %537 : vector<8x128xf32>
    %539 = vector.broadcast %11 : vector<1x128xf32> to vector<8x128xf32>
    %540 = arith.addf %538, %539 : vector<8x128xf32>
    %541 = vector.extract_strided_slice %540 {offsets = [0, 0], sizes = [8, 32], strides = [1, 1]} : vector<8x128xf32> to vector<8x32xf32>
    %542 = vector.extract_strided_slice %540 {offsets = [0, 32], sizes = [8, 32], strides = [1, 1]} : vector<8x128xf32> to vector<8x32xf32>
    %543 = vector.extract_strided_slice %540 {offsets = [0, 64], sizes = [8, 32], strides = [1, 1]} : vector<8x128xf32> to vector<8x32xf32>
    %544 = vector.extract_strided_slice %540 {offsets = [0, 96], sizes = [8, 32], strides = [1, 1]} : vector<8x128xf32> to vector<8x32xf32>
    %545 = arith.mulf %542, %523 : vector<8x32xf32>
    %546 = arith.mulf %541, %543 : vector<8x32xf32>
    %547 = arith.addf %545, %546 : vector<8x32xf32>
    %548 = math.tanh %547 : vector<8x32xf32>
    %549 = arith.mulf %544, %548 : vector<8x32xf32>
    %550 = vector.broadcast %16 : vector<1x32xf32> to vector<8x32xf32>
    %551 = arith.mulf %549, %550 : vector<8x32xf32>
    %cst_123 = arith.constant dense<0.000000e+00> : vector<8xf32>
    %552 = vector.multi_reduction <add>, %551, %cst_123 [1] : vector<8x32xf32> to vector<8xf32>
    %553 = vector.shape_cast %552 : vector<8xf32> to vector<8x1xf32>
    %c0_124 = arith.constant 0 : index
    %c1_125 = arith.constant 1 : index
    %554 = vector.load %arg9[%c0_124, %c1_125] : memref<8x12xf32, #tpu.memory_space<vmem>>, vector<8x1xf32>
    tpu.vector_store %arg9[%c0_124, %c1_125], %553 {strides = array<i32>} : memref<8x12xf32, #tpu.memory_space<vmem>>, vector<8x1xf32>,
    %555 = arith.truncf %549 : vector<8x32xf32> to vector<8x32xbf16>
    %cst_126 = arith.constant dense<0.000000e+00> : vector<8x128xf32>
    %556 = tpu.matmul %555, %506, %cst_126 {dimension_numbers = #tpu.dot_dimension_numbers<[1], [0], [0], [1], [0, 0, 1, 1], [], []>} : vector<8x32xbf16>, vector<32x128xbf16>, vector<8x128xf32> -> vector<8x128xf32>
    %557 = arith.addf %154, %556 : vector<8x128xf32>
    %558 = vector.broadcast %8 : vector<1x128xf32> to vector<8x128xf32>
    %559 = arith.mulf %557, %558 : vector<8x128xf32>
    %560 = math.tanh %559 : vector<8x128xf32>
    %561 = vector.broadcast %8 : vector<1x128xf32> to vector<8x128xf32>
    %562 = arith.mulf %560, %561 : vector<8x128xf32>
    %563 = vector.broadcast %11 : vector<1x128xf32> to vector<8x128xf32>
    %564 = arith.addf %562, %563 : vector<8x128xf32>
    %565 = vector.extract_strided_slice %564 {offsets = [0, 0], sizes = [8, 32], strides = [1, 1]} : vector<8x128xf32> to vector<8x32xf32>
    %566 = vector.extract_strided_slice %564 {offsets = [0, 32], sizes = [8, 32], strides = [1, 1]} : vector<8x128xf32> to vector<8x32xf32>
    %567 = vector.extract_strided_slice %564 {offsets = [0, 64], sizes = [8, 32], strides = [1, 1]} : vector<8x128xf32> to vector<8x32xf32>
    %568 = vector.extract_strided_slice %564 {offsets = [0, 96], sizes = [8, 32], strides = [1, 1]} : vector<8x128xf32> to vector<8x32xf32>
    %569 = arith.mulf %566, %547 : vector<8x32xf32>
    %570 = arith.mulf %565, %567 : vector<8x32xf32>
    %571 = arith.addf %569, %570 : vector<8x32xf32>
    %572 = math.tanh %571 : vector<8x32xf32>
    %573 = arith.mulf %568, %572 : vector<8x32xf32>
    %574 = vector.broadcast %16 : vector<1x32xf32> to vector<8x32xf32>
    %575 = arith.mulf %573, %574 : vector<8x32xf32>
    %cst_127 = arith.constant dense<0.000000e+00> : vector<8xf32>
    %576 = vector.multi_reduction <add>, %575, %cst_127 [1] : vector<8x32xf32> to vector<8xf32>
    %577 = vector.shape_cast %576 : vector<8xf32> to vector<8x1xf32>
    %c0_128 = arith.constant 0 : index
    %c2 = arith.constant 2 : index
    %578 = vector.load %arg9[%c0_128, %c2] : memref<8x12xf32, #tpu.memory_space<vmem>>, vector<8x1xf32>
    tpu.vector_store %arg9[%c0_128, %c2], %577 {strides = array<i32>} : memref<8x12xf32, #tpu.memory_space<vmem>>, vector<8x1xf32>,
    %579 = arith.truncf %573 : vector<8x32xf32> to vector<8x32xbf16>
    %cst_129 = arith.constant dense<0.000000e+00> : vector<8x128xf32>
    %580 = tpu.matmul %579, %506, %cst_129 {dimension_numbers = #tpu.dot_dimension_numbers<[1], [0], [0], [1], [0, 0, 1, 1], [], []>} : vector<8x32xbf16>, vector<32x128xbf16>, vector<8x128xf32> -> vector<8x128xf32>
    %581 = arith.addf %193, %580 : vector<8x128xf32>
    %582 = vector.broadcast %8 : vector<1x128xf32> to vector<8x128xf32>
    %583 = arith.mulf %581, %582 : vector<8x128xf32>
    %584 = math.tanh %583 : vector<8x128xf32>
    %585 = vector.broadcast %8 : vector<1x128xf32> to vector<8x128xf32>
    %586 = arith.mulf %584, %585 : vector<8x128xf32>
    %587 = vector.broadcast %11 : vector<1x128xf32> to vector<8x128xf32>
    %588 = arith.addf %586, %587 : vector<8x128xf32>
    %589 = vector.extract_strided_slice %588 {offsets = [0, 0], sizes = [8, 32], strides = [1, 1]} : vector<8x128xf32> to vector<8x32xf32>
    %590 = vector.extract_strided_slice %588 {offsets = [0, 32], sizes = [8, 32], strides = [1, 1]} : vector<8x128xf32> to vector<8x32xf32>
    %591 = vector.extract_strided_slice %588 {offsets = [0, 64], sizes = [8, 32], strides = [1, 1]} : vector<8x128xf32> to vector<8x32xf32>
    %592 = vector.extract_strided_slice %588 {offsets = [0, 96], sizes = [8, 32], strides = [1, 1]} : vector<8x128xf32> to vector<8x32xf32>
    %593 = arith.mulf %590, %571 : vector<8x32xf32>
    %594 = arith.mulf %589, %591 : vector<8x32xf32>
    %595 = arith.addf %593, %594 : vector<8x32xf32>
    %596 = math.tanh %595 : vector<8x32xf32>
    %597 = arith.mulf %592, %596 : vector<8x32xf32>
    %598 = vector.broadcast %16 : vector<1x32xf32> to vector<8x32xf32>
    %599 = arith.mulf %597, %598 : vector<8x32xf32>
    %cst_130 = arith.constant dense<0.000000e+00> : vector<8xf32>
    %600 = vector.multi_reduction <add>, %599, %cst_130 [1] : vector<8x32xf32> to vector<8xf32>
    %601 = vector.shape_cast %600 : vector<8xf32> to vector<8x1xf32>
    %c0_131 = arith.constant 0 : index
    %c3 = arith.constant 3 : index
    %602 = vector.load %arg9[%c0_131, %c3] : memref<8x12xf32, #tpu.memory_space<vmem>>, vector<8x1xf32>
    tpu.vector_store %arg9[%c0_131, %c3], %601 {strides = array<i32>} : memref<8x12xf32, #tpu.memory_space<vmem>>, vector<8x1xf32>,
    %603 = arith.truncf %597 : vector<8x32xf32> to vector<8x32xbf16>
    %cst_132 = arith.constant dense<0.000000e+00> : vector<8x128xf32>
    %604 = tpu.matmul %603, %506, %cst_132 {dimension_numbers = #tpu.dot_dimension_numbers<[1], [0], [0], [1], [0, 0, 1, 1], [], []>} : vector<8x32xbf16>, vector<32x128xbf16>, vector<8x128xf32> -> vector<8x128xf32>
    %605 = arith.addf %232, %604 : vector<8x128xf32>
    %606 = vector.broadcast %8 : vector<1x128xf32> to vector<8x128xf32>
    %607 = arith.mulf %605, %606 : vector<8x128xf32>
    %608 = math.tanh %607 : vector<8x128xf32>
    %609 = vector.broadcast %8 : vector<1x128xf32> to vector<8x128xf32>
    %610 = arith.mulf %608, %609 : vector<8x128xf32>
    %611 = vector.broadcast %11 : vector<1x128xf32> to vector<8x128xf32>
    %612 = arith.addf %610, %611 : vector<8x128xf32>
    %613 = vector.extract_strided_slice %612 {offsets = [0, 0], sizes = [8, 32], strides = [1, 1]} : vector<8x128xf32> to vector<8x32xf32>
    %614 = vector.extract_strided_slice %612 {offsets = [0, 32], sizes = [8, 32], strides = [1, 1]} : vector<8x128xf32> to vector<8x32xf32>
    %615 = vector.extract_strided_slice %612 {offsets = [0, 64], sizes = [8, 32], strides = [1, 1]} : vector<8x128xf32> to vector<8x32xf32>
    %616 = vector.extract_strided_slice %612 {offsets = [0, 96], sizes = [8, 32], strides = [1, 1]} : vector<8x128xf32> to vector<8x32xf32>
    %617 = arith.mulf %614, %595 : vector<8x32xf32>
    %618 = arith.mulf %613, %615 : vector<8x32xf32>
    %619 = arith.addf %617, %618 : vector<8x32xf32>
    %620 = math.tanh %619 : vector<8x32xf32>
    %621 = arith.mulf %616, %620 : vector<8x32xf32>
    %622 = vector.broadcast %16 : vector<1x32xf32> to vector<8x32xf32>
    %623 = arith.mulf %621, %622 : vector<8x32xf32>
    %cst_133 = arith.constant dense<0.000000e+00> : vector<8xf32>
    %624 = vector.multi_reduction <add>, %623, %cst_133 [1] : vector<8x32xf32> to vector<8xf32>
    %625 = vector.shape_cast %624 : vector<8xf32> to vector<8x1xf32>
    %c0_134 = arith.constant 0 : index
    %c4 = arith.constant 4 : index
    %626 = vector.load %arg9[%c0_134, %c4] : memref<8x12xf32, #tpu.memory_space<vmem>>, vector<8x1xf32>
    tpu.vector_store %arg9[%c0_134, %c4], %625 {strides = array<i32>} : memref<8x12xf32, #tpu.memory_space<vmem>>, vector<8x1xf32>,
    %627 = arith.truncf %621 : vector<8x32xf32> to vector<8x32xbf16>
    %cst_135 = arith.constant dense<0.000000e+00> : vector<8x128xf32>
    %628 = tpu.matmul %627, %506, %cst_135 {dimension_numbers = #tpu.dot_dimension_numbers<[1], [0], [0], [1], [0, 0, 1, 1], [], []>} : vector<8x32xbf16>, vector<32x128xbf16>, vector<8x128xf32> -> vector<8x128xf32>
    %629 = arith.addf %271, %628 : vector<8x128xf32>
    %630 = vector.broadcast %8 : vector<1x128xf32> to vector<8x128xf32>
    %631 = arith.mulf %629, %630 : vector<8x128xf32>
    %632 = math.tanh %631 : vector<8x128xf32>
    %633 = vector.broadcast %8 : vector<1x128xf32> to vector<8x128xf32>
    %634 = arith.mulf %632, %633 : vector<8x128xf32>
    %635 = vector.broadcast %11 : vector<1x128xf32> to vector<8x128xf32>
    %636 = arith.addf %634, %635 : vector<8x128xf32>
    %637 = vector.extract_strided_slice %636 {offsets = [0, 0], sizes = [8, 32], strides = [1, 1]} : vector<8x128xf32> to vector<8x32xf32>
    %638 = vector.extract_strided_slice %636 {offsets = [0, 32], sizes = [8, 32], strides = [1, 1]} : vector<8x128xf32> to vector<8x32xf32>
    %639 = vector.extract_strided_slice %636 {offsets = [0, 64], sizes = [8, 32], strides = [1, 1]} : vector<8x128xf32> to vector<8x32xf32>
    %640 = vector.extract_strided_slice %636 {offsets = [0, 96], sizes = [8, 32], strides = [1, 1]} : vector<8x128xf32> to vector<8x32xf32>
    %641 = arith.mulf %638, %619 : vector<8x32xf32>
    %642 = arith.mulf %637, %639 : vector<8x32xf32>
    %643 = arith.addf %641, %642 : vector<8x32xf32>
    %644 = math.tanh %643 : vector<8x32xf32>
    %645 = arith.mulf %640, %644 : vector<8x32xf32>
    %646 = vector.broadcast %16 : vector<1x32xf32> to vector<8x32xf32>
    %647 = arith.mulf %645, %646 : vector<8x32xf32>
    %cst_136 = arith.constant dense<0.000000e+00> : vector<8xf32>
    %648 = vector.multi_reduction <add>, %647, %cst_136 [1] : vector<8x32xf32> to vector<8xf32>
    %649 = vector.shape_cast %648 : vector<8xf32> to vector<8x1xf32>
    %c0_137 = arith.constant 0 : index
    %c5 = arith.constant 5 : index
    %650 = vector.load %arg9[%c0_137, %c5] : memref<8x12xf32, #tpu.memory_space<vmem>>, vector<8x1xf32>
    tpu.vector_store %arg9[%c0_137, %c5], %649 {strides = array<i32>} : memref<8x12xf32, #tpu.memory_space<vmem>>, vector<8x1xf32>,
    %651 = arith.truncf %645 : vector<8x32xf32> to vector<8x32xbf16>
    %cst_138 = arith.constant dense<0.000000e+00> : vector<8x128xf32>
    %652 = tpu.matmul %651, %506, %cst_138 {dimension_numbers = #tpu.dot_dimension_numbers<[1], [0], [0], [1], [0, 0, 1, 1], [], []>} : vector<8x32xbf16>, vector<32x128xbf16>, vector<8x128xf32> -> vector<8x128xf32>
    %653 = arith.addf %310, %652 : vector<8x128xf32>
    %654 = vector.broadcast %8 : vector<1x128xf32> to vector<8x128xf32>
    %655 = arith.mulf %653, %654 : vector<8x128xf32>
    %656 = math.tanh %655 : vector<8x128xf32>
    %657 = vector.broadcast %8 : vector<1x128xf32> to vector<8x128xf32>
    %658 = arith.mulf %656, %657 : vector<8x128xf32>
    %659 = vector.broadcast %11 : vector<1x128xf32> to vector<8x128xf32>
    %660 = arith.addf %658, %659 : vector<8x128xf32>
    %661 = vector.extract_strided_slice %660 {offsets = [0, 0], sizes = [8, 32], strides = [1, 1]} : vector<8x128xf32> to vector<8x32xf32>
    %662 = vector.extract_strided_slice %660 {offsets = [0, 32], sizes = [8, 32], strides = [1, 1]} : vector<8x128xf32> to vector<8x32xf32>
    %663 = vector.extract_strided_slice %660 {offsets = [0, 64], sizes = [8, 32], strides = [1, 1]} : vector<8x128xf32> to vector<8x32xf32>
    %664 = vector.extract_strided_slice %660 {offsets = [0, 96], sizes = [8, 32], strides = [1, 1]} : vector<8x128xf32> to vector<8x32xf32>
    %665 = arith.mulf %662, %643 : vector<8x32xf32>
    %666 = arith.mulf %661, %663 : vector<8x32xf32>
    %667 = arith.addf %665, %666 : vector<8x32xf32>
    %668 = math.tanh %667 : vector<8x32xf32>
    %669 = arith.mulf %664, %668 : vector<8x32xf32>
    %670 = vector.broadcast %16 : vector<1x32xf32> to vector<8x32xf32>
    %671 = arith.mulf %669, %670 : vector<8x32xf32>
    %cst_139 = arith.constant dense<0.000000e+00> : vector<8xf32>
    %672 = vector.multi_reduction <add>, %671, %cst_139 [1] : vector<8x32xf32> to vector<8xf32>
    %673 = vector.shape_cast %672 : vector<8xf32> to vector<8x1xf32>
    %c0_140 = arith.constant 0 : index
    %c6 = arith.constant 6 : index
    %674 = vector.load %arg9[%c0_140, %c6] : memref<8x12xf32, #tpu.memory_space<vmem>>, vector<8x1xf32>
    tpu.vector_store %arg9[%c0_140, %c6], %673 {strides = array<i32>} : memref<8x12xf32, #tpu.memory_space<vmem>>, vector<8x1xf32>,
    %675 = arith.truncf %669 : vector<8x32xf32> to vector<8x32xbf16>
    %cst_141 = arith.constant dense<0.000000e+00> : vector<8x128xf32>
    %676 = tpu.matmul %675, %506, %cst_141 {dimension_numbers = #tpu.dot_dimension_numbers<[1], [0], [0], [1], [0, 0, 1, 1], [], []>} : vector<8x32xbf16>, vector<32x128xbf16>, vector<8x128xf32> -> vector<8x128xf32>
    %677 = arith.addf %349, %676 : vector<8x128xf32>
    %678 = vector.broadcast %8 : vector<1x128xf32> to vector<8x128xf32>
    %679 = arith.mulf %677, %678 : vector<8x128xf32>
    %680 = math.tanh %679 : vector<8x128xf32>
    %681 = vector.broadcast %8 : vector<1x128xf32> to vector<8x128xf32>
    %682 = arith.mulf %680, %681 : vector<8x128xf32>
    %683 = vector.broadcast %11 : vector<1x128xf32> to vector<8x128xf32>
    %684 = arith.addf %682, %683 : vector<8x128xf32>
    %685 = vector.extract_strided_slice %684 {offsets = [0, 0], sizes = [8, 32], strides = [1, 1]} : vector<8x128xf32> to vector<8x32xf32>
    %686 = vector.extract_strided_slice %684 {offsets = [0, 32], sizes = [8, 32], strides = [1, 1]} : vector<8x128xf32> to vector<8x32xf32>
    %687 = vector.extract_strided_slice %684 {offsets = [0, 64], sizes = [8, 32], strides = [1, 1]} : vector<8x128xf32> to vector<8x32xf32>
    %688 = vector.extract_strided_slice %684 {offsets = [0, 96], sizes = [8, 32], strides = [1, 1]} : vector<8x128xf32> to vector<8x32xf32>
    %689 = arith.mulf %686, %667 : vector<8x32xf32>
    %690 = arith.mulf %685, %687 : vector<8x32xf32>
    %691 = arith.addf %689, %690 : vector<8x32xf32>
    %692 = math.tanh %691 : vector<8x32xf32>
    %693 = arith.mulf %688, %692 : vector<8x32xf32>
    %694 = vector.broadcast %16 : vector<1x32xf32> to vector<8x32xf32>
    %695 = arith.mulf %693, %694 : vector<8x32xf32>
    %cst_142 = arith.constant dense<0.000000e+00> : vector<8xf32>
    %696 = vector.multi_reduction <add>, %695, %cst_142 [1] : vector<8x32xf32> to vector<8xf32>
    %697 = vector.shape_cast %696 : vector<8xf32> to vector<8x1xf32>
    %c0_143 = arith.constant 0 : index
    %c7 = arith.constant 7 : index
    %698 = vector.load %arg9[%c0_143, %c7] : memref<8x12xf32, #tpu.memory_space<vmem>>, vector<8x1xf32>
    tpu.vector_store %arg9[%c0_143, %c7], %697 {strides = array<i32>} : memref<8x12xf32, #tpu.memory_space<vmem>>, vector<8x1xf32>,
    %699 = arith.truncf %693 : vector<8x32xf32> to vector<8x32xbf16>
    %cst_144 = arith.constant dense<0.000000e+00> : vector<8x128xf32>
    %700 = tpu.matmul %699, %506, %cst_144 {dimension_numbers = #tpu.dot_dimension_numbers<[1], [0], [0], [1], [0, 0, 1, 1], [], []>} : vector<8x32xbf16>, vector<32x128xbf16>, vector<8x128xf32> -> vector<8x128xf32>
    %701 = arith.addf %388, %700 : vector<8x128xf32>
    %702 = vector.broadcast %8 : vector<1x128xf32> to vector<8x128xf32>
    %703 = arith.mulf %701, %702 : vector<8x128xf32>
    %704 = math.tanh %703 : vector<8x128xf32>
    %705 = vector.broadcast %8 : vector<1x128xf32> to vector<8x128xf32>
    %706 = arith.mulf %704, %705 : vector<8x128xf32>
    %707 = vector.broadcast %11 : vector<1x128xf32> to vector<8x128xf32>
    %708 = arith.addf %706, %707 : vector<8x128xf32>
    %709 = vector.extract_strided_slice %708 {offsets = [0, 0], sizes = [8, 32], strides = [1, 1]} : vector<8x128xf32> to vector<8x32xf32>
    %710 = vector.extract_strided_slice %708 {offsets = [0, 32], sizes = [8, 32], strides = [1, 1]} : vector<8x128xf32> to vector<8x32xf32>
    %711 = vector.extract_strided_slice %708 {offsets = [0, 64], sizes = [8, 32], strides = [1, 1]} : vector<8x128xf32> to vector<8x32xf32>
    %712 = vector.extract_strided_slice %708 {offsets = [0, 96], sizes = [8, 32], strides = [1, 1]} : vector<8x128xf32> to vector<8x32xf32>
    %713 = arith.mulf %710, %691 : vector<8x32xf32>
    %714 = arith.mulf %709, %711 : vector<8x32xf32>
    %715 = arith.addf %713, %714 : vector<8x32xf32>
    %716 = math.tanh %715 : vector<8x32xf32>
    %717 = arith.mulf %712, %716 : vector<8x32xf32>
    %718 = vector.broadcast %16 : vector<1x32xf32> to vector<8x32xf32>
    %719 = arith.mulf %717, %718 : vector<8x32xf32>
    %cst_145 = arith.constant dense<0.000000e+00> : vector<8xf32>
    %720 = vector.multi_reduction <add>, %719, %cst_145 [1] : vector<8x32xf32> to vector<8xf32>
    %721 = vector.shape_cast %720 : vector<8xf32> to vector<8x1xf32>
    %c0_146 = arith.constant 0 : index
    %c8_147 = arith.constant 8 : index
    %722 = vector.load %arg9[%c0_146, %c8_147] : memref<8x12xf32, #tpu.memory_space<vmem>>, vector<8x1xf32>
    tpu.vector_store %arg9[%c0_146, %c8_147], %721 {strides = array<i32>} : memref<8x12xf32, #tpu.memory_space<vmem>>, vector<8x1xf32>,
    %723 = arith.truncf %717 : vector<8x32xf32> to vector<8x32xbf16>
    %cst_148 = arith.constant dense<0.000000e+00> : vector<8x128xf32>
    %724 = tpu.matmul %723, %506, %cst_148 {dimension_numbers = #tpu.dot_dimension_numbers<[1], [0], [0], [1], [0, 0, 1, 1], [], []>} : vector<8x32xbf16>, vector<32x128xbf16>, vector<8x128xf32> -> vector<8x128xf32>
    %725 = arith.addf %427, %724 : vector<8x128xf32>
    %726 = vector.broadcast %8 : vector<1x128xf32> to vector<8x128xf32>
    %727 = arith.mulf %725, %726 : vector<8x128xf32>
    %728 = math.tanh %727 : vector<8x128xf32>
    %729 = vector.broadcast %8 : vector<1x128xf32> to vector<8x128xf32>
    %730 = arith.mulf %728, %729 : vector<8x128xf32>
    %731 = vector.broadcast %11 : vector<1x128xf32> to vector<8x128xf32>
    %732 = arith.addf %730, %731 : vector<8x128xf32>
    %733 = vector.extract_strided_slice %732 {offsets = [0, 0], sizes = [8, 32], strides = [1, 1]} : vector<8x128xf32> to vector<8x32xf32>
    %734 = vector.extract_strided_slice %732 {offsets = [0, 32], sizes = [8, 32], strides = [1, 1]} : vector<8x128xf32> to vector<8x32xf32>
    %735 = vector.extract_strided_slice %732 {offsets = [0, 64], sizes = [8, 32], strides = [1, 1]} : vector<8x128xf32> to vector<8x32xf32>
    %736 = vector.extract_strided_slice %732 {offsets = [0, 96], sizes = [8, 32], strides = [1, 1]} : vector<8x128xf32> to vector<8x32xf32>
    %737 = arith.mulf %734, %715 : vector<8x32xf32>
    %738 = arith.mulf %733, %735 : vector<8x32xf32>
    %739 = arith.addf %737, %738 : vector<8x32xf32>
    %740 = math.tanh %739 : vector<8x32xf32>
    %741 = arith.mulf %736, %740 : vector<8x32xf32>
    %742 = vector.broadcast %16 : vector<1x32xf32> to vector<8x32xf32>
    %743 = arith.mulf %741, %742 : vector<8x32xf32>
    %cst_149 = arith.constant dense<0.000000e+00> : vector<8xf32>
    %744 = vector.multi_reduction <add>, %743, %cst_149 [1] : vector<8x32xf32> to vector<8xf32>
    %745 = vector.shape_cast %744 : vector<8xf32> to vector<8x1xf32>
    %c0_150 = arith.constant 0 : index
    %c9 = arith.constant 9 : index
    %746 = vector.load %arg9[%c0_150, %c9] : memref<8x12xf32, #tpu.memory_space<vmem>>, vector<8x1xf32>
    tpu.vector_store %arg9[%c0_150, %c9], %745 {strides = array<i32>} : memref<8x12xf32, #tpu.memory_space<vmem>>, vector<8x1xf32>,
    %747 = arith.truncf %741 : vector<8x32xf32> to vector<8x32xbf16>
    %cst_151 = arith.constant dense<0.000000e+00> : vector<8x128xf32>
    %748 = tpu.matmul %747, %506, %cst_151 {dimension_numbers = #tpu.dot_dimension_numbers<[1], [0], [0], [1], [0, 0, 1, 1], [], []>} : vector<8x32xbf16>, vector<32x128xbf16>, vector<8x128xf32> -> vector<8x128xf32>
    %749 = arith.addf %466, %748 : vector<8x128xf32>
    %750 = vector.broadcast %8 : vector<1x128xf32> to vector<8x128xf32>
    %751 = arith.mulf %749, %750 : vector<8x128xf32>
    %752 = math.tanh %751 : vector<8x128xf32>
    %753 = vector.broadcast %8 : vector<1x128xf32> to vector<8x128xf32>
    %754 = arith.mulf %752, %753 : vector<8x128xf32>
    %755 = vector.broadcast %11 : vector<1x128xf32> to vector<8x128xf32>
    %756 = arith.addf %754, %755 : vector<8x128xf32>
    %757 = vector.extract_strided_slice %756 {offsets = [0, 0], sizes = [8, 32], strides = [1, 1]} : vector<8x128xf32> to vector<8x32xf32>
    %758 = vector.extract_strided_slice %756 {offsets = [0, 32], sizes = [8, 32], strides = [1, 1]} : vector<8x128xf32> to vector<8x32xf32>
    %759 = vector.extract_strided_slice %756 {offsets = [0, 64], sizes = [8, 32], strides = [1, 1]} : vector<8x128xf32> to vector<8x32xf32>
    %760 = vector.extract_strided_slice %756 {offsets = [0, 96], sizes = [8, 32], strides = [1, 1]} : vector<8x128xf32> to vector<8x32xf32>
    %761 = arith.mulf %758, %739 : vector<8x32xf32>
    %762 = arith.mulf %757, %759 : vector<8x32xf32>
    %763 = arith.addf %761, %762 : vector<8x32xf32>
    %764 = math.tanh %763 : vector<8x32xf32>
    %765 = arith.mulf %760, %764 : vector<8x32xf32>
    %766 = vector.broadcast %16 : vector<1x32xf32> to vector<8x32xf32>
    %767 = arith.mulf %765, %766 : vector<8x32xf32>
    %cst_152 = arith.constant dense<0.000000e+00> : vector<8xf32>
    %768 = vector.multi_reduction <add>, %767, %cst_152 [1] : vector<8x32xf32> to vector<8xf32>
    %769 = vector.shape_cast %768 : vector<8xf32> to vector<8x1xf32>
    %c0_153 = arith.constant 0 : index
    %c10 = arith.constant 10 : index
    %770 = vector.load %arg9[%c0_153, %c10] : memref<8x12xf32, #tpu.memory_space<vmem>>, vector<8x1xf32>
    tpu.vector_store %arg9[%c0_153, %c10], %769 {strides = array<i32>} : memref<8x12xf32, #tpu.memory_space<vmem>>, vector<8x1xf32>,
    %771 = arith.truncf %765 : vector<8x32xf32> to vector<8x32xbf16>
    %cst_154 = arith.constant dense<0.000000e+00> : vector<8x128xf32>
    %772 = tpu.matmul %771, %506, %cst_154 {dimension_numbers = #tpu.dot_dimension_numbers<[1], [0], [0], [1], [0, 0, 1, 1], [], []>} : vector<8x32xbf16>, vector<32x128xbf16>, vector<8x128xf32> -> vector<8x128xf32>
    %773 = arith.addf %505, %772 : vector<8x128xf32>
    %774 = vector.broadcast %8 : vector<1x128xf32> to vector<8x128xf32>
    %775 = arith.mulf %773, %774 : vector<8x128xf32>
    %776 = math.tanh %775 : vector<8x128xf32>
    %777 = vector.broadcast %8 : vector<1x128xf32> to vector<8x128xf32>
    %778 = arith.mulf %776, %777 : vector<8x128xf32>
    %779 = vector.broadcast %11 : vector<1x128xf32> to vector<8x128xf32>
    %780 = arith.addf %778, %779 : vector<8x128xf32>
    %781 = vector.extract_strided_slice %780 {offsets = [0, 0], sizes = [8, 32], strides = [1, 1]} : vector<8x128xf32> to vector<8x32xf32>
    %782 = vector.extract_strided_slice %780 {offsets = [0, 32], sizes = [8, 32], strides = [1, 1]} : vector<8x128xf32> to vector<8x32xf32>
    %783 = vector.extract_strided_slice %780 {offsets = [0, 64], sizes = [8, 32], strides = [1, 1]} : vector<8x128xf32> to vector<8x32xf32>
    %784 = vector.extract_strided_slice %780 {offsets = [0, 96], sizes = [8, 32], strides = [1, 1]} : vector<8x128xf32> to vector<8x32xf32>
    %785 = arith.mulf %782, %763 : vector<8x32xf32>
    %786 = arith.mulf %781, %783 : vector<8x32xf32>
    %787 = arith.addf %785, %786 : vector<8x32xf32>
    %788 = math.tanh %787 : vector<8x32xf32>
    %789 = arith.mulf %784, %788 : vector<8x32xf32>
    %790 = vector.broadcast %16 : vector<1x32xf32> to vector<8x32xf32>
    %791 = arith.mulf %789, %790 : vector<8x32xf32>
    %cst_155 = arith.constant dense<0.000000e+00> : vector<8xf32>
    %792 = vector.multi_reduction <add>, %791, %cst_155 [1] : vector<8x32xf32> to vector<8xf32>
    %793 = vector.shape_cast %792 : vector<8xf32> to vector<8x1xf32>
    %c0_156 = arith.constant 0 : index
    %c11 = arith.constant 11 : index
    %794 = vector.load %arg9[%c0_156, %c11] : memref<8x12xf32, #tpu.memory_space<vmem>>, vector<8x1xf32>
    tpu.vector_store %arg9[%c0_156, %c11], %793 {strides = array<i32>} : memref<8x12xf32, #tpu.memory_space<vmem>>, vector<8x1xf32>,
    %c0_157 = arith.constant 0 : index
    %c0_158 = arith.constant 0 : index
    %795 = vector.load %arg7[%c0_157, %c0_158] : memref<6x9xf32, #tpu.memory_space<vmem>>, vector<6x9xf32>
    %796 = vector.extract_strided_slice %795 {offsets = [0, 0], sizes = [6, 8], strides = [1, 1]} : vector<6x9xf32> to vector<6x8xf32>
    %c0_159 = arith.constant 0 : index
    %c0_160 = arith.constant 0 : index
    %797 = vector.load %arg9[%c0_159, %c0_160] : memref<8x12xf32, #tpu.memory_space<vmem>>, vector<8x12xf32>
    %cst_161 = arith.constant dense<0.000000e+00> : vector<6x12xf32>
    %798 = tpu.matmul %796, %797, %cst_161 {dimension_numbers = #tpu.dot_dimension_numbers<[1], [0], [0], [1], [0, 0, 1, 1], [], []>} : vector<6x8xf32>, vector<8x12xf32>, vector<6x12xf32> -> vector<6x12xf32>
    %799 = vector.extract_strided_slice %795 {offsets = [0, 8], sizes = [6, 1], strides = [1, 1]} : vector<6x9xf32> to vector<6x1xf32>
    %800 = vector.broadcast %799 : vector<6x1xf32> to vector<6x12xf32>
    %801 = arith.addf %798, %800 : vector<6x12xf32>
    %cst_162 = arith.constant 0.000000e+00 : f32
    %802 = vector.broadcast %cst_162 : f32 to vector<6x12xf32>
    %803 = arith.minimumf %801, %802 : vector<6x12xf32>
    %804 = math.exp %803 : vector<6x12xf32>
    %cst_163 = arith.constant 1.000000e+00 : f32
    %805 = vector.broadcast %cst_163 : f32 to vector<6x12xf32>
    %806 = arith.subf %804, %805 : vector<6x12xf32>
    %cst_164 = arith.constant 1.67326319 : f32
    %807 = vector.broadcast %cst_164 : f32 to vector<6x12xf32>
    %808 = arith.mulf %807, %806 : vector<6x12xf32>
    %cst_165 = arith.constant 0.000000e+00 : f32
    %809 = vector.broadcast %cst_165 : f32 to vector<6x12xf32>
    %810 = arith.cmpf ogt, %801, %809 : vector<6x12xf32>
    %811 = arith.select %810, %801, %808 : vector<6x12xi1>, vector<6x12xf32>
    %cst_166 = arith.constant 1.05070102 : f32
    %812 = vector.broadcast %cst_166 : f32 to vector<6x12xf32>
    %813 = arith.mulf %812, %811 : vector<6x12xf32>
    %c0_167 = arith.constant 0 : index
    %c0_168 = arith.constant 0 : index
    %814 = vector.load %arg8[%c0_167, %c0_168] : memref<6x12xf32, #tpu.memory_space<vmem>>, vector<6x12xf32>
    tpu.vector_store %arg8[%c0_167, %c0_168], %813 {strides = array<i32>} : memref<6x12xf32, #tpu.memory_space<vmem>>, vector<6x12xf32>,
    return
  }
}

</mosaic_0001>

<llo_original>
// kernel: seq2seq_forward.1
$region0: #{seq2seq_forward.1}
  #allocation0 [shape = 'u32[]', space=smem, size = 0x4, offset = 0x4, fixed_abs, tag = 'smem constant byte address 0x4 - core index']
  #allocation1 [shape = 'u32[144,128]{1,0:T(1,128)}', space=vmem, size = 0x12000, scoped, tag = 'internal scratch']
  #allocation2 [shape = 'f32[8,12]{1,0:T(8,128)}', space=vmem, size = 0x1000, scoped, tag = 'scratch operand']
  %s0 = inlined_call_operand.vmem [shape: bf16[96,8], index: 0, kind: input, shape index: {}]
  %s1 = inlined_call_operand.vmem [shape: bf16[40,128], index: 1, kind: input, shape index: {}]
  %s2 = inlined_call_operand.vmem [shape: bf16[32,16], index: 2, kind: input, shape index: {}]
  %s3 = inlined_call_operand.vmem [shape: bf16[48,128], index: 3, kind: input, shape index: {}]
  %s4 = inlined_call_operand.vmem [shape: f32[2,128], index: 4, kind: input, shape index: {}]
  %s5 = inlined_call_operand.vmem [shape: f32[1,16], index: 5, kind: input, shape index: {}]
  %s6 = inlined_call_operand.vmem [shape: f32[1,32], index: 6, kind: input, shape index: {}]
  %s7 = inlined_call_operand.vmem [shape: f32[6,9], index: 7, kind: input, shape index: {}]
  %s8 = inlined_call_operand.vmem [shape: f32[6,12], index: 8, kind: output, shape index: {}]
  %s9 = sld [smem:[#allocation0]]
  $region42: #{seq2seq_forward.1} parent=0
    _
  %s11 = ssub.s32 1, %s9
  %s12 = scalar_select 0, %s11, %s9
  // Predicated region
  $region2: #{seq2seq_forward.1} parent=0 // pred_check
    _
  $region3: #{seq2seq_forward.1} parent=0 // pred_check_branch
    %14 = sbr.rel (0) target = $region5
  $region4: #{seq2seq_forward.1} parent=0 // pred_region
    _
  $region5: #{seq2seq_forward.1} parent=0 // pred_fallthru
    _
  // Predicated region
  $region6: #{seq2seq_forward.1} parent=0 // pred_check
    _
  $region7: #{seq2seq_forward.1} parent=0 // pred_check_branch
    %16 = sbr.rel (0) target = $region9
  $region8: #{seq2seq_forward.1} parent=0 // pred_region
    _
  $region9: #{seq2seq_forward.1} parent=0 // pred_fallthru
    _
  // Predicated region
  $region10: #{seq2seq_forward.1} parent=0 // pred_check
    _
  $region11: #{seq2seq_forward.1} parent=0 // pred_check_branch
    %18 = sbr.rel (0) target = $region13
  $region12: #{seq2seq_forward.1} parent=0 // pred_region
    _
  $region13: #{seq2seq_forward.1} parent=0 // pred_fallthru
    _
  // Predicated region
  $region14: #{seq2seq_forward.1} parent=0 // pred_check
    _
  $region15: #{seq2seq_forward.1} parent=0 // pred_check_branch
    %20 = sbr.rel (0) target = $region17
  $region16: #{seq2seq_forward.1} parent=0 // pred_region
    _
  $region17: #{seq2seq_forward.1} parent=0 // pred_fallthru
    _
  // Predicated region
  $region18: #{seq2seq_forward.1} parent=0 // pred_check
    _
  $region19: #{seq2seq_forward.1} parent=0 // pred_check_branch
    %22 = sbr.rel (0) target = $region21
  $region20: #{seq2seq_forward.1} parent=0 // pred_region
    _
  $region21: #{seq2seq_forward.1} parent=0 // pred_fallthru
    _
  // Predicated region
  $region22: #{seq2seq_forward.1} parent=0 // pred_check
    _
  $region23: #{seq2seq_forward.1} parent=0 // pred_check_branch
    %24 = sbr.rel (0) target = $region25
  $region24: #{seq2seq_forward.1} parent=0 // pred_region
    _
  $region25: #{seq2seq_forward.1} parent=0 // pred_fallthru
    _
  // Predicated region
  $region26: #{seq2seq_forward.1} parent=0 // pred_check
    _
  $region27: #{seq2seq_forward.1} parent=0 // pred_check_branch
    %26 = sbr.rel (0) target = $region29
  $region28: #{seq2seq_forward.1} parent=0 // pred_region
    _
  $region29: #{seq2seq_forward.1} parent=0 // pred_fallthru
    _
  // Predicated region
  $region30: #{seq2seq_forward.1} parent=0 // pred_check
    _
  $region31: #{seq2seq_forward.1} parent=0 // pred_check_branch
    %28 = sbr.rel (0) target = $region33
  $region32: #{seq2seq_forward.1} parent=0 // pred_region
    _
  $region33: #{seq2seq_forward.1} parent=0 // pred_fallthru
    _
  %v30 = vlaneseq
  %v31 = vand.u32 %v30, 127
  %vm32 = vcmp.ge.s32.totalorder %v31, 64
  %vm33 = vcmp.lt.s32.totalorder %v31, 96
  %vm34 = vmand %vm32, %vm33
  %v35 = vsel %vm34, 1.0, 0.5
  %v36 = vsel %vm34, 0.0, 0.5
  %v37 = vld [vmem:[%s2] sm:$0xf]
  %v38 = vld [vmem:[%s2 + $0x4] sm:$0xf]
  %v39 = vld [vmem:[%s2 + $0x8] sm:$0xf]
  %v40 = vld [vmem:[%s2 + $0xc] sm:$0xf]
  %v41 = vld [vmem:[%s5] sm:$0x1]
  %v42 = vld [vmem:[%s3] sm:$0xf]
  %v43 = vld [vmem:[%s3 + $0x4] sm:$0xf]
  %v44 = vld [vmem:[%s4 + $0x1] sm:$0x1]
  %v45 = vld [vmem:[%s6] sm:$0x1]
  %v46 = vld [vmem:[%s1 + $0x4] sm:$0xf]
  %v47 = vld [vmem:[%s1 + $0x8] sm:$0xf]
  %v48 = vld [vmem:[%s1 + $0xc] sm:$0xf]
  %v49 = vld [vmem:[%s1 + $0x10] sm:$0xf]
  %v50 = vld [vmem:[%s1] sm:$0xf]
  %v51 = vld [vmem:[%s0] sm:$0xf]
  %v52 = vld [vmem:[%s0 + $0x4] sm:$0xf]
  %v53 = vld [vmem:[%s0 + $0x8] sm:$0xf]
  %v54 = vld [vmem:[%s0 + $0xc] sm:$0xf]
  %v55 = vld [vmem:[%s0 + $0x10] sm:$0xf]
  %v56 = vld [vmem:[%s0 + $0x14] sm:$0xf]
  %v57 = vld [vmem:[%s0 + $0x18] sm:$0xf]
  %v58 = vld [vmem:[%s0 + $0x1c] sm:$0xf]
  %v59 = vld [vmem:[%s0 + $0x20] sm:$0xf]
  %v60 = vld [vmem:[%s0 + $0x24] sm:$0xf]
  %v61 = vld [vmem:[%s0 + $0x28] sm:$0xf]
  %v62 = vld [vmem:[%s0 + $0x2c] sm:$0xf]
  %v63 = vld [vmem:[%s4] sm:$0x1]
  %v64 = vlaneseq
  %v65 = vshrl.u32 %v64, 7
  %v66 = vsub.s32 0, %v65
  %v67 = vrot.slane %v63, %v66
  %v80 = vunpack.c.l.b16 %v51
  %v81 = vunpack.c.l.b16 %v52
  %v82 = vunpack.c.l.b16 %v53
  %v83 = vunpack.c.l.b16 %v54
  %v84 = vunpack.c.l.b16 %v55
  %v85 = vunpack.c.l.b16 %v56
  %v86 = vunpack.c.l.b16 %v57
  %v87 = vunpack.c.l.b16 %v58
  %v88 = vunpack.c.l.b16 %v59
  %v89 = vunpack.c.l.b16 %v60
  %v90 = vunpack.c.l.b16 %v61
  %v91 = vunpack.c.l.b16 %v62
  %v92 = vpack.c.b16 %v81, %v80
  %v93 = vpack.c.b16 %v83, %v82
  %v94 = vpack.c.b16 %v85, %v84
  %v95 = vpack.c.b16 %v87, %v86
  %v96 = vpack.c.b16 %v89, %v88
  %v97 = vpack.c.b16 %v91, %v90
  %vm98 = vcmask 64512
  %v100 = vsel %vm98, %v92, 0
  %v103 = vsel %vm98, %v93, 0
  %v106 = vsel %vm98, %v94, 0
  %v109 = vsel %vm98, %v95, 0
  %v112 = vsel %vm98, %v96, 0
  %v115 = vsel %vm98, %v97, 0
  %vm117 = vcmask 1043456
  %v119 = vsel %vm117, %v50, 0
  %121 = vmatprep.subr.bf16.mxu0 0
  %122 = vmatpush1.bf16.msra.mxu0 %v119
  %123 = vmatprep.subr.bf16.mxu0 0
  %124 = vmatpush1.bf16.msra.mxu0 0
  %125 = vmatprep.subr.bf16.mxu0 0
  %126 = vmatpush1.bf16.msra.mxu0 0
  %127 = vmatprep.subr.bf16.mxu0 0
  %128 = vmatpush1.bf16.msra.mxu0 0
  %129 = vmatprep.subr.bf16.mxu0 0
  %130 = vmatpush1.bf16.msra.mxu0 0
  %131 = vmatprep.subr.bf16.mxu0 0
  %132 = vmatpush1.bf16.msra.mxu0 0
  %133 = vmatprep.subr.bf16.mxu0 0
  %134 = vmatpush1.bf16.msra.mxu0 0
  %135 = vmatprep.subr.bf16.mxu0 0
  %136 = vmatpush1.bf16.msra.mxu0 0
  %137 = vmatprep.subr.bf16.mxu0 0
  %138 = vmatpush1.bf16.msra.mxu0 0
  %139 = vmatprep.subr.bf16.mxu0 0
  %140 = vmatpush1.bf16.msra.mxu0 0
  %141 = vmatprep.subr.bf16.mxu0 0
  %142 = vmatpush1.bf16.msra.mxu0 0
  %143 = vmatprep.subr.bf16.mxu0 0
  %144 = vmatpush1.bf16.msra.mxu0 0
  %145 = vmatprep.subr.bf16.mxu0 0
  %146 = vmatpush1.bf16.msra.mxu0 0
  %147 = vmatprep.subr.bf16.mxu0 0
  %148 = vmatpush1.bf16.msra.mxu0 0
  %149 = vmatprep.subr.bf16.mxu0 0
  %150 = vmatpush1.bf16.msra.mxu0 0
  %151 = vmatprep.subr.bf16.mxu0 0
  %152 = vmatpush1.bf16.msra.mxu0 0
  %153 = vmatprep.mubr.bf16.mxu0 0
  %154 = vmatmul.mubr.bf16.gmra.mrb[0].mxu0 %v100
  %v155 = vpop.f32.mrb[0].mxu0
  %v156 = vadd.f32 %v67, %v155
  %v157 = vpop.f32.mrb[0].mxu0
  %v158 = vpop.f32.mrb[0].mxu0
  %v159 = vadd.f32 %v67, %v158
  %v160 = vpop.f32.mrb[0].mxu0
  %161 = vmatprep.mubr.bf16.mxu0 0
  %162 = vmatmul.mubr.bf16.gmra.mrb[0].mxu0 %v103
  %v163 = vpop.f32.mrb[0].mxu0
  %v164 = vadd.f32 %v67, %v163
  %v165 = vpop.f32.mrb[0].mxu0
  %v166 = vpop.f32.mrb[0].mxu0
  %v167 = vadd.f32 %v67, %v166
  %v168 = vpop.f32.mrb[0].mxu0
  %169 = vmatprep.mubr.bf16.mxu0 0
  %170 = vmatmul.mubr.bf16.gmra.mrb[0].mxu0 %v106
  %v171 = vpop.f32.mrb[0].mxu0
  %v172 = vadd.f32 %v67, %v171
  %v173 = vpop.f32.mrb[0].mxu0
  %v174 = vpop.f32.mrb[0].mxu0
  %v175 = vadd.f32 %v67, %v174
  %v176 = vpop.f32.mrb[0].mxu0
  %177 = vmatprep.mubr.bf16.mxu0 0
  %178 = vmatmul.mubr.bf16.gmra.mrb[0].mxu0 %v109
  %v179 = vpop.f32.mrb[0].mxu0
  %v180 = vadd.f32 %v67, %v179
  %v181 = vpop.f32.mrb[0].mxu0
  %v182 = vpop.f32.mrb[0].mxu0
  %v183 = vadd.f32 %v67, %v182
  %v184 = vpop.f32.mrb[0].mxu0
  %185 = vmatprep.mubr.bf16.mxu0 0
  %186 = vmatmul.mubr.bf16.gmra.mrb[0].mxu0 %v112
  %v187 = vpop.f32.mrb[0].mxu0
  %v188 = vadd.f32 %v67, %v187
  %v189 = vpop.f32.mrb[0].mxu0
  %v190 = vpop.f32.mrb[0].mxu0
  %v191 = vadd.f32 %v67, %v190
  %v192 = vpop.f32.mrb[0].mxu0
  %193 = vmatprep.mubr.bf16.mxu0 0
  %194 = vmatmul.mubr.bf16.gmra.mrb[0].mxu0 %v115
  %v195 = vpop.f32.mrb[0].mxu0
  %v196 = vadd.f32 %v67, %v195
  %v197 = vpop.f32.mrb[0].mxu0
  %v198 = vpop.f32.mrb[0].mxu0
  %v199 = vadd.f32 %v67, %v198
  %v200 = vpop.f32.mrb[0].mxu0
  %201 = vdwg.mxu0
  %v206 = vunpack.c.l.b16 %v46
  %v207 = vunpack.c.l.b16 %v47
  %v208 = vunpack.c.l.b16 %v48
  %v209 = vunpack.c.l.b16 %v49
  %v210 = vpack.c.b16 %v207, %v206
  %v211 = vpack.c.b16 %v209, %v208
  %vm214 = vcmask 261120
  %v216 = vsel %vm214, 0, 0
  %218 = vmatprep.subr.bf16.mxu0 0
  %219 = vmatpush1.bf16.msra.mxu0 %v210
  %220 = vmatprep.subr.bf16.mxu0 0
  %221 = vmatpush1.bf16.msra.mxu0 %v211
  %222 = vmatprep.subr.bf16.mxu0 0
  %223 = vmatpush1.bf16.msra.mxu0 0
  %224 = vmatprep.subr.bf16.mxu0 0
  %225 = vmatpush1.bf16.msra.mxu0 0
  %226 = vmatprep.subr.bf16.mxu0 0
  %227 = vmatpush1.bf16.msra.mxu0 0
  %228 = vmatprep.subr.bf16.mxu0 0
  %229 = vmatpush1.bf16.msra.mxu0 0
  %230 = vmatprep.subr.bf16.mxu0 0
  %231 = vmatpush1.bf16.msra.mxu0 0
  %232 = vmatprep.subr.bf16.mxu0 0
  %233 = vmatpush1.bf16.msra.mxu0 0
  %234 = vmatprep.subr.bf16.mxu0 0
  %235 = vmatpush1.bf16.msra.mxu0 0
  %236 = vmatprep.subr.bf16.mxu0 0
  %237 = vmatpush1.bf16.msra.mxu0 0
  %238 = vmatprep.subr.bf16.mxu0 0
  %239 = vmatpush1.bf16.msra.mxu0 0
  %240 = vmatprep.subr.bf16.mxu0 0
  %241 = vmatpush1.bf16.msra.mxu0 0
  %242 = vmatprep.subr.bf16.mxu0 0
  %243 = vmatpush1.bf16.msra.mxu0 0
  %244 = vmatprep.subr.bf16.mxu0 0
  %245 = vmatpush1.bf16.msra.mxu0 0
  %246 = vmatprep.subr.bf16.mxu0 0
  %247 = vmatpush1.bf16.msra.mxu0 0
  %248 = vmatprep.subr.bf16.mxu0 0
  %249 = vmatpush1.bf16.msra.mxu0 0
  %250 = vmatprep.mubr.bf16.mxu0 0
  %251 = vmatmul.mubr.bf16.gmra.mrb[0].mxu0 %v216
  %v252 = vpop.f32.mrb[0].mxu0
  %v253 = vadd.f32 0.0, %v252
  %v254 = vpop.f32.mrb[0].mxu0
  %v255 = vpop.f32.mrb[0].mxu0
  %v256 = vpop.f32.mrb[0].mxu0
  %257 = vdwg.mxu0
  %v258 = vadd.f32 %v156, %v253
  %v259 = vmul.f32 %v258, %v35
  %v260 = vtanh.pop %v259
  %v261 = vmul.f32 %v260, %v35
  %v262 = vadd.f32 %v261, %v36
  %v263 = vmul.f32 %v262, 0.0
  %265 = vrot.lane.b32.xlu0 %v262, 64
  %v266 = vpop.permute.xlu0 %265
  %v268 = vmul.f32 %v262, %v266
  %270 = vrot.lane.b32.xlu0 %v268, 32
  %v271 = vpop.permute.xlu0 %270
  %v273 = vadd.f32 %v263, %v271
  %v274 = vtanh.pop %v273
  %276 = vrot.lane.b32.xlu0 %v274, 64
  %v277 = vpop.permute.xlu0 %276
  %v279 = vmul.f32 %v262, %v277
  %v280 = vpack.c.bf16 %v279, %v279
  %v282 = vlaneseq
  %v283 = vshrl.u32 %v282, 7
  %v284 = vsub.s32 0, %v283
  %v285 = vrot.slane %v41, %v284
  %288 = vrot.lane.b32.xlu0 %v280, 32
  %v289 = vpop.permute.xlu0 %288
  %v294 = vunpack.c.l.b16 %v37
  %v295 = vunpack.c.l.b16 %v38
  %v296 = vunpack.c.l.b16 %v39
  %v297 = vunpack.c.l.b16 %v40
  %v298 = vpack.c.b16 %v295, %v294
  %v299 = vpack.c.b16 %v297, %v296
  %v303 = vsel %vm214, %v289, 0
  %305 = vmatprep.subr.bf16.mxu0 0
  %306 = vmatpush1.bf16.msra.mxu0 %v298
  %307 = vmatprep.subr.bf16.mxu0 0
  %308 = vmatpush1.bf16.msra.mxu0 %v299
  %309 = vmatprep.subr.bf16.mxu0 0
  %310 = vmatpush1.bf16.msra.mxu0 0
  %311 = vmatprep.subr.bf16.mxu0 0
  %312 = vmatpush1.bf16.msra.mxu0 0
  %313 = vmatprep.subr.bf16.mxu0 0
  %314 = vmatpush1.bf16.msra.mxu0 0
  %315 = vmatprep.subr.bf16.mxu0 0
  %316 = vmatpush1.bf16.msra.mxu0 0
  %317 = vmatprep.subr.bf16.mxu0 0
  %318 = vmatpush1.bf16.msra.mxu0 0
  %319 = vmatprep.subr.bf16.mxu0 0
  %320 = vmatpush1.bf16.msra.mxu0 0
  %321 = vmatprep.subr.bf16.mxu0 0
  %322 = vmatpush1.bf16.msra.mxu0 0
  %323 = vmatprep.subr.bf16.mxu0 0
  %324 = vmatpush1.bf16.msra.mxu0 0
  %325 = vmatprep.subr.bf16.mxu0 0
  %326 = vmatpush1.bf16.msra.mxu0 0
  %327 = vmatprep.subr.bf16.mxu0 0
  %328 = vmatpush1.bf16.msra.mxu0 0
  %329 = vmatprep.subr.bf16.mxu0 0
  %330 = vmatpush1.bf16.msra.mxu0 0
  %331 = vmatprep.subr.bf16.mxu0 0
  %332 = vmatpush1.bf16.msra.mxu0 0
  %333 = vmatprep.subr.bf16.mxu0 0
  %334 = vmatpush1.bf16.msra.mxu0 0
  %335 = vmatprep.subr.bf16.mxu0 0
  %336 = vmatpush1.bf16.msra.mxu0 0
  %337 = vmatprep.mubr.bf16.mxu0 0
  %338 = vmatmul.mubr.bf16.gmra.mrb[0].mxu0 %v303
  %v339 = vpop.f32.mrb[0].mxu0
  %v340 = vadd.f32 %v285, %v339
  %v341 = vpop.f32.mrb[0].mxu0
  %v342 = vpop.f32.mrb[0].mxu0
  %v343 = vpop.f32.mrb[0].mxu0
  %344 = vdwg.mxu0
  %v345 = vmin.f32 %v340, 0.0
  %v346 = vmul.f32 %v345, 1.442695
  %v347 = vpow.pop %v346
  %v348 = vsub.f32 %v347, 1.0
  %v349 = vmul.f32 %v348, 1.6732632
  %vm350 = vcmp.gt.f32.partialorder %v340, 0.0
  %v351 = vsel %vm350, %v340, %v349
  %v352 = vmul.f32 %v351, 1.050701
  %v353 = vpack.c.bf16 %v352, %v352
  %v354 = vlaneseq
  %v355 = vshrl.u32 %v354, 7
  %v356 = vsub.s32 0, %v355
  %v357 = vrot.slane %v44, %v356
  %v360 = vunpack.c.l.b16 %v42
  %v361 = vunpack.c.l.b16 %v43
  %v362 = vpack.c.b16 %v361, %v360
  %vm364 = vcmask 130048
  %v366 = vsel %vm364, %v353, 0
  %368 = vmatprep.subr.bf16.mxu0 0
  %369 = vmatpush1.bf16.msra.mxu0 %v362
  %370 = vmatprep.subr.bf16.mxu0 0
  %371 = vmatpush1.bf16.msra.mxu0 0
  %372 = vmatprep.subr.bf16.mxu0 0
  %373 = vmatpush1.bf16.msra.mxu0 0
  %374 = vmatprep.subr.bf16.mxu0 0
  %375 = vmatpush1.bf16.msra.mxu0 0
  %376 = vmatprep.subr.bf16.mxu0 0
  %377 = vmatpush1.bf16.msra.mxu0 0
  %378 = vmatprep.subr.bf16.mxu0 0
  %379 = vmatpush1.bf16.msra.mxu0 0
  %380 = vmatprep.subr.bf16.mxu0 0
  %381 = vmatpush1.bf16.msra.mxu0 0
  %382 = vmatprep.subr.bf16.mxu0 0
  %383 = vmatpush1.bf16.msra.mxu0 0
  %384 = vmatprep.subr.bf16.mxu0 0
  %385 = vmatpush1.bf16.msra.mxu0 0
  %386 = vmatprep.subr.bf16.mxu0 0
  %387 = vmatpush1.bf16.msra.mxu0 0
  %388 = vmatprep.subr.bf16.mxu0 0
  %389 = vmatpush1.bf16.msra.mxu0 0
  %390 = vmatprep.subr.bf16.mxu0 0
  %391 = vmatpush1.bf16.msra.mxu0 0
  %392 = vmatprep.subr.bf16.mxu0 0
  %393 = vmatpush1.bf16.msra.mxu0 0
  %394 = vmatprep.subr.bf16.mxu0 0
  %395 = vmatpush1.bf16.msra.mxu0 0
  %396 = vmatprep.subr.bf16.mxu0 0
  %397 = vmatpush1.bf16.msra.mxu0 0
  %398 = vmatprep.subr.bf16.mxu0 0
  %399 = vmatpush1.bf16.msra.mxu0 0
  %400 = vmatprep.mubr.bf16.mxu0 0
  %401 = vmatmul.mubr.bf16.gmra.mrb[0].mxu0 %v366
  %v402 = vpop.f32.mrb[0].mxu0
  %v403 = vadd.f32 %v357, %v402
  %v404 = vpop.f32.mrb[0].mxu0
  %v405 = vpop.f32.mrb[0].mxu0
  %v406 = vpop.f32.mrb[0].mxu0
  %407 = vdwg.mxu0
  %408 = vmatprep.subr.bf16.mxu0 0
  %409 = vmatpush1.bf16.msra.mxu0 %v210
  %410 = vmatprep.subr.bf16.mxu0 0
  %411 = vmatpush1.bf16.msra.mxu0 %v211
  %412 = vmatprep.subr.bf16.mxu0 0
  %413 = vmatpush1.bf16.msra.mxu0 0
  %414 = vmatprep.subr.bf16.mxu0 0
  %415 = vmatpush1.bf16.msra.mxu0 0
  %416 = vmatprep.subr.bf16.mxu0 0
  %417 = vmatpush1.bf16.msra.mxu0 0
  %418 = vmatprep.subr.bf16.mxu0 0
  %419 = vmatpush1.bf16.msra.mxu0 0
  %420 = vmatprep.subr.bf16.mxu0 0
  %421 = vmatpush1.bf16.msra.mxu0 0
  %422 = vmatprep.subr.bf16.mxu0 0
  %423 = vmatpush1.bf16.msra.mxu0 0
  %424 = vmatprep.subr.bf16.mxu0 0
  %425 = vmatpush1.bf16.msra.mxu0 0
  %426 = vmatprep.subr.bf16.mxu0 0
  %427 = vmatpush1.bf16.msra.mxu0 0
  %428 = vmatprep.subr.bf16.mxu0 0
  %429 = vmatpush1.bf16.msra.mxu0 0
  %430 = vmatprep.subr.bf16.mxu0 0
  %431 = vmatpush1.bf16.msra.mxu0 0
  %432 = vmatprep.subr.bf16.mxu0 0
  %433 = vmatpush1.bf16.msra.mxu0 0
  %434 = vmatprep.subr.bf16.mxu0 0
  %435 = vmatpush1.bf16.msra.mxu0 0
  %436 = vmatprep.subr.bf16.mxu0 0
  %437 = vmatpush1.bf16.msra.mxu0 0
  %438 = vmatprep.subr.bf16.mxu0 0
  %439 = vmatpush1.bf16.msra.mxu0 0
  %440 = vmatprep.mubr.bf16.mxu0 0
  %441 = vmatmul.mubr.bf16.gmra.mrb[0].mxu0 %v303
  %v442 = vpop.f32.mrb[0].mxu0
  %v443 = vadd.f32 0.0, %v442
  %v444 = vpop.f32.mrb[0].mxu0
  %v445 = vpop.f32.mrb[0].mxu0
  %v446 = vpop.f32.mrb[0].mxu0
  %447 = vdwg.mxu0
  %v448 = vadd.f32 %v159, %v443
  %v449 = vmul.f32 %v448, %v35
  %v450 = vtanh.pop %v449
  %v451 = vmul.f32 %v450, %v35
  %v452 = vadd.f32 %v451, %v36
  %v453 = vmul.f32 %v452, %v273
  %455 = vrot.lane.b32.xlu0 %v452, 64
  %v456 = vpop.permute.xlu0 %455
  %v458 = vmul.f32 %v452, %v456
  %460 = vrot.lane.b32.xlu0 %v458, 32
  %v461 = vpop.permute.xlu0 %460
  %v463 = vadd.f32 %v453, %v461
  %v464 = vtanh.pop %v463
  %466 = vrot.lane.b32.xlu0 %v464, 64
  %v467 = vpop.permute.xlu0 %466
  %v469 = vmul.f32 %v452, %v467
  %v470 = vpack.c.bf16 %v469, %v469
  %472 = vrot.lane.b32.xlu0 %v470, 32
  %v473 = vpop.permute.xlu0 %472
  %v475 = vsel %vm214, %v473, 0
  %477 = vmatprep.subr.bf16.mxu0 0
  %478 = vmatpush1.bf16.msra.mxu0 %v298
  %479 = vmatprep.subr.bf16.mxu0 0
  %480 = vmatpush1.bf16.msra.mxu0 %v299
  %481 = vmatprep.subr.bf16.mxu0 0
  %482 = vmatpush1.bf16.msra.mxu0 0
  %483 = vmatprep.subr.bf16.mxu0 0
  %484 = vmatpush1.bf16.msra.mxu0 0
  %485 = vmatprep.subr.bf16.mxu0 0
  %486 = vmatpush1.bf16.msra.mxu0 0
  %487 = vmatprep.subr.bf16.mxu0 0
  %488 = vmatpush1.bf16.msra.mxu0 0
  %489 = vmatprep.subr.bf16.mxu0 0
  %490 = vmatpush1.bf16.msra.mxu0 0
  %491 = vmatprep.subr.bf16.mxu0 0
  %492 = vmatpush1.bf16.msra.mxu0 0
  %493 = vmatprep.subr.bf16.mxu0 0
  %494 = vmatpush1.bf16.msra.mxu0 0
  %495 = vmatprep.subr.bf16.mxu0 0
  %496 = vmatpush1.bf16.msra.mxu0 0
  %497 = vmatprep.subr.bf16.mxu0 0
  %498 = vmatpush1.bf16.msra.mxu0 0
  %499 = vmatprep.subr.bf16.mxu0 0
  %500 = vmatpush1.bf16.msra.mxu0 0
  %501 = vmatprep.subr.bf16.mxu0 0
  %502 = vmatpush1.bf16.msra.mxu0 0
  %503 = vmatprep.subr.bf16.mxu0 0
  %504 = vmatpush1.bf16.msra.mxu0 0
  %505 = vmatprep.subr.bf16.mxu0 0
  %506 = vmatpush1.bf16.msra.mxu0 0
  %507 = vmatprep.subr.bf16.mxu0 0
  %508 = vmatpush1.bf16.msra.mxu0 0
  %509 = vmatprep.mubr.bf16.mxu0 0
  %510 = vmatmul.mubr.bf16.gmra.mrb[0].mxu0 %v475
  %v511 = vpop.f32.mrb[0].mxu0
  %v512 = vadd.f32 %v285, %v511
  %v513 = vpop.f32.mrb[0].mxu0
  %v514 = vpop.f32.mrb[0].mxu0
  %v515 = vpop.f32.mrb[0].mxu0
  %516 = vdwg.mxu0
  %v517 = vmin.f32 %v512, 0.0
  %v518 = vmul.f32 %v517, 1.442695
  %v519 = vpow.pop %v518
  %v520 = vsub.f32 %v519, 1.0
  %v521 = vmul.f32 %v520, 1.6732632
  %vm522 = vcmp.gt.f32.partialorder %v512, 0.0
  %v523 = vsel %vm522, %v512, %v521
  %v524 = vmul.f32 %v523, 1.050701
  %v525 = vpack.c.bf16 %v524, %v524
  %v527 = vsel %vm364, %v525, 0
  %529 = vmatprep.subr.bf16.mxu0 0
  %530 = vmatpush1.bf16.msra.mxu0 %v362
  %531 = vmatprep.subr.bf16.mxu0 0
  %532 = vmatpush1.bf16.msra.mxu0 0
  %533 = vmatprep.subr.bf16.mxu0 0
  %534 = vmatpush1.bf16.msra.mxu0 0
  %535 = vmatprep.subr.bf16.mxu0 0
  %536 = vmatpush1.bf16.msra.mxu0 0
  %537 = vmatprep.subr.bf16.mxu0 0
  %538 = vmatpush1.bf16.msra.mxu0 0
  %539 = vmatprep.subr.bf16.mxu0 0
  %540 = vmatpush1.bf16.msra.mxu0 0
  %541 = vmatprep.subr.bf16.mxu0 0
  %542 = vmatpush1.bf16.msra.mxu0 0
  %543 = vmatprep.subr.bf16.mxu0 0
  %544 = vmatpush1.bf16.msra.mxu0 0
  %545 = vmatprep.subr.bf16.mxu0 0
  %546 = vmatpush1.bf16.msra.mxu0 0
  %547 = vmatprep.subr.bf16.mxu0 0
  %548 = vmatpush1.bf16.msra.mxu0 0
  %549 = vmatprep.subr.bf16.mxu0 0
  %550 = vmatpush1.bf16.msra.mxu0 0
  %551 = vmatprep.subr.bf16.mxu0 0
  %552 = vmatpush1.bf16.msra.mxu0 0
  %553 = vmatprep.subr.bf16.mxu0 0
  %554 = vmatpush1.bf16.msra.mxu0 0
  %555 = vmatprep.subr.bf16.mxu0 0
  %556 = vmatpush1.bf16.msra.mxu0 0
  %557 = vmatprep.subr.bf16.mxu0 0
  %558 = vmatpush1.bf16.msra.mxu0 0
  %559 = vmatprep.subr.bf16.mxu0 0
  %560 = vmatpush1.bf16.msra.mxu0 0
  %561 = vmatprep.mubr.bf16.mxu0 0
  %562 = vmatmul.mubr.bf16.gmra.mrb[0].mxu0 %v527
  %v563 = vpop.f32.mrb[0].mxu0
  %v564 = vadd.f32 %v357, %v563
  %v565 = vpop.f32.mrb[0].mxu0
  %v566 = vpop.f32.mrb[0].mxu0
  %v567 = vpop.f32.mrb[0].mxu0
  %568 = vdwg.mxu0
  %569 = vmatprep.subr.bf16.mxu0 0
  %570 = vmatpush1.bf16.msra.mxu0 %v210
  %571 = vmatprep.subr.bf16.mxu0 0
  %572 = vmatpush1.bf16.msra.mxu0 %v211
  %573 = vmatprep.subr.bf16.mxu0 0
  %574 = vmatpush1.bf16.msra.mxu0 0
  %575 = vmatprep.subr.bf16.mxu0 0
  %576 = vmatpush1.bf16.msra.mxu0 0
  %577 = vmatprep.subr.bf16.mxu0 0
  %578 = vmatpush1.bf16.msra.mxu0 0
  %579 = vmatprep.subr.bf16.mxu0 0
  %580 = vmatpush1.bf16.msra.mxu0 0
  %581 = vmatprep.subr.bf16.mxu0 0
  %582 = vmatpush1.bf16.msra.mxu0 0
  %583 = vmatprep.subr.bf16.mxu0 0
  %584 = vmatpush1.bf16.msra.mxu0 0
  %585 = vmatprep.subr.bf16.mxu0 0
  %586 = vmatpush1.bf16.msra.mxu0 0
  %587 = vmatprep.subr.bf16.mxu0 0
  %588 = vmatpush1.bf16.msra.mxu0 0
  %589 = vmatprep.subr.bf16.mxu0 0
  %590 = vmatpush1.bf16.msra.mxu0 0
  %591 = vmatprep.subr.bf16.mxu0 0
  %592 = vmatpush1.bf16.msra.mxu0 0
  %593 = vmatprep.subr.bf16.mxu0 0
  %594 = vmatpush1.bf16.msra.mxu0 0
  %595 = vmatprep.subr.bf16.mxu0 0
  %596 = vmatpush1.bf16.msra.mxu0 0
  %597 = vmatprep.subr.bf16.mxu0 0
  %598 = vmatpush1.bf16.msra.mxu0 0
  %599 = vmatprep.subr.bf16.mxu0 0
  %600 = vmatpush1.bf16.msra.mxu0 0
  %601 = vmatprep.mubr.bf16.mxu0 0
  %602 = vmatmul.mubr.bf16.gmra.mrb[0].mxu0 %v475
  %v603 = vpop.f32.mrb[0].mxu0
  %v604 = vadd.f32 0.0, %v603
  %v605 = vpop.f32.mrb[0].mxu0
  %v606 = vpop.f32.mrb[0].mxu0
  %v607 = vpop.f32.mrb[0].mxu0
  %608 = vdwg.mxu0
  %v609 = vadd.f32 %v164, %v604
  %v610 = vmul.f32 %v609, %v35
  %v611 = vtanh.pop %v610
  %v612 = vmul.f32 %v611, %v35
  %v613 = vadd.f32 %v612, %v36
  %v614 = vmul.f32 %v613, %v463
  %616 = vrot.lane.b32.xlu0 %v613, 64
  %v617 = vpop.permute.xlu0 %616
  %v619 = vmul.f32 %v613, %v617
  %621 = vrot.lane.b32.xlu0 %v619, 32
  %v622 = vpop.permute.xlu0 %621
  %v624 = vadd.f32 %v614, %v622
  %v625 = vtanh.pop %v624
  %627 = vrot.lane.b32.xlu0 %v625, 64
  %v628 = vpop.permute.xlu0 %627
  %v630 = vmul.f32 %v613, %v628
  %v631 = vpack.c.bf16 %v630, %v630
  %633 = vrot.lane.b32.xlu0 %v631, 32
  %v634 = vpop.permute.xlu0 %633
  %v636 = vsel %vm214, %v634, 0
  %638 = vmatprep.subr.bf16.mxu0 0
  %639 = vmatpush1.bf16.msra.mxu0 %v298
  %640 = vmatprep.subr.bf16.mxu0 0
  %641 = vmatpush1.bf16.msra.mxu0 %v299
  %642 = vmatprep.subr.bf16.mxu0 0
  %643 = vmatpush1.bf16.msra.mxu0 0
  %644 = vmatprep.subr.bf16.mxu0 0
  %645 = vmatpush1.bf16.msra.mxu0 0
  %646 = vmatprep.subr.bf16.mxu0 0
  %647 = vmatpush1.bf16.msra.mxu0 0
  %648 = vmatprep.subr.bf16.mxu0 0
  %649 = vmatpush1.bf16.msra.mxu0 0
  %650 = vmatprep.subr.bf16.mxu0 0
  %651 = vmatpush1.bf16.msra.mxu0 0
  %652 = vmatprep.subr.bf16.mxu0 0
  %653 = vmatpush1.bf16.msra.mxu0 0
  %654 = vmatprep.subr.bf16.mxu0 0
  %655 = vmatpush1.bf16.msra.mxu0 0
  %656 = vmatprep.subr.bf16.mxu0 0
  %657 = vmatpush1.bf16.msra.mxu0 0
  %658 = vmatprep.subr.bf16.mxu0 0
  %659 = vmatpush1.bf16.msra.mxu0 0
  %660 = vmatprep.subr.bf16.mxu0 0
  %661 = vmatpush1.bf16.msra.mxu0 0
  %662 = vmatprep.subr.bf16.mxu0 0
  %663 = vmatpush1.bf16.msra.mxu0 0
  %664 = vmatprep.subr.bf16.mxu0 0
  %665 = vmatpush1.bf16.msra.mxu0 0
  %666 = vmatprep.subr.bf16.mxu0 0
  %667 = vmatpush1.bf16.msra.mxu0 0
  %668 = vmatprep.subr.bf16.mxu0 0
  %669 = vmatpush1.bf16.msra.mxu0 0
  %670 = vmatprep.mubr.bf16.mxu0 0
  %671 = vmatmul.mubr.bf16.gmra.mrb[0].mxu0 %v636
  %v672 = vpop.f32.mrb[0].mxu0
  %v673 = vadd.f32 %v285, %v672
  %v674 = vpop.f32.mrb[0].mxu0
  %v675 = vpop.f32.mrb[0].mxu0
  %v676 = vpop.f32.mrb[0].mxu0
  %677 = vdwg.mxu0
  %v678 = vmin.f32 %v673, 0.0
  %v679 = vmul.f32 %v678, 1.442695
  %v680 = vpow.pop %v679
  %v681 = vsub.f32 %v680, 1.0
  %v682 = vmul.f32 %v681, 1.6732632
  %vm683 = vcmp.gt.f32.partialorder %v673, 0.0
  %v684 = vsel %vm683, %v673, %v682
  %v685 = vmul.f32 %v684, 1.050701
  %v686 = vpack.c.bf16 %v685, %v685
  %v688 = vsel %vm364, %v686, 0
  %690 = vmatprep.subr.bf16.mxu0 0
  %691 = vmatpush1.bf16.msra.mxu0 %v362
  %692 = vmatprep.subr.bf16.mxu0 0
  %693 = vmatpush1.bf16.msra.mxu0 0
  %694 = vmatprep.subr.bf16.mxu0 0
  %695 = vmatpush1.bf16.msra.mxu0 0
  %696 = vmatprep.subr.bf16.mxu0 0
  %697 = vmatpush1.bf16.msra.mxu0 0
  %698 = vmatprep.subr.bf16.mxu0 0
  %699 = vmatpush1.bf16.msra.mxu0 0
  %700 = vmatprep.subr.bf16.mxu0 0
  %701 = vmatpush1.bf16.msra.mxu0 0
  %702 = vmatprep.subr.bf16.mxu0 0
  %703 = vmatpush1.bf16.msra.mxu0 0
  %704 = vmatprep.subr.bf16.mxu0 0
  %705 = vmatpush1.bf16.msra.mxu0 0
  %706 = vmatprep.subr.bf16.mxu0 0
  %707 = vmatpush1.bf16.msra.mxu0 0
  %708 = vmatprep.subr.bf16.mxu0 0
  %709 = vmatpush1.bf16.msra.mxu0 0
  %710 = vmatprep.subr.bf16.mxu0 0
  %711 = vmatpush1.bf16.msra.mxu0 0
  %712 = vmatprep.subr.bf16.mxu0 0
  %713 = vmatpush1.bf16.msra.mxu0 0
  %714 = vmatprep.subr.bf16.mxu0 0
  %715 = vmatpush1.bf16.msra.mxu0 0
  %716 = vmatprep.subr.bf16.mxu0 0
  %717 = vmatpush1.bf16.msra.mxu0 0
  %718 = vmatprep.subr.bf16.mxu0 0
  %719 = vmatpush1.bf16.msra.mxu0 0
  %720 = vmatprep.subr.bf16.mxu0 0
  %721 = vmatpush1.bf16.msra.mxu0 0
  %722 = vmatprep.mubr.bf16.mxu0 0
  %723 = vmatmul.mubr.bf16.gmra.mrb[0].mxu0 %v688
  %v724 = vpop.f32.mrb[0].mxu0
  %v725 = vadd.f32 %v357, %v724
  %v726 = vpop.f32.mrb[0].mxu0
  %v727 = vpop.f32.mrb[0].mxu0
  %v728 = vpop.f32.mrb[0].mxu0
  %729 = vdwg.mxu0
  %730 = vmatprep.subr.bf16.mxu0 0
  %731 = vmatpush1.bf16.msra.mxu0 %v210
  %732 = vmatprep.subr.bf16.mxu0 0
  %733 = vmatpush1.bf16.msra.mxu0 %v211
  %734 = vmatprep.subr.bf16.mxu0 0
  %735 = vmatpush1.bf16.msra.mxu0 0
  %736 = vmatprep.subr.bf16.mxu0 0
  %737 = vmatpush1.bf16.msra.mxu0 0
  %738 = vmatprep.subr.bf16.mxu0 0
  %739 = vmatpush1.bf16.msra.mxu0 0
  %740 = vmatprep.subr.bf16.mxu0 0
  %741 = vmatpush1.bf16.msra.mxu0 0
  %742 = vmatprep.subr.bf16.mxu0 0
  %743 = vmatpush1.bf16.msra.mxu0 0
  %744 = vmatprep.subr.bf16.mxu0 0
  %745 = vmatpush1.bf16.msra.mxu0 0
  %746 = vmatprep.subr.bf16.mxu0 0
  %747 = vmatpush1.bf16.msra.mxu0 0
  %748 = vmatprep.subr.bf16.mxu0 0
  %749 = vmatpush1.bf16.msra.mxu0 0
  %750 = vmatprep.subr.bf16.mxu0 0
  %751 = vmatpush1.bf16.msra.mxu0 0
  %752 = vmatprep.subr.bf16.mxu0 0
  %753 = vmatpush1.bf16.msra.mxu0 0
  %754 = vmatprep.subr.bf16.mxu0 0
  %755 = vmatpush1.bf16.msra.mxu0 0
  %756 = vmatprep.subr.bf16.mxu0 0
  %757 = vmatpush1.bf16.msra.mxu0 0
  %758 = vmatprep.subr.bf16.mxu0 0
  %759 = vmatpush1.bf16.msra.mxu0 0
  %760 = vmatprep.subr.bf16.mxu0 0
  %761 = vmatpush1.bf16.msra.mxu0 0
  %762 = vmatprep.mubr.bf16.mxu0 0
  %763 = vmatmul.mubr.bf16.gmra.mrb[0].mxu0 %v636
  %v764 = vpop.f32.mrb[0].mxu0
  %v765 = vadd.f32 0.0, %v764
  %v766 = vpop.f32.mrb[0].mxu0
  %v767 = vpop.f32.mrb[0].mxu0
  %v768 = vpop.f32.mrb[0].mxu0
  %769 = vdwg.mxu0
  %v770 = vadd.f32 %v167, %v765
  %v771 = vmul.f32 %v770, %v35
  %v772 = vtanh.pop %v771
  %v773 = vmul.f32 %v772, %v35
  %v774 = vadd.f32 %v773, %v36
  %v775 = vmul.f32 %v774, %v624
  %777 = vrot.lane.b32.xlu0 %v774, 64
  %v778 = vpop.permute.xlu0 %777
  %v780 = vmul.f32 %v774, %v778
  %782 = vrot.lane.b32.xlu0 %v780, 32
  %v783 = vpop.permute.xlu0 %782
  %v785 = vadd.f32 %v775, %v783
  %v786 = vtanh.pop %v785
  %788 = vrot.lane.b32.xlu0 %v786, 64
  %v789 = vpop.permute.xlu0 %788
  %v791 = vmul.f32 %v774, %v789
  %v792 = vpack.c.bf16 %v791, %v791
  %794 = vrot.lane.b32.xlu0 %v792, 32
  %v795 = vpop.permute.xlu0 %794
  %v797 = vsel %vm214, %v795, 0
  %799 = vmatprep.subr.bf16.mxu0 0
  %800 = vmatpush1.bf16.msra.mxu0 %v298
  %801 = vmatprep.subr.bf16.mxu0 0
  %802 = vmatpush1.bf16.msra.mxu0 %v299
  %803 = vmatprep.subr.bf16.mxu0 0
  %804 = vmatpush1.bf16.msra.mxu0 0
  %805 = vmatprep.subr.bf16.mxu0 0
  %806 = vmatpush1.bf16.msra.mxu0 0
  %807 = vmatprep.subr.bf16.mxu0 0
  %808 = vmatpush1.bf16.msra.mxu0 0
  %809 = vmatprep.subr.bf16.mxu0 0
  %810 = vmatpush1.bf16.msra.mxu0 0
  %811 = vmatprep.subr.bf16.mxu0 0
  %812 = vmatpush1.bf16.msra.mxu0 0
  %813 = vmatprep.subr.bf16.mxu0 0
  %814 = vmatpush1.bf16.msra.mxu0 0
  %815 = vmatprep.subr.bf16.mxu0 0
  %816 = vmatpush1.bf16.msra.mxu0 0
  %817 = vmatprep.subr.bf16.mxu0 0
  %818 = vmatpush1.bf16.msra.mxu0 0
  %819 = vmatprep.subr.bf16.mxu0 0
  %820 = vmatpush1.bf16.msra.mxu0 0
  %821 = vmatprep.subr.bf16.mxu0 0
  %822 = vmatpush1.bf16.msra.mxu0 0
  %823 = vmatprep.subr.bf16.mxu0 0
  %824 = vmatpush1.bf16.msra.mxu0 0
  %825 = vmatprep.subr.bf16.mxu0 0
  %826 = vmatpush1.bf16.msra.mxu0 0
  %827 = vmatprep.subr.bf16.mxu0 0
  %828 = vmatpush1.bf16.msra.mxu0 0
  %829 = vmatprep.subr.bf16.mxu0 0
  %830 = vmatpush1.bf16.msra.mxu0 0
  %831 = vmatprep.mubr.bf16.mxu0 0
  %832 = vmatmul.mubr.bf16.gmra.mrb[0].mxu0 %v797
  %v833 = vpop.f32.mrb[0].mxu0
  %v834 = vadd.f32 %v285, %v833
  %v835 = vpop.f32.mrb[0].mxu0
  %v836 = vpop.f32.mrb[0].mxu0
  %v837 = vpop.f32.mrb[0].mxu0
  %838 = vdwg.mxu0
  %v839 = vmin.f32 %v834, 0.0
  %v840 = vmul.f32 %v839, 1.442695
  %v841 = vpow.pop %v840
  %v842 = vsub.f32 %v841, 1.0
  %v843 = vmul.f32 %v842, 1.6732632
  %vm844 = vcmp.gt.f32.partialorder %v834, 0.0
  %v845 = vsel %vm844, %v834, %v843
  %v846 = vmul.f32 %v845, 1.050701
  %v847 = vpack.c.bf16 %v846, %v846
  %v849 = vsel %vm364, %v847, 0
  %851 = vmatprep.subr.bf16.mxu0 0
  %852 = vmatpush1.bf16.msra.mxu0 %v362
  %853 = vmatprep.subr.bf16.mxu0 0
  %854 = vmatpush1.bf16.msra.mxu0 0
  %855 = vmatprep.subr.bf16.mxu0 0
  %856 = vmatpush1.bf16.msra.mxu0 0
  %857 = vmatprep.subr.bf16.mxu0 0
  %858 = vmatpush1.bf16.msra.mxu0 0
  %859 = vmatprep.subr.bf16.mxu0 0
  %860 = vmatpush1.bf16.msra.mxu0 0
  %861 = vmatprep.subr.bf16.mxu0 0
  %862 = vmatpush1.bf16.msra.mxu0 0
  %863 = vmatprep.subr.bf16.mxu0 0
  %864 = vmatpush1.bf16.msra.mxu0 0
  %865 = vmatprep.subr.bf16.mxu0 0
  %866 = vmatpush1.bf16.msra.mxu0 0
  %867 = vmatprep.subr.bf16.mxu0 0
  %868 = vmatpush1.bf16.msra.mxu0 0
  %869 = vmatprep.subr.bf16.mxu0 0
  %870 = vmatpush1.bf16.msra.mxu0 0
  %871 = vmatprep.subr.bf16.mxu0 0
  %872 = vmatpush1.bf16.msra.mxu0 0
  %873 = vmatprep.subr.bf16.mxu0 0
  %874 = vmatpush1.bf16.msra.mxu0 0
  %875 = vmatprep.subr.bf16.mxu0 0
  %876 = vmatpush1.bf16.msra.mxu0 0
  %877 = vmatprep.subr.bf16.mxu0 0
  %878 = vmatpush1.bf16.msra.mxu0 0
  %879 = vmatprep.subr.bf16.mxu0 0
  %880 = vmatpush1.bf16.msra.mxu0 0
  %881 = vmatprep.subr.bf16.mxu0 0
  %882 = vmatpush1.bf16.msra.mxu0 0
  %883 = vmatprep.mubr.bf16.mxu0 0
  %884 = vmatmul.mubr.bf16.gmra.mrb[0].mxu0 %v849
  %v885 = vpop.f32.mrb[0].mxu0
  %v886 = vadd.f32 %v357, %v885
  %v887 = vpop.f32.mrb[0].mxu0
  %v888 = vpop.f32.mrb[0].mxu0
  %v889 = vpop.f32.mrb[0].mxu0
  %890 = vdwg.mxu0
  %891 = vmatprep.subr.bf16.mxu0 0
  %892 = vmatpush1.bf16.msra.mxu0 %v210
  %893 = vmatprep.subr.bf16.mxu0 0
  %894 = vmatpush1.bf16.msra.mxu0 %v211
  %895 = vmatprep.subr.bf16.mxu0 0
  %896 = vmatpush1.bf16.msra.mxu0 0
  %897 = vmatprep.subr.bf16.mxu0 0
  %898 = vmatpush1.bf16.msra.mxu0 0
  %899 = vmatprep.subr.bf16.mxu0 0
  %900 = vmatpush1.bf16.msra.mxu0 0
  %901 = vmatprep.subr.bf16.mxu0 0
  %902 = vmatpush1.bf16.msra.mxu0 0
  %903 = vmatprep.subr.bf16.mxu0 0
  %904 = vmatpush1.bf16.msra.mxu0 0
  %905 = vmatprep.subr.bf16.mxu0 0
  %906 = vmatpush1.bf16.msra.mxu0 0
  %907 = vmatprep.subr.bf16.mxu0 0
  %908 = vmatpush1.bf16.msra.mxu0 0
  %909 = vmatprep.subr.bf16.mxu0 0
  %910 = vmatpush1.bf16.msra.mxu0 0
  %911 = vmatprep.subr.bf16.mxu0 0
  %912 = vmatpush1.bf16.msra.mxu0 0
  %913 = vmatprep.subr.bf16.mxu0 0
  %914 = vmatpush1.bf16.msra.mxu0 0
  %915 = vmatprep.subr.bf16.mxu0 0
  %916 = vmatpush1.bf16.msra.mxu0 0
  %917 = vmatprep.subr.bf16.mxu0 0
  %918 = vmatpush1.bf16.msra.mxu0 0
  %919 = vmatprep.subr.bf16.mxu0 0
  %920 = vmatpush1.bf16.msra.mxu0 0
  %921 = vmatprep.subr.bf16.mxu0 0
  %922 = vmatpush1.bf16.msra.mxu0 0
  %923 = vmatprep.mubr.bf16.mxu0 0
  %924 = vmatmul.mubr.bf16.gmra.mrb[0].mxu0 %v797
  %v925 = vpop.f32.mrb[0].mxu0
  %v926 = vadd.f32 0.0, %v925
  %v927 = vpop.f32.mrb[0].mxu0
  %v928 = vpop.f32.mrb[0].mxu0
  %v929 = vpop.f32.mrb[0].mxu0
  %930 = vdwg.mxu0
  %v931 = vadd.f32 %v172, %v926
  %v932 = vmul.f32 %v931, %v35
  %v933 = vtanh.pop %v932
  %v934 = vmul.f32 %v933, %v35
  %v935 = vadd.f32 %v934, %v36
  %v936 = vmul.f32 %v935, %v785
  %938 = vrot.lane.b32.xlu0 %v935, 64
  %v939 = vpop.permute.xlu0 %938
  %v941 = vmul.f32 %v935, %v939
  %943 = vrot.lane.b32.xlu0 %v941, 32
  %v944 = vpop.permute.xlu0 %943
  %v946 = vadd.f32 %v936, %v944
  %v947 = vtanh.pop %v946
  %949 = vrot.lane.b32.xlu0 %v947, 64
  %v950 = vpop.permute.xlu0 %949
  %v952 = vmul.f32 %v935, %v950
  %v953 = vpack.c.bf16 %v952, %v952
  %955 = vrot.lane.b32.xlu0 %v953, 32
  %v956 = vpop.permute.xlu0 %955
  %v958 = vsel %vm214, %v956, 0
  %960 = vmatprep.subr.bf16.mxu0 0
  %961 = vmatpush1.bf16.msra.mxu0 %v298
  %962 = vmatprep.subr.bf16.mxu0 0
  %963 = vmatpush1.bf16.msra.mxu0 %v299
  %964 = vmatprep.subr.bf16.mxu0 0
  %965 = vmatpush1.bf16.msra.mxu0 0
  %966 = vmatprep.subr.bf16.mxu0 0
  %967 = vmatpush1.bf16.msra.mxu0 0
  %968 = vmatprep.subr.bf16.mxu0 0
  %969 = vmatpush1.bf16.msra.mxu0 0
  %970 = vmatprep.subr.bf16.mxu0 0
  %971 = vmatpush1.bf16.msra.mxu0 0
  %972 = vmatprep.subr.bf16.mxu0 0
  %973 = vmatpush1.bf16.msra.mxu0 0
  %974 = vmatprep.subr.bf16.mxu0 0
  %975 = vmatpush1.bf16.msra.mxu0 0
  %976 = vmatprep.subr.bf16.mxu0 0
  %977 = vmatpush1.bf16.msra.mxu0 0
  %978 = vmatprep.subr.bf16.mxu0 0
  %979 = vmatpush1.bf16.msra.mxu0 0
  %980 = vmatprep.subr.bf16.mxu0 0
  %981 = vmatpush1.bf16.msra.mxu0 0
  %982 = vmatprep.subr.bf16.mxu0 0
  %983 = vmatpush1.bf16.msra.mxu0 0
  %984 = vmatprep.subr.bf16.mxu0 0
  %985 = vmatpush1.bf16.msra.mxu0 0
  %986 = vmatprep.subr.bf16.mxu0 0
  %987 = vmatpush1.bf16.msra.mxu0 0
  %988 = vmatprep.subr.bf16.mxu0 0
  %989 = vmatpush1.bf16.msra.mxu0 0
  %990 = vmatprep.subr.bf16.mxu0 0
  %991 = vmatpush1.bf16.msra.mxu0 0
  %992 = vmatprep.mubr.bf16.mxu0 0
  %993 = vmatmul.mubr.bf16.gmra.mrb[0].mxu0 %v958
  %v994 = vpop.f32.mrb[0].mxu0
  %v995 = vadd.f32 %v285, %v994
  %v996 = vpop.f32.mrb[0].mxu0
  %v997 = vpop.f32.mrb[0].mxu0
  %v998 = vpop.f32.mrb[0].mxu0
  %999 = vdwg.mxu0
  %v1000 = vmin.f32 %v995, 0.0
  %v1001 = vmul.f32 %v1000, 1.442695
  %v1002 = vpow.pop %v1001
  %v1003 = vsub.f32 %v1002, 1.0
  %v1004 = vmul.f32 %v1003, 1.6732632
  %vm1005 = vcmp.gt.f32.partialorder %v995, 0.0
  %v1006 = vsel %vm1005, %v995, %v1004
  %v1007 = vmul.f32 %v1006, 1.050701
  %v1008 = vpack.c.bf16 %v1007, %v1007
  %v1010 = vsel %vm364, %v1008, 0
  %1012 = vmatprep.subr.bf16.mxu0 0
  %1013 = vmatpush1.bf16.msra.mxu0 %v362
  %1014 = vmatprep.subr.bf16.mxu0 0
  %1015 = vmatpush1.bf16.msra.mxu0 0
  %1016 = vmatprep.subr.bf16.mxu0 0
  %1017 = vmatpush1.bf16.msra.mxu0 0
  %1018 = vmatprep.subr.bf16.mxu0 0
  %1019 = vmatpush1.bf16.msra.mxu0 0
  %1020 = vmatprep.subr.bf16.mxu0 0
  %1021 = vmatpush1.bf16.msra.mxu0 0
  %1022 = vmatprep.subr.bf16.mxu0 0
  %1023 = vmatpush1.bf16.msra.mxu0 0
  %1024 = vmatprep.subr.bf16.mxu0 0
  %1025 = vmatpush1.bf16.msra.mxu0 0
  %1026 = vmatprep.subr.bf16.mxu0 0
  %1027 = vmatpush1.bf16.msra.mxu0 0
  %1028 = vmatprep.subr.bf16.mxu0 0
  %1029 = vmatpush1.bf16.msra.mxu0 0
  %1030 = vmatprep.subr.bf16.mxu0 0
  %1031 = vmatpush1.bf16.msra.mxu0 0
  %1032 = vmatprep.subr.bf16.mxu0 0
  %1033 = vmatpush1.bf16.msra.mxu0 0
  %1034 = vmatprep.subr.bf16.mxu0 0
  %1035 = vmatpush1.bf16.msra.mxu0 0
  %1036 = vmatprep.subr.bf16.mxu0 0
  %1037 = vmatpush1.bf16.msra.mxu0 0
  %1038 = vmatprep.subr.bf16.mxu0 0
  %1039 = vmatpush1.bf16.msra.mxu0 0
  %1040 = vmatprep.subr.bf16.mxu0 0
  %1041 = vmatpush1.bf16.msra.mxu0 0
  %1042 = vmatprep.subr.bf16.mxu0 0
  %1043 = vmatpush1.bf16.msra.mxu0 0
  %1044 = vmatprep.mubr.bf16.mxu0 0
  %1045 = vmatmul.mubr.bf16.gmra.mrb[0].mxu0 %v1010
  %v1046 = vpop.f32.mrb[0].mxu0
  %v1047 = vadd.f32 %v357, %v1046
  %v1048 = vpop.f32.mrb[0].mxu0
  %v1049 = vpop.f32.mrb[0].mxu0
  %v1050 = vpop.f32.mrb[0].mxu0
  %1051 = vdwg.mxu0
  %1052 = vmatprep.subr.bf16.mxu0 0
  %1053 = vmatpush1.bf16.msra.mxu0 %v210
  %1054 = vmatprep.subr.bf16.mxu0 0
  %1055 = vmatpush1.bf16.msra.mxu0 %v211
  %1056 = vmatprep.subr.bf16.mxu0 0
  %1057 = vmatpush1.bf16.msra.mxu0 0
  %1058 = vmatprep.subr.bf16.mxu0 0
  %1059 = vmatpush1.bf16.msra.mxu0 0
  %1060 = vmatprep.subr.bf16.mxu0 0
  %1061 = vmatpush1.bf16.msra.mxu0 0
  %1062 = vmatprep.subr.bf16.mxu0 0
  %1063 = vmatpush1.bf16.msra.mxu0 0
  %1064 = vmatprep.subr.bf16.mxu0 0
  %1065 = vmatpush1.bf16.msra.mxu0 0
  %1066 = vmatprep.subr.bf16.mxu0 0
  %1067 = vmatpush1.bf16.msra.mxu0 0
  %1068 = vmatprep.subr.bf16.mxu0 0
  %1069 = vmatpush1.bf16.msra.mxu0 0
  %1070 = vmatprep.subr.bf16.mxu0 0
  %1071 = vmatpush1.bf16.msra.mxu0 0
  %1072 = vmatprep.subr.bf16.mxu0 0
  %1073 = vmatpush1.bf16.msra.mxu0 0
  %1074 = vmatprep.subr.bf16.mxu0 0
  %1075 = vmatpush1.bf16.msra.mxu0 0
  %1076 = vmatprep.subr.bf16.mxu0 0
  %1077 = vmatpush1.bf16.msra.mxu0 0
  %1078 = vmatprep.subr.bf16.mxu0 0
  %1079 = vmatpush1.bf16.msra.mxu0 0
  %1080 = vmatprep.subr.bf16.mxu0 0
  %1081 = vmatpush1.bf16.msra.mxu0 0
  %1082 = vmatprep.subr.bf16.mxu0 0
  %1083 = vmatpush1.bf16.msra.mxu0 0
  %1084 = vmatprep.mubr.bf16.mxu0 0
  %1085 = vmatmul.mubr.bf16.gmra.mrb[0].mxu0 %v958
  %v1086 = vpop.f32.mrb[0].mxu0
  %v1087 = vadd.f32 0.0, %v1086
  %v1088 = vpop.f32.mrb[0].mxu0
  %v1089 = vpop.f32.mrb[0].mxu0
  %v1090 = vpop.f32.mrb[0].mxu0
  %1091 = vdwg.mxu0
  %v1092 = vadd.f32 %v175, %v1087
  %v1093 = vmul.f32 %v1092, %v35
  %v1094 = vtanh.pop %v1093
  %v1095 = vmul.f32 %v1094, %v35
  %v1096 = vadd.f32 %v1095, %v36
  %v1097 = vmul.f32 %v1096, %v946
  %1099 = vrot.lane.b32.xlu0 %v1096, 64
  %v1100 = vpop.permute.xlu0 %1099
  %v1102 = vmul.f32 %v1096, %v1100
  %1104 = vrot.lane.b32.xlu0 %v1102, 32
  %v1105 = vpop.permute.xlu0 %1104
  %v1107 = vadd.f32 %v1097, %v1105
  %v1108 = vtanh.pop %v1107
  %1110 = vrot.lane.b32.xlu0 %v1108, 64
  %v1111 = vpop.permute.xlu0 %1110
  %v1113 = vmul.f32 %v1096, %v1111
  %v1114 = vpack.c.bf16 %v1113, %v1113
  %1116 = vrot.lane.b32.xlu0 %v1114, 32
  %v1117 = vpop.permute.xlu0 %1116
  %v1119 = vsel %vm214, %v1117, 0
  %1121 = vmatprep.subr.bf16.mxu0 0
  %1122 = vmatpush1.bf16.msra.mxu0 %v298
  %1123 = vmatprep.subr.bf16.mxu0 0
  %1124 = vmatpush1.bf16.msra.mxu0 %v299
  %1125 = vmatprep.subr.bf16.mxu0 0
  %1126 = vmatpush1.bf16.msra.mxu0 0
  %1127 = vmatprep.subr.bf16.mxu0 0
  %1128 = vmatpush1.bf16.msra.mxu0 0
  %1129 = vmatprep.subr.bf16.mxu0 0
  %1130 = vmatpush1.bf16.msra.mxu0 0
  %1131 = vmatprep.subr.bf16.mxu0 0
  %1132 = vmatpush1.bf16.msra.mxu0 0
  %1133 = vmatprep.subr.bf16.mxu0 0
  %1134 = vmatpush1.bf16.msra.mxu0 0
  %1135 = vmatprep.subr.bf16.mxu0 0
  %1136 = vmatpush1.bf16.msra.mxu0 0
  %1137 = vmatprep.subr.bf16.mxu0 0
  %1138 = vmatpush1.bf16.msra.mxu0 0
  %1139 = vmatprep.subr.bf16.mxu0 0
  %1140 = vmatpush1.bf16.msra.mxu0 0
  %1141 = vmatprep.subr.bf16.mxu0 0
  %1142 = vmatpush1.bf16.msra.mxu0 0
  %1143 = vmatprep.subr.bf16.mxu0 0
  %1144 = vmatpush1.bf16.msra.mxu0 0
  %1145 = vmatprep.subr.bf16.mxu0 0
  %1146 = vmatpush1.bf16.msra.mxu0 0
  %1147 = vmatprep.subr.bf16.mxu0 0
  %1148 = vmatpush1.bf16.msra.mxu0 0
  %1149 = vmatprep.subr.bf16.mxu0 0
  %1150 = vmatpush1.bf16.msra.mxu0 0
  %1151 = vmatprep.subr.bf16.mxu0 0
  %1152 = vmatpush1.bf16.msra.mxu0 0
  %1153 = vmatprep.mubr.bf16.mxu0 0
  %1154 = vmatmul.mubr.bf16.gmra.mrb[0].mxu0 %v1119
  %v1155 = vpop.f32.mrb[0].mxu0
  %v1156 = vadd.f32 %v285, %v1155
  %v1157 = vpop.f32.mrb[0].mxu0
  %v1158 = vpop.f32.mrb[0].mxu0
  %v1159 = vpop.f32.mrb[0].mxu0
  %1160 = vdwg.mxu0
  %v1161 = vmin.f32 %v1156, 0.0
  %v1162 = vmul.f32 %v1161, 1.442695
  %v1163 = vpow.pop %v1162
  %v1164 = vsub.f32 %v1163, 1.0
  %v1165 = vmul.f32 %v1164, 1.6732632
  %vm1166 = vcmp.gt.f32.partialorder %v1156, 0.0
  %v1167 = vsel %vm1166, %v1156, %v1165
  %v1168 = vmul.f32 %v1167, 1.050701
  %v1169 = vpack.c.bf16 %v1168, %v1168
  %v1171 = vsel %vm364, %v1169, 0
  %1173 = vmatprep.subr.bf16.mxu0 0
  %1174 = vmatpush1.bf16.msra.mxu0 %v362
  %1175 = vmatprep.subr.bf16.mxu0 0
  %1176 = vmatpush1.bf16.msra.mxu0 0
  %1177 = vmatprep.subr.bf16.mxu0 0
  %1178 = vmatpush1.bf16.msra.mxu0 0
  %1179 = vmatprep.subr.bf16.mxu0 0
  %1180 = vmatpush1.bf16.msra.mxu0 0
  %1181 = vmatprep.subr.bf16.mxu0 0
  %1182 = vmatpush1.bf16.msra.mxu0 0
  %1183 = vmatprep.subr.bf16.mxu0 0
  %1184 = vmatpush1.bf16.msra.mxu0 0
  %1185 = vmatprep.subr.bf16.mxu0 0
  %1186 = vmatpush1.bf16.msra.mxu0 0
  %1187 = vmatprep.subr.bf16.mxu0 0
  %1188 = vmatpush1.bf16.msra.mxu0 0
  %1189 = vmatprep.subr.bf16.mxu0 0
  %1190 = vmatpush1.bf16.msra.mxu0 0
  %1191 = vmatprep.subr.bf16.mxu0 0
  %1192 = vmatpush1.bf16.msra.mxu0 0
  %1193 = vmatprep.subr.bf16.mxu0 0
  %1194 = vmatpush1.bf16.msra.mxu0 0
  %1195 = vmatprep.subr.bf16.mxu0 0
  %1196 = vmatpush1.bf16.msra.mxu0 0
  %1197 = vmatprep.subr.bf16.mxu0 0
  %1198 = vmatpush1.bf16.msra.mxu0 0
  %1199 = vmatprep.subr.bf16.mxu0 0
  %1200 = vmatpush1.bf16.msra.mxu0 0
  %1201 = vmatprep.subr.bf16.mxu0 0
  %1202 = vmatpush1.bf16.msra.mxu0 0
  %1203 = vmatprep.subr.bf16.mxu0 0
  %1204 = vmatpush1.bf16.msra.mxu0 0
  %1205 = vmatprep.mubr.bf16.mxu0 0
  %1206 = vmatmul.mubr.bf16.gmra.mrb[0].mxu0 %v1171
  %v1207 = vpop.f32.mrb[0].mxu0
  %v1208 = vadd.f32 %v357, %v1207
  %v1209 = vpop.f32.mrb[0].mxu0
  %v1210 = vpop.f32.mrb[0].mxu0
  %v1211 = vpop.f32.mrb[0].mxu0
  %1212 = vdwg.mxu0
  %1213 = vmatprep.subr.bf16.mxu0 0
  %1214 = vmatpush1.bf16.msra.mxu0 %v210
  %1215 = vmatprep.subr.bf16.mxu0 0
  %1216 = vmatpush1.bf16.msra.mxu0 %v211
  %1217 = vmatprep.subr.bf16.mxu0 0
  %1218 = vmatpush1.bf16.msra.mxu0 0
  %1219 = vmatprep.subr.bf16.mxu0 0
  %1220 = vmatpush1.bf16.msra.mxu0 0
  %1221 = vmatprep.subr.bf16.mxu0 0
  %1222 = vmatpush1.bf16.msra.mxu0 0
  %1223 = vmatprep.subr.bf16.mxu0 0
  %1224 = vmatpush1.bf16.msra.mxu0 0
  %1225 = vmatprep.subr.bf16.mxu0 0
  %1226 = vmatpush1.bf16.msra.mxu0 0
  %1227 = vmatprep.subr.bf16.mxu0 0
  %1228 = vmatpush1.bf16.msra.mxu0 0
  %1229 = vmatprep.subr.bf16.mxu0 0
  %1230 = vmatpush1.bf16.msra.mxu0 0
  %1231 = vmatprep.subr.bf16.mxu0 0
  %1232 = vmatpush1.bf16.msra.mxu0 0
  %1233 = vmatprep.subr.bf16.mxu0 0
  %1234 = vmatpush1.bf16.msra.mxu0 0
  %1235 = vmatprep.subr.bf16.mxu0 0
  %1236 = vmatpush1.bf16.msra.mxu0 0
  %1237 = vmatprep.subr.bf16.mxu0 0
  %1238 = vmatpush1.bf16.msra.mxu0 0
  %1239 = vmatprep.subr.bf16.mxu0 0
  %1240 = vmatpush1.bf16.msra.mxu0 0
  %1241 = vmatprep.subr.bf16.mxu0 0
  %1242 = vmatpush1.bf16.msra.mxu0 0
  %1243 = vmatprep.subr.bf16.mxu0 0
  %1244 = vmatpush1.bf16.msra.mxu0 0
  %1245 = vmatprep.mubr.bf16.mxu0 0
  %1246 = vmatmul.mubr.bf16.gmra.mrb[0].mxu0 %v1119
  %v1247 = vpop.f32.mrb[0].mxu0
  %v1248 = vadd.f32 0.0, %v1247
  %v1249 = vpop.f32.mrb[0].mxu0
  %v1250 = vpop.f32.mrb[0].mxu0
  %v1251 = vpop.f32.mrb[0].mxu0
  %1252 = vdwg.mxu0
  %v1253 = vadd.f32 %v180, %v1248
  %v1254 = vmul.f32 %v1253, %v35
  %v1255 = vtanh.pop %v1254
  %v1256 = vmul.f32 %v1255, %v35
  %v1257 = vadd.f32 %v1256, %v36
  %v1258 = vmul.f32 %v1257, %v1107
  %1260 = vrot.lane.b32.xlu0 %v1257, 64
  %v1261 = vpop.permute.xlu0 %1260
  %v1263 = vmul.f32 %v1257, %v1261
  %1265 = vrot.lane.b32.xlu0 %v1263, 32
  %v1266 = vpop.permute.xlu0 %1265
  %v1268 = vadd.f32 %v1258, %v1266
  %v1269 = vtanh.pop %v1268
  %1271 = vrot.lane.b32.xlu0 %v1269, 64
  %v1272 = vpop.permute.xlu0 %1271
  %v1274 = vmul.f32 %v1257, %v1272
  %v1275 = vpack.c.bf16 %v1274, %v1274
  %1277 = vrot.lane.b32.xlu0 %v1275, 32
  %v1278 = vpop.permute.xlu0 %1277
  %v1280 = vsel %vm214, %v1278, 0
  %1282 = vmatprep.subr.bf16.mxu0 0
  %1283 = vmatpush1.bf16.msra.mxu0 %v298
  %1284 = vmatprep.subr.bf16.mxu0 0
  %1285 = vmatpush1.bf16.msra.mxu0 %v299
  %1286 = vmatprep.subr.bf16.mxu0 0
  %1287 = vmatpush1.bf16.msra.mxu0 0
  %1288 = vmatprep.subr.bf16.mxu0 0
  %1289 = vmatpush1.bf16.msra.mxu0 0
  %1290 = vmatprep.subr.bf16.mxu0 0
  %1291 = vmatpush1.bf16.msra.mxu0 0
  %1292 = vmatprep.subr.bf16.mxu0 0
  %1293 = vmatpush1.bf16.msra.mxu0 0
  %1294 = vmatprep.subr.bf16.mxu0 0
  %1295 = vmatpush1.bf16.msra.mxu0 0
  %1296 = vmatprep.subr.bf16.mxu0 0
  %1297 = vmatpush1.bf16.msra.mxu0 0
  %1298 = vmatprep.subr.bf16.mxu0 0
  %1299 = vmatpush1.bf16.msra.mxu0 0
  %1300 = vmatprep.subr.bf16.mxu0 0
  %1301 = vmatpush1.bf16.msra.mxu0 0
  %1302 = vmatprep.subr.bf16.mxu0 0
  %1303 = vmatpush1.bf16.msra.mxu0 0
  %1304 = vmatprep.subr.bf16.mxu0 0
  %1305 = vmatpush1.bf16.msra.mxu0 0
  %1306 = vmatprep.subr.bf16.mxu0 0
  %1307 = vmatpush1.bf16.msra.mxu0 0
  %1308 = vmatprep.subr.bf16.mxu0 0
  %1309 = vmatpush1.bf16.msra.mxu0 0
  %1310 = vmatprep.subr.bf16.mxu0 0
  %1311 = vmatpush1.bf16.msra.mxu0 0
  %1312 = vmatprep.subr.bf16.mxu0 0
  %1313 = vmatpush1.bf16.msra.mxu0 0
  %1314 = vmatprep.mubr.bf16.mxu0 0
  %1315 = vmatmul.mubr.bf16.gmra.mrb[0].mxu0 %v1280
  %v1316 = vpop.f32.mrb[0].mxu0
  %v1317 = vadd.f32 %v285, %v1316
  %v1318 = vpop.f32.mrb[0].mxu0
  %v1319 = vpop.f32.mrb[0].mxu0
  %v1320 = vpop.f32.mrb[0].mxu0
  %1321 = vdwg.mxu0
  %v1322 = vmin.f32 %v1317, 0.0
  %v1323 = vmul.f32 %v1322, 1.442695
  %v1324 = vpow.pop %v1323
  %v1325 = vsub.f32 %v1324, 1.0
  %v1326 = vmul.f32 %v1325, 1.6732632
  %vm1327 = vcmp.gt.f32.partialorder %v1317, 0.0
  %v1328 = vsel %vm1327, %v1317, %v1326
  %v1329 = vmul.f32 %v1328, 1.050701
  %v1330 = vpack.c.bf16 %v1329, %v1329
  %v1332 = vsel %vm364, %v1330, 0
  %1334 = vmatprep.subr.bf16.mxu0 0
  %1335 = vmatpush1.bf16.msra.mxu0 %v362
  %1336 = vmatprep.subr.bf16.mxu0 0
  %1337 = vmatpush1.bf16.msra.mxu0 0
  %1338 = vmatprep.subr.bf16.mxu0 0
  %1339 = vmatpush1.bf16.msra.mxu0 0
  %1340 = vmatprep.subr.bf16.mxu0 0
  %1341 = vmatpush1.bf16.msra.mxu0 0
  %1342 = vmatprep.subr.bf16.mxu0 0
  %1343 = vmatpush1.bf16.msra.mxu0 0
  %1344 = vmatprep.subr.bf16.mxu0 0
  %1345 = vmatpush1.bf16.msra.mxu0 0
  %1346 = vmatprep.subr.bf16.mxu0 0
  %1347 = vmatpush1.bf16.msra.mxu0 0
  %1348 = vmatprep.subr.bf16.mxu0 0
  %1349 = vmatpush1.bf16.msra.mxu0 0
  %1350 = vmatprep.subr.bf16.mxu0 0
  %1351 = vmatpush1.bf16.msra.mxu0 0
  %1352 = vmatprep.subr.bf16.mxu0 0
  %1353 = vmatpush1.bf16.msra.mxu0 0
  %1354 = vmatprep.subr.bf16.mxu0 0
  %1355 = vmatpush1.bf16.msra.mxu0 0
  %1356 = vmatprep.subr.bf16.mxu0 0
  %1357 = vmatpush1.bf16.msra.mxu0 0
  %1358 = vmatprep.subr.bf16.mxu0 0
  %1359 = vmatpush1.bf16.msra.mxu0 0
  %1360 = vmatprep.subr.bf16.mxu0 0
  %1361 = vmatpush1.bf16.msra.mxu0 0
  %1362 = vmatprep.subr.bf16.mxu0 0
  %1363 = vmatpush1.bf16.msra.mxu0 0
  %1364 = vmatprep.subr.bf16.mxu0 0
  %1365 = vmatpush1.bf16.msra.mxu0 0
  %1366 = vmatprep.mubr.bf16.mxu0 0
  %1367 = vmatmul.mubr.bf16.gmra.mrb[0].mxu0 %v1332
  %v1368 = vpop.f32.mrb[0].mxu0
  %v1369 = vadd.f32 %v357, %v1368
  %v1370 = vpop.f32.mrb[0].mxu0
  %v1371 = vpop.f32.mrb[0].mxu0
  %v1372 = vpop.f32.mrb[0].mxu0
  %1373 = vdwg.mxu0
  %1374 = vmatprep.subr.bf16.mxu0 0
  %1375 = vmatpush1.bf16.msra.mxu0 %v210
  %1376 = vmatprep.subr.bf16.mxu0 0
  %1377 = vmatpush1.bf16.msra.mxu0 %v211
  %1378 = vmatprep.subr.bf16.mxu0 0
  %1379 = vmatpush1.bf16.msra.mxu0 0
  %1380 = vmatprep.subr.bf16.mxu0 0
  %1381 = vmatpush1.bf16.msra.mxu0 0
  %1382 = vmatprep.subr.bf16.mxu0 0
  %1383 = vmatpush1.bf16.msra.mxu0 0
  %1384 = vmatprep.subr.bf16.mxu0 0
  %1385 = vmatpush1.bf16.msra.mxu0 0
  %1386 = vmatprep.subr.bf16.mxu0 0
  %1387 = vmatpush1.bf16.msra.mxu0 0
  %1388 = vmatprep.subr.bf16.mxu0 0
  %1389 = vmatpush1.bf16.msra.mxu0 0
  %1390 = vmatprep.subr.bf16.mxu0 0
  %1391 = vmatpush1.bf16.msra.mxu0 0
  %1392 = vmatprep.subr.bf16.mxu0 0
  %1393 = vmatpush1.bf16.msra.mxu0 0
  %1394 = vmatprep.subr.bf16.mxu0 0
  %1395 = vmatpush1.bf16.msra.mxu0 0
  %1396 = vmatprep.subr.bf16.mxu0 0
  %1397 = vmatpush1.bf16.msra.mxu0 0
  %1398 = vmatprep.subr.bf16.mxu0 0
  %1399 = vmatpush1.bf16.msra.mxu0 0
  %1400 = vmatprep.subr.bf16.mxu0 0
  %1401 = vmatpush1.bf16.msra.mxu0 0
  %1402 = vmatprep.subr.bf16.mxu0 0
  %1403 = vmatpush1.bf16.msra.mxu0 0
  %1404 = vmatprep.subr.bf16.mxu0 0
  %1405 = vmatpush1.bf16.msra.mxu0 0
  %1406 = vmatprep.mubr.bf16.mxu0 0
  %1407 = vmatmul.mubr.bf16.gmra.mrb[0].mxu0 %v1280
  %v1408 = vpop.f32.mrb[0].mxu0
  %v1409 = vadd.f32 0.0, %v1408
  %v1410 = vpop.f32.mrb[0].mxu0
  %v1411 = vpop.f32.mrb[0].mxu0
  %v1412 = vpop.f32.mrb[0].mxu0
  %1413 = vdwg.mxu0
  %v1414 = vadd.f32 %v183, %v1409
  %v1415 = vmul.f32 %v1414, %v35
  %v1416 = vtanh.pop %v1415
  %v1417 = vmul.f32 %v1416, %v35
  %v1418 = vadd.f32 %v1417, %v36
  %v1419 = vmul.f32 %v1418, %v1268
  %1421 = vrot.lane.b32.xlu0 %v1418, 64
  %v1422 = vpop.permute.xlu0 %1421
  %v1424 = vmul.f32 %v1418, %v1422
  %1426 = vrot.lane.b32.xlu0 %v1424, 32
  %v1427 = vpop.permute.xlu0 %1426
  %v1429 = vadd.f32 %v1419, %v1427
  %v1430 = vtanh.pop %v1429
  %1432 = vrot.lane.b32.xlu0 %v1430, 64
  %v1433 = vpop.permute.xlu0 %1432
  %v1435 = vmul.f32 %v1418, %v1433
  %v1436 = vpack.c.bf16 %v1435, %v1435
  %1438 = vrot.lane.b32.xlu0 %v1436, 32
  %v1439 = vpop.permute.xlu0 %1438
  %v1441 = vsel %vm214, %v1439, 0
  %1443 = vmatprep.subr.bf16.mxu0 0
  %1444 = vmatpush1.bf16.msra.mxu0 %v298
  %1445 = vmatprep.subr.bf16.mxu0 0
  %1446 = vmatpush1.bf16.msra.mxu0 %v299
  %1447 = vmatprep.subr.bf16.mxu0 0
  %1448 = vmatpush1.bf16.msra.mxu0 0
  %1449 = vmatprep.subr.bf16.mxu0 0
  %1450 = vmatpush1.bf16.msra.mxu0 0
  %1451 = vmatprep.subr.bf16.mxu0 0
  %1452 = vmatpush1.bf16.msra.mxu0 0
  %1453 = vmatprep.subr.bf16.mxu0 0
  %1454 = vmatpush1.bf16.msra.mxu0 0
  %1455 = vmatprep.subr.bf16.mxu0 0
  %1456 = vmatpush1.bf16.msra.mxu0 0
  %1457 = vmatprep.subr.bf16.mxu0 0
  %1458 = vmatpush1.bf16.msra.mxu0 0
  %1459 = vmatprep.subr.bf16.mxu0 0
  %1460 = vmatpush1.bf16.msra.mxu0 0
  %1461 = vmatprep.subr.bf16.mxu0 0
  %1462 = vmatpush1.bf16.msra.mxu0 0
  %1463 = vmatprep.subr.bf16.mxu0 0
  %1464 = vmatpush1.bf16.msra.mxu0 0
  %1465 = vmatprep.subr.bf16.mxu0 0
  %1466 = vmatpush1.bf16.msra.mxu0 0
  %1467 = vmatprep.subr.bf16.mxu0 0
  %1468 = vmatpush1.bf16.msra.mxu0 0
  %1469 = vmatprep.subr.bf16.mxu0 0
  %1470 = vmatpush1.bf16.msra.mxu0 0
  %1471 = vmatprep.subr.bf16.mxu0 0
  %1472 = vmatpush1.bf16.msra.mxu0 0
  %1473 = vmatprep.subr.bf16.mxu0 0
  %1474 = vmatpush1.bf16.msra.mxu0 0
  %1475 = vmatprep.mubr.bf16.mxu0 0
  %1476 = vmatmul.mubr.bf16.gmra.mrb[0].mxu0 %v1441
  %v1477 = vpop.f32.mrb[0].mxu0
  %v1478 = vadd.f32 %v285, %v1477
  %v1479 = vpop.f32.mrb[0].mxu0
  %v1480 = vpop.f32.mrb[0].mxu0
  %v1481 = vpop.f32.mrb[0].mxu0
  %1482 = vdwg.mxu0
  %v1483 = vmin.f32 %v1478, 0.0
  %v1484 = vmul.f32 %v1483, 1.442695
  %v1485 = vpow.pop %v1484
  %v1486 = vsub.f32 %v1485, 1.0
  %v1487 = vmul.f32 %v1486, 1.6732632
  %vm1488 = vcmp.gt.f32.partialorder %v1478, 0.0
  %v1489 = vsel %vm1488, %v1478, %v1487
  %v1490 = vmul.f32 %v1489, 1.050701
  %v1491 = vpack.c.bf16 %v1490, %v1490
  %v1493 = vsel %vm364, %v1491, 0
  %1495 = vmatprep.subr.bf16.mxu0 0
  %1496 = vmatpush1.bf16.msra.mxu0 %v362
  %1497 = vmatprep.subr.bf16.mxu0 0
  %1498 = vmatpush1.bf16.msra.mxu0 0
  %1499 = vmatprep.subr.bf16.mxu0 0
  %1500 = vmatpush1.bf16.msra.mxu0 0
  %1501 = vmatprep.subr.bf16.mxu0 0
  %1502 = vmatpush1.bf16.msra.mxu0 0
  %1503 = vmatprep.subr.bf16.mxu0 0
  %1504 = vmatpush1.bf16.msra.mxu0 0
  %1505 = vmatprep.subr.bf16.mxu0 0
  %1506 = vmatpush1.bf16.msra.mxu0 0
  %1507 = vmatprep.subr.bf16.mxu0 0
  %1508 = vmatpush1.bf16.msra.mxu0 0
  %1509 = vmatprep.subr.bf16.mxu0 0
  %1510 = vmatpush1.bf16.msra.mxu0 0
  %1511 = vmatprep.subr.bf16.mxu0 0
  %1512 = vmatpush1.bf16.msra.mxu0 0
  %1513 = vmatprep.subr.bf16.mxu0 0
  %1514 = vmatpush1.bf16.msra.mxu0 0
  %1515 = vmatprep.subr.bf16.mxu0 0
  %1516 = vmatpush1.bf16.msra.mxu0 0
  %1517 = vmatprep.subr.bf16.mxu0 0
  %1518 = vmatpush1.bf16.msra.mxu0 0
  %1519 = vmatprep.subr.bf16.mxu0 0
  %1520 = vmatpush1.bf16.msra.mxu0 0
  %1521 = vmatprep.subr.bf16.mxu0 0
  %1522 = vmatpush1.bf16.msra.mxu0 0
  %1523 = vmatprep.subr.bf16.mxu0 0
  %1524 = vmatpush1.bf16.msra.mxu0 0
  %1525 = vmatprep.subr.bf16.mxu0 0
  %1526 = vmatpush1.bf16.msra.mxu0 0
  %1527 = vmatprep.mubr.bf16.mxu0 0
  %1528 = vmatmul.mubr.bf16.gmra.mrb[0].mxu0 %v1493
  %v1529 = vpop.f32.mrb[0].mxu0
  %v1530 = vadd.f32 %v357, %v1529
  %v1531 = vpop.f32.mrb[0].mxu0
  %v1532 = vpop.f32.mrb[0].mxu0
  %v1533 = vpop.f32.mrb[0].mxu0
  %1534 = vdwg.mxu0
  %1535 = vmatprep.subr.bf16.mxu0 0
  %1536 = vmatpush1.bf16.msra.mxu0 %v210
  %1537 = vmatprep.subr.bf16.mxu0 0
  %1538 = vmatpush1.bf16.msra.mxu0 %v211
  %1539 = vmatprep.subr.bf16.mxu0 0
  %1540 = vmatpush1.bf16.msra.mxu0 0
  %1541 = vmatprep.subr.bf16.mxu0 0
  %1542 = vmatpush1.bf16.msra.mxu0 0
  %1543 = vmatprep.subr.bf16.mxu0 0
  %1544 = vmatpush1.bf16.msra.mxu0 0
  %1545 = vmatprep.subr.bf16.mxu0 0
  %1546 = vmatpush1.bf16.msra.mxu0 0
  %1547 = vmatprep.subr.bf16.mxu0 0
  %1548 = vmatpush1.bf16.msra.mxu0 0
  %1549 = vmatprep.subr.bf16.mxu0 0
  %1550 = vmatpush1.bf16.msra.mxu0 0
  %1551 = vmatprep.subr.bf16.mxu0 0
  %1552 = vmatpush1.bf16.msra.mxu0 0
  %1553 = vmatprep.subr.bf16.mxu0 0
  %1554 = vmatpush1.bf16.msra.mxu0 0
  %1555 = vmatprep.subr.bf16.mxu0 0
  %1556 = vmatpush1.bf16.msra.mxu0 0
  %1557 = vmatprep.subr.bf16.mxu0 0
  %1558 = vmatpush1.bf16.msra.mxu0 0
  %1559 = vmatprep.subr.bf16.mxu0 0
  %1560 = vmatpush1.bf16.msra.mxu0 0
  %1561 = vmatprep.subr.bf16.mxu0 0
  %1562 = vmatpush1.bf16.msra.mxu0 0
  %1563 = vmatprep.subr.bf16.mxu0 0
  %1564 = vmatpush1.bf16.msra.mxu0 0
  %1565 = vmatprep.subr.bf16.mxu0 0
  %1566 = vmatpush1.bf16.msra.mxu0 0
  %1567 = vmatprep.mubr.bf16.mxu0 0
  %1568 = vmatmul.mubr.bf16.gmra.mrb[0].mxu0 %v1441
  %v1569 = vpop.f32.mrb[0].mxu0
  %v1570 = vadd.f32 0.0, %v1569
  %v1571 = vpop.f32.mrb[0].mxu0
  %v1572 = vpop.f32.mrb[0].mxu0
  %v1573 = vpop.f32.mrb[0].mxu0
  %1574 = vdwg.mxu0
  %v1575 = vadd.f32 %v188, %v1570
  %v1576 = vmul.f32 %v1575, %v35
  %v1577 = vtanh.pop %v1576
  %v1578 = vmul.f32 %v1577, %v35
  %v1579 = vadd.f32 %v1578, %v36
  %v1580 = vmul.f32 %v1579, %v1429
  %1582 = vrot.lane.b32.xlu0 %v1579, 64
  %v1583 = vpop.permute.xlu0 %1582
  %v1585 = vmul.f32 %v1579, %v1583
  %1587 = vrot.lane.b32.xlu0 %v1585, 32
  %v1588 = vpop.permute.xlu0 %1587
  %v1590 = vadd.f32 %v1580, %v1588
  %v1591 = vtanh.pop %v1590
  %1593 = vrot.lane.b32.xlu0 %v1591, 64
  %v1594 = vpop.permute.xlu0 %1593
  %v1596 = vmul.f32 %v1579, %v1594
  %v1597 = vpack.c.bf16 %v1596, %v1596
  %1599 = vrot.lane.b32.xlu0 %v1597, 32
  %v1600 = vpop.permute.xlu0 %1599
  %v1602 = vsel %vm214, %v1600, 0
  %1604 = vmatprep.subr.bf16.mxu0 0
  %1605 = vmatpush1.bf16.msra.mxu0 %v298
  %1606 = vmatprep.subr.bf16.mxu0 0
  %1607 = vmatpush1.bf16.msra.mxu0 %v299
  %1608 = vmatprep.subr.bf16.mxu0 0
  %1609 = vmatpush1.bf16.msra.mxu0 0
  %1610 = vmatprep.subr.bf16.mxu0 0
  %1611 = vmatpush1.bf16.msra.mxu0 0
  %1612 = vmatprep.subr.bf16.mxu0 0
  %1613 = vmatpush1.bf16.msra.mxu0 0
  %1614 = vmatprep.subr.bf16.mxu0 0
  %1615 = vmatpush1.bf16.msra.mxu0 0
  %1616 = vmatprep.subr.bf16.mxu0 0
  %1617 = vmatpush1.bf16.msra.mxu0 0
  %1618 = vmatprep.subr.bf16.mxu0 0
  %1619 = vmatpush1.bf16.msra.mxu0 0
  %1620 = vmatprep.subr.bf16.mxu0 0
  %1621 = vmatpush1.bf16.msra.mxu0 0
  %1622 = vmatprep.subr.bf16.mxu0 0
  %1623 = vmatpush1.bf16.msra.mxu0 0
  %1624 = vmatprep.subr.bf16.mxu0 0
  %1625 = vmatpush1.bf16.msra.mxu0 0
  %1626 = vmatprep.subr.bf16.mxu0 0
  %1627 = vmatpush1.bf16.msra.mxu0 0
  %1628 = vmatprep.subr.bf16.mxu0 0
  %1629 = vmatpush1.bf16.msra.mxu0 0
  %1630 = vmatprep.subr.bf16.mxu0 0
  %1631 = vmatpush1.bf16.msra.mxu0 0
  %1632 = vmatprep.subr.bf16.mxu0 0
  %1633 = vmatpush1.bf16.msra.mxu0 0
  %1634 = vmatprep.subr.bf16.mxu0 0
  %1635 = vmatpush1.bf16.msra.mxu0 0
  %1636 = vmatprep.mubr.bf16.mxu0 0
  %1637 = vmatmul.mubr.bf16.gmra.mrb[0].mxu0 %v1602
  %v1638 = vpop.f32.mrb[0].mxu0
  %v1639 = vadd.f32 %v285, %v1638
  %v1640 = vpop.f32.mrb[0].mxu0
  %v1641 = vpop.f32.mrb[0].mxu0
  %v1642 = vpop.f32.mrb[0].mxu0
  %1643 = vdwg.mxu0
  %v1644 = vmin.f32 %v1639, 0.0
  %v1645 = vmul.f32 %v1644, 1.442695
  %v1646 = vpow.pop %v1645
  %v1647 = vsub.f32 %v1646, 1.0
  %v1648 = vmul.f32 %v1647, 1.6732632
  %vm1649 = vcmp.gt.f32.partialorder %v1639, 0.0
  %v1650 = vsel %vm1649, %v1639, %v1648
  %v1651 = vmul.f32 %v1650, 1.050701
  %v1652 = vpack.c.bf16 %v1651, %v1651
  %v1654 = vsel %vm364, %v1652, 0
  %1656 = vmatprep.subr.bf16.mxu0 0
  %1657 = vmatpush1.bf16.msra.mxu0 %v362
  %1658 = vmatprep.subr.bf16.mxu0 0
  %1659 = vmatpush1.bf16.msra.mxu0 0
  %1660 = vmatprep.subr.bf16.mxu0 0
  %1661 = vmatpush1.bf16.msra.mxu0 0
  %1662 = vmatprep.subr.bf16.mxu0 0
  %1663 = vmatpush1.bf16.msra.mxu0 0
  %1664 = vmatprep.subr.bf16.mxu0 0
  %1665 = vmatpush1.bf16.msra.mxu0 0
  %1666 = vmatprep.subr.bf16.mxu0 0
  %1667 = vmatpush1.bf16.msra.mxu0 0
  %1668 = vmatprep.subr.bf16.mxu0 0
  %1669 = vmatpush1.bf16.msra.mxu0 0
  %1670 = vmatprep.subr.bf16.mxu0 0
  %1671 = vmatpush1.bf16.msra.mxu0 0
  %1672 = vmatprep.subr.bf16.mxu0 0
  %1673 = vmatpush1.bf16.msra.mxu0 0
  %1674 = vmatprep.subr.bf16.mxu0 0
  %1675 = vmatpush1.bf16.msra.mxu0 0
  %1676 = vmatprep.subr.bf16.mxu0 0
  %1677 = vmatpush1.bf16.msra.mxu0 0
  %1678 = vmatprep.subr.bf16.mxu0 0
  %1679 = vmatpush1.bf16.msra.mxu0 0
  %1680 = vmatprep.subr.bf16.mxu0 0
  %1681 = vmatpush1.bf16.msra.mxu0 0
  %1682 = vmatprep.subr.bf16.mxu0 0
  %1683 = vmatpush1.bf16.msra.mxu0 0
  %1684 = vmatprep.subr.bf16.mxu0 0
  %1685 = vmatpush1.bf16.msra.mxu0 0
  %1686 = vmatprep.subr.bf16.mxu0 0
  %1687 = vmatpush1.bf16.msra.mxu0 0
  %1688 = vmatprep.mubr.bf16.mxu0 0
  %1689 = vmatmul.mubr.bf16.gmra.mrb[0].mxu0 %v1654
  %v1690 = vpop.f32.mrb[0].mxu0
  %v1691 = vadd.f32 %v357, %v1690
  %v1692 = vpop.f32.mrb[0].mxu0
  %v1693 = vpop.f32.mrb[0].mxu0
  %v1694 = vpop.f32.mrb[0].mxu0
  %1695 = vdwg.mxu0
  %1696 = vmatprep.subr.bf16.mxu0 0
  %1697 = vmatpush1.bf16.msra.mxu0 %v210
  %1698 = vmatprep.subr.bf16.mxu0 0
  %1699 = vmatpush1.bf16.msra.mxu0 %v211
  %1700 = vmatprep.subr.bf16.mxu0 0
  %1701 = vmatpush1.bf16.msra.mxu0 0
  %1702 = vmatprep.subr.bf16.mxu0 0
  %1703 = vmatpush1.bf16.msra.mxu0 0
  %1704 = vmatprep.subr.bf16.mxu0 0
  %1705 = vmatpush1.bf16.msra.mxu0 0
  %1706 = vmatprep.subr.bf16.mxu0 0
  %1707 = vmatpush1.bf16.msra.mxu0 0
  %1708 = vmatprep.subr.bf16.mxu0 0
  %1709 = vmatpush1.bf16.msra.mxu0 0
  %1710 = vmatprep.subr.bf16.mxu0 0
  %1711 = vmatpush1.bf16.msra.mxu0 0
  %1712 = vmatprep.subr.bf16.mxu0 0
  %1713 = vmatpush1.bf16.msra.mxu0 0
  %1714 = vmatprep.subr.bf16.mxu0 0
  %1715 = vmatpush1.bf16.msra.mxu0 0
  %1716 = vmatprep.subr.bf16.mxu0 0
  %1717 = vmatpush1.bf16.msra.mxu0 0
  %1718 = vmatprep.subr.bf16.mxu0 0
  %1719 = vmatpush1.bf16.msra.mxu0 0
  %1720 = vmatprep.subr.bf16.mxu0 0
  %1721 = vmatpush1.bf16.msra.mxu0 0
  %1722 = vmatprep.subr.bf16.mxu0 0
  %1723 = vmatpush1.bf16.msra.mxu0 0
  %1724 = vmatprep.subr.bf16.mxu0 0
  %1725 = vmatpush1.bf16.msra.mxu0 0
  %1726 = vmatprep.subr.bf16.mxu0 0
  %1727 = vmatpush1.bf16.msra.mxu0 0
  %1728 = vmatprep.mubr.bf16.mxu0 0
  %1729 = vmatmul.mubr.bf16.gmra.mrb[0].mxu0 %v1602
  %v1730 = vpop.f32.mrb[0].mxu0
  %v1731 = vadd.f32 0.0, %v1730
  %v1732 = vpop.f32.mrb[0].mxu0
  %v1733 = vpop.f32.mrb[0].mxu0
  %v1734 = vpop.f32.mrb[0].mxu0
  %1735 = vdwg.mxu0
  %v1736 = vadd.f32 %v191, %v1731
  %v1737 = vmul.f32 %v1736, %v35
  %v1738 = vtanh.pop %v1737
  %v1739 = vmul.f32 %v1738, %v35
  %v1740 = vadd.f32 %v1739, %v36
  %v1741 = vmul.f32 %v1740, %v1590
  %1743 = vrot.lane.b32.xlu0 %v1740, 64
  %v1744 = vpop.permute.xlu0 %1743
  %v1746 = vmul.f32 %v1740, %v1744
  %1748 = vrot.lane.b32.xlu0 %v1746, 32
  %v1749 = vpop.permute.xlu0 %1748
  %v1751 = vadd.f32 %v1741, %v1749
  %v1752 = vtanh.pop %v1751
  %1754 = vrot.lane.b32.xlu0 %v1752, 64
  %v1755 = vpop.permute.xlu0 %1754
  %v1757 = vmul.f32 %v1740, %v1755
  %v1758 = vpack.c.bf16 %v1757, %v1757
  %1760 = vrot.lane.b32.xlu0 %v1758, 32
  %v1761 = vpop.permute.xlu0 %1760
  %v1763 = vsel %vm214, %v1761, 0
  %1765 = vmatprep.subr.bf16.mxu0 0
  %1766 = vmatpush1.bf16.msra.mxu0 %v298
  %1767 = vmatprep.subr.bf16.mxu0 0
  %1768 = vmatpush1.bf16.msra.mxu0 %v299
  %1769 = vmatprep.subr.bf16.mxu0 0
  %1770 = vmatpush1.bf16.msra.mxu0 0
  %1771 = vmatprep.subr.bf16.mxu0 0
  %1772 = vmatpush1.bf16.msra.mxu0 0
  %1773 = vmatprep.subr.bf16.mxu0 0
  %1774 = vmatpush1.bf16.msra.mxu0 0
  %1775 = vmatprep.subr.bf16.mxu0 0
  %1776 = vmatpush1.bf16.msra.mxu0 0
  %1777 = vmatprep.subr.bf16.mxu0 0
  %1778 = vmatpush1.bf16.msra.mxu0 0
  %1779 = vmatprep.subr.bf16.mxu0 0
  %1780 = vmatpush1.bf16.msra.mxu0 0
  %1781 = vmatprep.subr.bf16.mxu0 0
  %1782 = vmatpush1.bf16.msra.mxu0 0
  %1783 = vmatprep.subr.bf16.mxu0 0
  %1784 = vmatpush1.bf16.msra.mxu0 0
  %1785 = vmatprep.subr.bf16.mxu0 0
  %1786 = vmatpush1.bf16.msra.mxu0 0
  %1787 = vmatprep.subr.bf16.mxu0 0
  %1788 = vmatpush1.bf16.msra.mxu0 0
  %1789 = vmatprep.subr.bf16.mxu0 0
  %1790 = vmatpush1.bf16.msra.mxu0 0
  %1791 = vmatprep.subr.bf16.mxu0 0
  %1792 = vmatpush1.bf16.msra.mxu0 0
  %1793 = vmatprep.subr.bf16.mxu0 0
  %1794 = vmatpush1.bf16.msra.mxu0 0
  %1795 = vmatprep.subr.bf16.mxu0 0
  %1796 = vmatpush1.bf16.msra.mxu0 0
  %1797 = vmatprep.mubr.bf16.mxu0 0
  %1798 = vmatmul.mubr.bf16.gmra.mrb[0].mxu0 %v1763
  %v1799 = vpop.f32.mrb[0].mxu0
  %v1800 = vadd.f32 %v285, %v1799
  %v1801 = vpop.f32.mrb[0].mxu0
  %v1802 = vpop.f32.mrb[0].mxu0
  %v1803 = vpop.f32.mrb[0].mxu0
  %1804 = vdwg.mxu0
  %v1805 = vmin.f32 %v1800, 0.0
  %v1806 = vmul.f32 %v1805, 1.442695
  %v1807 = vpow.pop %v1806
  %v1808 = vsub.f32 %v1807, 1.0
  %v1809 = vmul.f32 %v1808, 1.6732632
  %vm1810 = vcmp.gt.f32.partialorder %v1800, 0.0
  %v1811 = vsel %vm1810, %v1800, %v1809
  %v1812 = vmul.f32 %v1811, 1.050701
  %v1813 = vpack.c.bf16 %v1812, %v1812
  %v1815 = vsel %vm364, %v1813, 0
  %1817 = vmatprep.subr.bf16.mxu0 0
  %1818 = vmatpush1.bf16.msra.mxu0 %v362
  %1819 = vmatprep.subr.bf16.mxu0 0
  %1820 = vmatpush1.bf16.msra.mxu0 0
  %1821 = vmatprep.subr.bf16.mxu0 0
  %1822 = vmatpush1.bf16.msra.mxu0 0
  %1823 = vmatprep.subr.bf16.mxu0 0
  %1824 = vmatpush1.bf16.msra.mxu0 0
  %1825 = vmatprep.subr.bf16.mxu0 0
  %1826 = vmatpush1.bf16.msra.mxu0 0
  %1827 = vmatprep.subr.bf16.mxu0 0
  %1828 = vmatpush1.bf16.msra.mxu0 0
  %1829 = vmatprep.subr.bf16.mxu0 0
  %1830 = vmatpush1.bf16.msra.mxu0 0
  %1831 = vmatprep.subr.bf16.mxu0 0
  %1832 = vmatpush1.bf16.msra.mxu0 0
  %1833 = vmatprep.subr.bf16.mxu0 0
  %1834 = vmatpush1.bf16.msra.mxu0 0
  %1835 = vmatprep.subr.bf16.mxu0 0
  %1836 = vmatpush1.bf16.msra.mxu0 0
  %1837 = vmatprep.subr.bf16.mxu0 0
  %1838 = vmatpush1.bf16.msra.mxu0 0
  %1839 = vmatprep.subr.bf16.mxu0 0
  %1840 = vmatpush1.bf16.msra.mxu0 0
  %1841 = vmatprep.subr.bf16.mxu0 0
  %1842 = vmatpush1.bf16.msra.mxu0 0
  %1843 = vmatprep.subr.bf16.mxu0 0
  %1844 = vmatpush1.bf16.msra.mxu0 0
  %1845 = vmatprep.subr.bf16.mxu0 0
  %1846 = vmatpush1.bf16.msra.mxu0 0
  %1847 = vmatprep.subr.bf16.mxu0 0
  %1848 = vmatpush1.bf16.msra.mxu0 0
  %1849 = vmatprep.mubr.bf16.mxu0 0
  %1850 = vmatmul.mubr.bf16.gmra.mrb[0].mxu0 %v1815
  %v1851 = vpop.f32.mrb[0].mxu0
  %v1852 = vadd.f32 %v357, %v1851
  %v1853 = vpop.f32.mrb[0].mxu0
  %v1854 = vpop.f32.mrb[0].mxu0
  %v1855 = vpop.f32.mrb[0].mxu0
  %1856 = vdwg.mxu0
  %1857 = vmatprep.subr.bf16.mxu0 0
  %1858 = vmatpush1.bf16.msra.mxu0 %v210
  %1859 = vmatprep.subr.bf16.mxu0 0
  %1860 = vmatpush1.bf16.msra.mxu0 %v211
  %1861 = vmatprep.subr.bf16.mxu0 0
  %1862 = vmatpush1.bf16.msra.mxu0 0
  %1863 = vmatprep.subr.bf16.mxu0 0
  %1864 = vmatpush1.bf16.msra.mxu0 0
  %1865 = vmatprep.subr.bf16.mxu0 0
  %1866 = vmatpush1.bf16.msra.mxu0 0
  %1867 = vmatprep.subr.bf16.mxu0 0
  %1868 = vmatpush1.bf16.msra.mxu0 0
  %1869 = vmatprep.subr.bf16.mxu0 0
  %1870 = vmatpush1.bf16.msra.mxu0 0
  %1871 = vmatprep.subr.bf16.mxu0 0
  %1872 = vmatpush1.bf16.msra.mxu0 0
  %1873 = vmatprep.subr.bf16.mxu0 0
  %1874 = vmatpush1.bf16.msra.mxu0 0
  %1875 = vmatprep.subr.bf16.mxu0 0
  %1876 = vmatpush1.bf16.msra.mxu0 0
  %1877 = vmatprep.subr.bf16.mxu0 0
  %1878 = vmatpush1.bf16.msra.mxu0 0
  %1879 = vmatprep.subr.bf16.mxu0 0
  %1880 = vmatpush1.bf16.msra.mxu0 0
  %1881 = vmatprep.subr.bf16.mxu0 0
  %1882 = vmatpush1.bf16.msra.mxu0 0
  %1883 = vmatprep.subr.bf16.mxu0 0
  %1884 = vmatpush1.bf16.msra.mxu0 0
  %1885 = vmatprep.subr.bf16.mxu0 0
  %1886 = vmatpush1.bf16.msra.mxu0 0
  %1887 = vmatprep.subr.bf16.mxu0 0
  %1888 = vmatpush1.bf16.msra.mxu0 0
  %1889 = vmatprep.mubr.bf16.mxu0 0
  %1890 = vmatmul.mubr.bf16.gmra.mrb[0].mxu0 %v1763
  %v1891 = vpop.f32.mrb[0].mxu0
  %v1892 = vadd.f32 0.0, %v1891
  %v1893 = vpop.f32.mrb[0].mxu0
  %v1894 = vpop.f32.mrb[0].mxu0
  %v1895 = vpop.f32.mrb[0].mxu0
  %1896 = vdwg.mxu0
  %v1897 = vadd.f32 %v196, %v1892
  %v1898 = vmul.f32 %v1897, %v35
  %v1899 = vtanh.pop %v1898
  %v1900 = vmul.f32 %v1899, %v35
  %v1901 = vadd.f32 %v1900, %v36
  %v1902 = vmul.f32 %v1901, %v1751
  %1904 = vrot.lane.b32.xlu0 %v1901, 64
  %v1905 = vpop.permute.xlu0 %1904
  %v1907 = vmul.f32 %v1901, %v1905
  %1909 = vrot.lane.b32.xlu0 %v1907, 32
  %v1910 = vpop.permute.xlu0 %1909
  %v1912 = vadd.f32 %v1902, %v1910
  %v1913 = vtanh.pop %v1912
  %1915 = vrot.lane.b32.xlu0 %v1913, 64
  %v1916 = vpop.permute.xlu0 %1915
  %v1918 = vmul.f32 %v1901, %v1916
  %v1919 = vpack.c.bf16 %v1918, %v1918
  %1921 = vrot.lane.b32.xlu0 %v1919, 32
  %v1922 = vpop.permute.xlu0 %1921
  %v1924 = vsel %vm214, %v1922, 0
  %1926 = vmatprep.subr.bf16.mxu0 0
  %1927 = vmatpush1.bf16.msra.mxu0 %v298
  %1928 = vmatprep.subr.bf16.mxu0 0
  %1929 = vmatpush1.bf16.msra.mxu0 %v299
  %1930 = vmatprep.subr.bf16.mxu0 0
  %1931 = vmatpush1.bf16.msra.mxu0 0
  %1932 = vmatprep.subr.bf16.mxu0 0
  %1933 = vmatpush1.bf16.msra.mxu0 0
  %1934 = vmatprep.subr.bf16.mxu0 0
  %1935 = vmatpush1.bf16.msra.mxu0 0
  %1936 = vmatprep.subr.bf16.mxu0 0
  %1937 = vmatpush1.bf16.msra.mxu0 0
  %1938 = vmatprep.subr.bf16.mxu0 0
  %1939 = vmatpush1.bf16.msra.mxu0 0
  %1940 = vmatprep.subr.bf16.mxu0 0
  %1941 = vmatpush1.bf16.msra.mxu0 0
  %1942 = vmatprep.subr.bf16.mxu0 0
  %1943 = vmatpush1.bf16.msra.mxu0 0
  %1944 = vmatprep.subr.bf16.mxu0 0
  %1945 = vmatpush1.bf16.msra.mxu0 0
  %1946 = vmatprep.subr.bf16.mxu0 0
  %1947 = vmatpush1.bf16.msra.mxu0 0
  %1948 = vmatprep.subr.bf16.mxu0 0
  %1949 = vmatpush1.bf16.msra.mxu0 0
  %1950 = vmatprep.subr.bf16.mxu0 0
  %1951 = vmatpush1.bf16.msra.mxu0 0
  %1952 = vmatprep.subr.bf16.mxu0 0
  %1953 = vmatpush1.bf16.msra.mxu0 0
  %1954 = vmatprep.subr.bf16.mxu0 0
  %1955 = vmatpush1.bf16.msra.mxu0 0
  %1956 = vmatprep.subr.bf16.mxu0 0
  %1957 = vmatpush1.bf16.msra.mxu0 0
  %1958 = vmatprep.mubr.bf16.mxu0 0
  %1959 = vmatmul.mubr.bf16.gmra.mrb[0].mxu0 %v1924
  %v1960 = vpop.f32.mrb[0].mxu0
  %v1961 = vadd.f32 %v285, %v1960
  %v1962 = vpop.f32.mrb[0].mxu0
  %v1963 = vpop.f32.mrb[0].mxu0
  %v1964 = vpop.f32.mrb[0].mxu0
  %1965 = vdwg.mxu0
  %v1966 = vmin.f32 %v1961, 0.0
  %v1967 = vmul.f32 %v1966, 1.442695
  %v1968 = vpow.pop %v1967
  %v1969 = vsub.f32 %v1968, 1.0
  %v1970 = vmul.f32 %v1969, 1.6732632
  %vm1971 = vcmp.gt.f32.partialorder %v1961, 0.0
  %v1972 = vsel %vm1971, %v1961, %v1970
  %v1973 = vmul.f32 %v1972, 1.050701
  %v1974 = vpack.c.bf16 %v1973, %v1973
  %v1976 = vsel %vm364, %v1974, 0
  %1978 = vmatprep.subr.bf16.mxu0 0
  %1979 = vmatpush1.bf16.msra.mxu0 %v362
  %1980 = vmatprep.subr.bf16.mxu0 0
  %1981 = vmatpush1.bf16.msra.mxu0 0
  %1982 = vmatprep.subr.bf16.mxu0 0
  %1983 = vmatpush1.bf16.msra.mxu0 0
  %1984 = vmatprep.subr.bf16.mxu0 0
  %1985 = vmatpush1.bf16.msra.mxu0 0
  %1986 = vmatprep.subr.bf16.mxu0 0
  %1987 = vmatpush1.bf16.msra.mxu0 0
  %1988 = vmatprep.subr.bf16.mxu0 0
  %1989 = vmatpush1.bf16.msra.mxu0 0
  %1990 = vmatprep.subr.bf16.mxu0 0
  %1991 = vmatpush1.bf16.msra.mxu0 0
  %1992 = vmatprep.subr.bf16.mxu0 0
  %1993 = vmatpush1.bf16.msra.mxu0 0
  %1994 = vmatprep.subr.bf16.mxu0 0
  %1995 = vmatpush1.bf16.msra.mxu0 0
  %1996 = vmatprep.subr.bf16.mxu0 0
  %1997 = vmatpush1.bf16.msra.mxu0 0
  %1998 = vmatprep.subr.bf16.mxu0 0
  %1999 = vmatpush1.bf16.msra.mxu0 0
  %2000 = vmatprep.subr.bf16.mxu0 0
  %2001 = vmatpush1.bf16.msra.mxu0 0
  %2002 = vmatprep.subr.bf16.mxu0 0
  %2003 = vmatpush1.bf16.msra.mxu0 0
  %2004 = vmatprep.subr.bf16.mxu0 0
  %2005 = vmatpush1.bf16.msra.mxu0 0
  %2006 = vmatprep.subr.bf16.mxu0 0
  %2007 = vmatpush1.bf16.msra.mxu0 0
  %2008 = vmatprep.subr.bf16.mxu0 0
  %2009 = vmatpush1.bf16.msra.mxu0 0
  %2010 = vmatprep.mubr.bf16.mxu0 0
  %2011 = vmatmul.mubr.bf16.gmra.mrb[0].mxu0 %v1976
  %v2012 = vpop.f32.mrb[0].mxu0
  %v2013 = vadd.f32 %v357, %v2012
  %v2014 = vpop.f32.mrb[0].mxu0
  %v2015 = vpop.f32.mrb[0].mxu0
  %v2016 = vpop.f32.mrb[0].mxu0
  %2017 = vdwg.mxu0
  %2018 = vmatprep.subr.bf16.mxu0 0
  %2019 = vmatpush1.bf16.msra.mxu0 %v210
  %2020 = vmatprep.subr.bf16.mxu0 0
  %2021 = vmatpush1.bf16.msra.mxu0 %v211
  %2022 = vmatprep.subr.bf16.mxu0 0
  %2023 = vmatpush1.bf16.msra.mxu0 0
  %2024 = vmatprep.subr.bf16.mxu0 0
  %2025 = vmatpush1.bf16.msra.mxu0 0
  %2026 = vmatprep.subr.bf16.mxu0 0
  %2027 = vmatpush1.bf16.msra.mxu0 0
  %2028 = vmatprep.subr.bf16.mxu0 0
  %2029 = vmatpush1.bf16.msra.mxu0 0
  %2030 = vmatprep.subr.bf16.mxu0 0
  %2031 = vmatpush1.bf16.msra.mxu0 0
  %2032 = vmatprep.subr.bf16.mxu0 0
  %2033 = vmatpush1.bf16.msra.mxu0 0
  %2034 = vmatprep.subr.bf16.mxu0 0
  %2035 = vmatpush1.bf16.msra.mxu0 0
  %2036 = vmatprep.subr.bf16.mxu0 0
  %2037 = vmatpush1.bf16.msra.mxu0 0
  %2038 = vmatprep.subr.bf16.mxu0 0
  %2039 = vmatpush1.bf16.msra.mxu0 0
  %2040 = vmatprep.subr.bf16.mxu0 0
  %2041 = vmatpush1.bf16.msra.mxu0 0
  %2042 = vmatprep.subr.bf16.mxu0 0
  %2043 = vmatpush1.bf16.msra.mxu0 0
  %2044 = vmatprep.subr.bf16.mxu0 0
  %2045 = vmatpush1.bf16.msra.mxu0 0
  %2046 = vmatprep.subr.bf16.mxu0 0
  %2047 = vmatpush1.bf16.msra.mxu0 0
  %2048 = vmatprep.subr.bf16.mxu0 0
  %2049 = vmatpush1.bf16.msra.mxu0 0
  %2050 = vmatprep.mubr.bf16.mxu0 0
  %2051 = vmatmul.mubr.bf16.gmra.mrb[0].mxu0 %v1924
  %v2052 = vpop.f32.mrb[0].mxu0
  %v2053 = vadd.f32 0.0, %v2052
  %v2054 = vpop.f32.mrb[0].mxu0
  %v2055 = vpop.f32.mrb[0].mxu0
  %v2056 = vpop.f32.mrb[0].mxu0
  %2057 = vdwg.mxu0
  %v2058 = vadd.f32 %v199, %v2053
  %v2059 = vmul.f32 %v2058, %v35
  %v2060 = vtanh.pop %v2059
  %v2061 = vmul.f32 %v2060, %v35
  %v2062 = vadd.f32 %v2061, %v36
  %v2063 = vmul.f32 %v2062, %v1912
  %2065 = vrot.lane.b32.xlu0 %v2062, 64
  %v2066 = vpop.permute.xlu0 %2065
  %v2068 = vmul.f32 %v2062, %v2066
  %2070 = vrot.lane.b32.xlu0 %v2068, 32
  %v2071 = vpop.permute.xlu0 %2070
  %v2073 = vadd.f32 %v2063, %v2071
  %v2074 = vtanh.pop %v2073
  %2076 = vrot.lane.b32.xlu0 %v2074, 64
  %v2077 = vpop.permute.xlu0 %2076
  %v2079 = vmul.f32 %v2062, %v2077
  %v2080 = vpack.c.bf16 %v2079, %v2079
  %2082 = vrot.lane.b32.xlu0 %v2080, 32
  %v2083 = vpop.permute.xlu0 %2082
  %v2085 = vsel %vm214, %v2083, 0
  %2087 = vmatprep.subr.bf16.mxu0 0
  %2088 = vmatpush1.bf16.msra.mxu0 %v298
  %2089 = vmatprep.subr.bf16.mxu0 0
  %2090 = vmatpush1.bf16.msra.mxu0 %v299
  %2091 = vmatprep.subr.bf16.mxu0 0
  %2092 = vmatpush1.bf16.msra.mxu0 0
  %2093 = vmatprep.subr.bf16.mxu0 0
  %2094 = vmatpush1.bf16.msra.mxu0 0
  %2095 = vmatprep.subr.bf16.mxu0 0
  %2096 = vmatpush1.bf16.msra.mxu0 0
  %2097 = vmatprep.subr.bf16.mxu0 0
  %2098 = vmatpush1.bf16.msra.mxu0 0
  %2099 = vmatprep.subr.bf16.mxu0 0
  %2100 = vmatpush1.bf16.msra.mxu0 0
  %2101 = vmatprep.subr.bf16.mxu0 0
  %2102 = vmatpush1.bf16.msra.mxu0 0
  %2103 = vmatprep.subr.bf16.mxu0 0
  %2104 = vmatpush1.bf16.msra.mxu0 0
  %2105 = vmatprep.subr.bf16.mxu0 0
  %2106 = vmatpush1.bf16.msra.mxu0 0
  %2107 = vmatprep.subr.bf16.mxu0 0
  %2108 = vmatpush1.bf16.msra.mxu0 0
  %2109 = vmatprep.subr.bf16.mxu0 0
  %2110 = vmatpush1.bf16.msra.mxu0 0
  %2111 = vmatprep.subr.bf16.mxu0 0
  %2112 = vmatpush1.bf16.msra.mxu0 0
  %2113 = vmatprep.subr.bf16.mxu0 0
  %2114 = vmatpush1.bf16.msra.mxu0 0
  %2115 = vmatprep.subr.bf16.mxu0 0
  %2116 = vmatpush1.bf16.msra.mxu0 0
  %2117 = vmatprep.subr.bf16.mxu0 0
  %2118 = vmatpush1.bf16.msra.mxu0 0
  %2119 = vmatprep.mubr.bf16.mxu0 0
  %2120 = vmatmul.mubr.bf16.gmra.mrb[0].mxu0 %v2085
  %v2121 = vpop.f32.mrb[0].mxu0
  %v2122 = vadd.f32 %v285, %v2121
  %v2123 = vpop.f32.mrb[0].mxu0
  %v2124 = vpop.f32.mrb[0].mxu0
  %v2125 = vpop.f32.mrb[0].mxu0
  %2126 = vdwg.mxu0
  %v2127 = vmin.f32 %v2122, 0.0
  %v2128 = vmul.f32 %v2127, 1.442695
  %v2129 = vpow.pop %v2128
  %v2130 = vsub.f32 %v2129, 1.0
  %v2131 = vmul.f32 %v2130, 1.6732632
  %vm2132 = vcmp.gt.f32.partialorder %v2122, 0.0
  %v2133 = vsel %vm2132, %v2122, %v2131
  %v2134 = vmul.f32 %v2133, 1.050701
  %v2135 = vpack.c.bf16 %v2134, %v2134
  %v2137 = vsel %vm364, %v2135, 0
  %2139 = vmatprep.subr.bf16.mxu0 0
  %2140 = vmatpush1.bf16.msra.mxu0 %v362
  %2141 = vmatprep.subr.bf16.mxu0 0
  %2142 = vmatpush1.bf16.msra.mxu0 0
  %2143 = vmatprep.subr.bf16.mxu0 0
  %2144 = vmatpush1.bf16.msra.mxu0 0
  %2145 = vmatprep.subr.bf16.mxu0 0
  %2146 = vmatpush1.bf16.msra.mxu0 0
  %2147 = vmatprep.subr.bf16.mxu0 0
  %2148 = vmatpush1.bf16.msra.mxu0 0
  %2149 = vmatprep.subr.bf16.mxu0 0
  %2150 = vmatpush1.bf16.msra.mxu0 0
  %2151 = vmatprep.subr.bf16.mxu0 0
  %2152 = vmatpush1.bf16.msra.mxu0 0
  %2153 = vmatprep.subr.bf16.mxu0 0
  %2154 = vmatpush1.bf16.msra.mxu0 0
  %2155 = vmatprep.subr.bf16.mxu0 0
  %2156 = vmatpush1.bf16.msra.mxu0 0
  %2157 = vmatprep.subr.bf16.mxu0 0
  %2158 = vmatpush1.bf16.msra.mxu0 0
  %2159 = vmatprep.subr.bf16.mxu0 0
  %2160 = vmatpush1.bf16.msra.mxu0 0
  %2161 = vmatprep.subr.bf16.mxu0 0
  %2162 = vmatpush1.bf16.msra.mxu0 0
  %2163 = vmatprep.subr.bf16.mxu0 0
  %2164 = vmatpush1.bf16.msra.mxu0 0
  %2165 = vmatprep.subr.bf16.mxu0 0
  %2166 = vmatpush1.bf16.msra.mxu0 0
  %2167 = vmatprep.subr.bf16.mxu0 0
  %2168 = vmatpush1.bf16.msra.mxu0 0
  %2169 = vmatprep.subr.bf16.mxu0 0
  %2170 = vmatpush1.bf16.msra.mxu0 0
  %2171 = vmatprep.mubr.bf16.mxu0 0
  %2172 = vmatmul.mubr.bf16.gmra.mrb[0].mxu0 %v2137
  %v2173 = vpop.f32.mrb[0].mxu0
  %v2174 = vadd.f32 %v357, %v2173
  %v2175 = vpop.f32.mrb[0].mxu0
  %v2176 = vpop.f32.mrb[0].mxu0
  %v2177 = vpop.f32.mrb[0].mxu0
  %2178 = vdwg.mxu0
  %v2179 = vld [vmem:[%s3 + $0x8] sm:$0xf]
  %v2180 = vld [vmem:[%s3 + $0xc] sm:$0xf]
  %v2181 = vld [vmem:[%s3 + $0x10] sm:$0xf]
  %v2182 = vld [vmem:[%s3 + $0x14] sm:$0xf]
  %v2187 = vunpack.c.l.b16 %v2179
  %v2188 = vunpack.c.l.b16 %v2180
  %v2189 = vunpack.c.l.b16 %v2181
  %v2190 = vunpack.c.l.b16 %v2182
  %v2191 = vpack.c.b16 %v2188, %v2187
  %v2192 = vpack.c.b16 %v2190, %v2189
  %2195 = vmatprep.subr.bf16.mxu0 0
  %2196 = vmatpush1.bf16.msra.mxu0 %v2191
  %2197 = vmatprep.subr.bf16.mxu0 0
  %2198 = vmatpush1.bf16.msra.mxu0 %v2192
  %2199 = vmatprep.subr.bf16.mxu0 0
  %2200 = vmatpush1.bf16.msra.mxu0 0
  %2201 = vmatprep.subr.bf16.mxu0 0
  %2202 = vmatpush1.bf16.msra.mxu0 0
  %2203 = vmatprep.subr.bf16.mxu0 0
  %2204 = vmatpush1.bf16.msra.mxu0 0
  %2205 = vmatprep.subr.bf16.mxu0 0
  %2206 = vmatpush1.bf16.msra.mxu0 0
  %2207 = vmatprep.subr.bf16.mxu0 0
  %2208 = vmatpush1.bf16.msra.mxu0 0
  %2209 = vmatprep.subr.bf16.mxu0 0
  %2210 = vmatpush1.bf16.msra.mxu0 0
  %2211 = vmatprep.subr.bf16.mxu0 0
  %2212 = vmatpush1.bf16.msra.mxu0 0
  %2213 = vmatprep.subr.bf16.mxu0 0
  %2214 = vmatpush1.bf16.msra.mxu0 0
  %2215 = vmatprep.subr.bf16.mxu0 0
  %2216 = vmatpush1.bf16.msra.mxu0 0
  %2217 = vmatprep.subr.bf16.mxu0 0
  %2218 = vmatpush1.bf16.msra.mxu0 0
  %2219 = vmatprep.subr.bf16.mxu0 0
  %2220 = vmatpush1.bf16.msra.mxu0 0
  %2221 = vmatprep.subr.bf16.mxu0 0
  %2222 = vmatpush1.bf16.msra.mxu0 0
  %2223 = vmatprep.subr.bf16.mxu0 0
  %2224 = vmatpush1.bf16.msra.mxu0 0
  %2225 = vmatprep.subr.bf16.mxu0 0
  %2226 = vmatpush1.bf16.msra.mxu0 0
  %2227 = vmatprep.mubr.bf16.mxu0 0
  %2228 = vmatmul.mubr.bf16.gmra.mrb[0].mxu0 %v2085
  %v2229 = vpop.f32.mrb[0].mxu0
  %v2230 = vadd.f32 0.0, %v2229
  %v2231 = vpop.f32.mrb[0].mxu0
  %v2232 = vpop.f32.mrb[0].mxu0
  %v2233 = vpop.f32.mrb[0].mxu0
  %2234 = vdwg.mxu0
  %v2235 = vadd.f32 %v403, %v2230
  %v2236 = vmul.f32 %v2235, %v35
  %v2237 = vtanh.pop %v2236
  %v2238 = vmul.f32 %v2237, %v35
  %v2239 = vadd.f32 %v2238, %v36
  %v2240 = vmul.f32 %v2239, %v2073
  %2242 = vrot.lane.b32.xlu0 %v2239, 64
  %v2243 = vpop.permute.xlu0 %2242
  %v2245 = vmul.f32 %v2239, %v2243
  %2247 = vrot.lane.b32.xlu0 %v2245, 32
  %v2248 = vpop.permute.xlu0 %2247
  %v2250 = vadd.f32 %v2240, %v2248
  %v2251 = vtanh.pop %v2250
  %2253 = vrot.lane.b32.xlu0 %v2251, 64
  %v2254 = vpop.permute.xlu0 %2253
  %v2256 = vmul.f32 %v2239, %v2254
  %v2258 = vlaneseq
  %v2259 = vshrl.u32 %v2258, 7
  %v2260 = vsub.s32 0, %v2259
  %v2261 = vrot.slane %v45, %v2260
  %2262 = vrot.lane.b32.xlu0 %v2261, 96
  %v2263 = vpop.permute.xlu0 %2262
  %v2265 = vmul.f32 %v2256, %v2263
  %2267 = vrot.lane.b32.xlu0 %v2265, 32
  %v2268 = vpop.permute.xlu0 %2267
  %v2270 = vsel %vm214, %v2268, 0.0
  %2271 = vadd.xlane.f32.xlu0 %v2270
  %v2272 = vpop.xlane.xlu0 %2271
  %vm2273 = vcmask 7168
  %2274 = vst.msk [vmem:[#allocation2] sm:$0xff] %vm2273, %v2272
  %v2275 = vpack.c.bf16 %v2256, %v2256
  %2277 = vrot.lane.b32.xlu0 %v2275, 32
  %v2278 = vpop.permute.xlu0 %2277
  %v2280 = vsel %vm214, %v2278, 0
  %2282 = vmatprep.subr.bf16.mxu0 0
  %2283 = vmatpush1.bf16.msra.mxu0 %v2191
  %2284 = vmatprep.subr.bf16.mxu0 0
  %2285 = vmatpush1.bf16.msra.mxu0 %v2192
  %2286 = vmatprep.subr.bf16.mxu0 0
  %2287 = vmatpush1.bf16.msra.mxu0 0
  %2288 = vmatprep.subr.bf16.mxu0 0
  %2289 = vmatpush1.bf16.msra.mxu0 0
  %2290 = vmatprep.subr.bf16.mxu0 0
  %2291 = vmatpush1.bf16.msra.mxu0 0
  %2292 = vmatprep.subr.bf16.mxu0 0
  %2293 = vmatpush1.bf16.msra.mxu0 0
  %2294 = vmatprep.subr.bf16.mxu0 0
  %2295 = vmatpush1.bf16.msra.mxu0 0
  %2296 = vmatprep.subr.bf16.mxu0 0
  %2297 = vmatpush1.bf16.msra.mxu0 0
  %2298 = vmatprep.subr.bf16.mxu0 0
  %2299 = vmatpush1.bf16.msra.mxu0 0
  %2300 = vmatprep.subr.bf16.mxu0 0
  %2301 = vmatpush1.bf16.msra.mxu0 0
  %2302 = vmatprep.subr.bf16.mxu0 0
  %2303 = vmatpush1.bf16.msra.mxu0 0
  %2304 = vmatprep.subr.bf16.mxu0 0
  %2305 = vmatpush1.bf16.msra.mxu0 0
  %2306 = vmatprep.subr.bf16.mxu0 0
  %2307 = vmatpush1.bf16.msra.mxu0 0
  %2308 = vmatprep.subr.bf16.mxu0 0
  %2309 = vmatpush1.bf16.msra.mxu0 0
  %2310 = vmatprep.subr.bf16.mxu0 0
  %2311 = vmatpush1.bf16.msra.mxu0 0
  %2312 = vmatprep.subr.bf16.mxu0 0
  %2313 = vmatpush1.bf16.msra.mxu0 0
  %2314 = vmatprep.mubr.bf16.mxu0 0
  %2315 = vmatmul.mubr.bf16.gmra.mrb[0].mxu0 %v2280
  %v2316 = vpop.f32.mrb[0].mxu0
  %v2317 = vadd.f32 0.0, %v2316
  %v2318 = vpop.f32.mrb[0].mxu0
  %v2319 = vpop.f32.mrb[0].mxu0
  %v2320 = vpop.f32.mrb[0].mxu0
  %2321 = vdwg.mxu0
  %v2322 = vadd.f32 %v564, %v2317
  %v2323 = vmul.f32 %v2322, %v35
  %v2324 = vtanh.pop %v2323
  %v2325 = vmul.f32 %v2324, %v35
  %v2326 = vadd.f32 %v2325, %v36
  %v2327 = vmul.f32 %v2326, %v2250
  %2329 = vrot.lane.b32.xlu0 %v2326, 64
  %v2330 = vpop.permute.xlu0 %2329
  %v2332 = vmul.f32 %v2326, %v2330
  %2334 = vrot.lane.b32.xlu0 %v2332, 32
  %v2335 = vpop.permute.xlu0 %2334
  %v2337 = vadd.f32 %v2327, %v2335
  %v2338 = vtanh.pop %v2337
  %2340 = vrot.lane.b32.xlu0 %v2338, 64
  %v2341 = vpop.permute.xlu0 %2340
  %v2343 = vmul.f32 %v2326, %v2341
  %v2344 = vmul.f32 %v2343, %v2263
  %2346 = vrot.lane.b32.xlu0 %v2344, 32
  %v2347 = vpop.permute.xlu0 %2346
  %v2349 = vsel %vm214, %v2347, 0.0
  %2350 = vadd.xlane.f32.xlu0 %v2349
  %v2351 = vpop.xlane.xlu0 %2350
  %vm2352 = vcmask 15368
  %2353 = vst.msk [vmem:[#allocation2] sm:$0xff] %vm2352, %v2351
  %v2354 = vpack.c.bf16 %v2343, %v2343
  %2356 = vrot.lane.b32.xlu0 %v2354, 32
  %v2357 = vpop.permute.xlu0 %2356
  %v2359 = vsel %vm214, %v2357, 0
  %2361 = vmatprep.subr.bf16.mxu0 0
  %2362 = vmatpush1.bf16.msra.mxu0 %v2191
  %2363 = vmatprep.subr.bf16.mxu0 0
  %2364 = vmatpush1.bf16.msra.mxu0 %v2192
  %2365 = vmatprep.subr.bf16.mxu0 0
  %2366 = vmatpush1.bf16.msra.mxu0 0
  %2367 = vmatprep.subr.bf16.mxu0 0
  %2368 = vmatpush1.bf16.msra.mxu0 0
  %2369 = vmatprep.subr.bf16.mxu0 0
  %2370 = vmatpush1.bf16.msra.mxu0 0
  %2371 = vmatprep.subr.bf16.mxu0 0
  %2372 = vmatpush1.bf16.msra.mxu0 0
  %2373 = vmatprep.subr.bf16.mxu0 0
  %2374 = vmatpush1.bf16.msra.mxu0 0
  %2375 = vmatprep.subr.bf16.mxu0 0
  %2376 = vmatpush1.bf16.msra.mxu0 0
  %2377 = vmatprep.subr.bf16.mxu0 0
  %2378 = vmatpush1.bf16.msra.mxu0 0
  %2379 = vmatprep.subr.bf16.mxu0 0
  %2380 = vmatpush1.bf16.msra.mxu0 0
  %2381 = vmatprep.subr.bf16.mxu0 0
  %2382 = vmatpush1.bf16.msra.mxu0 0
  %2383 = vmatprep.subr.bf16.mxu0 0
  %2384 = vmatpush1.bf16.msra.mxu0 0
  %2385 = vmatprep.subr.bf16.mxu0 0
  %2386 = vmatpush1.bf16.msra.mxu0 0
  %2387 = vmatprep.subr.bf16.mxu0 0
  %2388 = vmatpush1.bf16.msra.mxu0 0
  %2389 = vmatprep.subr.bf16.mxu0 0
  %2390 = vmatpush1.bf16.msra.mxu0 0
  %2391 = vmatprep.subr.bf16.mxu0 0
  %2392 = vmatpush1.bf16.msra.mxu0 0
  %2393 = vmatprep.mubr.bf16.mxu0 0
  %2394 = vmatmul.mubr.bf16.gmra.mrb[0].mxu0 %v2359
  %v2395 = vpop.f32.mrb[0].mxu0
  %v2396 = vadd.f32 0.0, %v2395
  %v2397 = vpop.f32.mrb[0].mxu0
  %v2398 = vpop.f32.mrb[0].mxu0
  %v2399 = vpop.f32.mrb[0].mxu0
  %2400 = vdwg.mxu0
  %v2401 = vadd.f32 %v725, %v2396
  %v2402 = vmul.f32 %v2401, %v35
  %v2403 = vtanh.pop %v2402
  %v2404 = vmul.f32 %v2403, %v35
  %v2405 = vadd.f32 %v2404, %v36
  %v2406 = vmul.f32 %v2405, %v2337
  %2408 = vrot.lane.b32.xlu0 %v2405, 64
  %v2409 = vpop.permute.xlu0 %2408
  %v2411 = vmul.f32 %v2405, %v2409
  %2413 = vrot.lane.b32.xlu0 %v2411, 32
  %v2414 = vpop.permute.xlu0 %2413
  %v2416 = vadd.f32 %v2406, %v2414
  %v2417 = vtanh.pop %v2416
  %2419 = vrot.lane.b32.xlu0 %v2417, 64
  %v2420 = vpop.permute.xlu0 %2419
  %v2422 = vmul.f32 %v2405, %v2420
  %v2423 = vmul.f32 %v2422, %v2263
  %2425 = vrot.lane.b32.xlu0 %v2423, 32
  %v2426 = vpop.permute.xlu0 %2425
  %v2428 = vsel %vm214, %v2426, 0.0
  %2429 = vadd.xlane.f32.xlu0 %v2428
  %v2430 = vpop.xlane.xlu0 %2429
  %vm2431 = vcmask 23568
  %2432 = vst.msk [vmem:[#allocation2] sm:$0xff] %vm2431, %v2430
  %v2433 = vpack.c.bf16 %v2422, %v2422
  %2435 = vrot.lane.b32.xlu0 %v2433, 32
  %v2436 = vpop.permute.xlu0 %2435
  %v2438 = vsel %vm214, %v2436, 0
  %2440 = vmatprep.subr.bf16.mxu0 0
  %2441 = vmatpush1.bf16.msra.mxu0 %v2191
  %2442 = vmatprep.subr.bf16.mxu0 0
  %2443 = vmatpush1.bf16.msra.mxu0 %v2192
  %2444 = vmatprep.subr.bf16.mxu0 0
  %2445 = vmatpush1.bf16.msra.mxu0 0
  %2446 = vmatprep.subr.bf16.mxu0 0
  %2447 = vmatpush1.bf16.msra.mxu0 0
  %2448 = vmatprep.subr.bf16.mxu0 0
  %2449 = vmatpush1.bf16.msra.mxu0 0
  %2450 = vmatprep.subr.bf16.mxu0 0
  %2451 = vmatpush1.bf16.msra.mxu0 0
  %2452 = vmatprep.subr.bf16.mxu0 0
  %2453 = vmatpush1.bf16.msra.mxu0 0
  %2454 = vmatprep.subr.bf16.mxu0 0
  %2455 = vmatpush1.bf16.msra.mxu0 0
  %2456 = vmatprep.subr.bf16.mxu0 0
  %2457 = vmatpush1.bf16.msra.mxu0 0
  %2458 = vmatprep.subr.bf16.mxu0 0
  %2459 = vmatpush1.bf16.msra.mxu0 0
  %2460 = vmatprep.subr.bf16.mxu0 0
  %2461 = vmatpush1.bf16.msra.mxu0 0
  %2462 = vmatprep.subr.bf16.mxu0 0
  %2463 = vmatpush1.bf16.msra.mxu0 0
  %2464 = vmatprep.subr.bf16.mxu0 0
  %2465 = vmatpush1.bf16.msra.mxu0 0
  %2466 = vmatprep.subr.bf16.mxu0 0
  %2467 = vmatpush1.bf16.msra.mxu0 0
  %2468 = vmatprep.subr.bf16.mxu0 0
  %2469 = vmatpush1.bf16.msra.mxu0 0
  %2470 = vmatprep.subr.bf16.mxu0 0
  %2471 = vmatpush1.bf16.msra.mxu0 0
  %2472 = vmatprep.mubr.bf16.mxu0 0
  %2473 = vmatmul.mubr.bf16.gmra.mrb[0].mxu0 %v2438
  %v2474 = vpop.f32.mrb[0].mxu0
  %v2475 = vadd.f32 0.0, %v2474
  %v2476 = vpop.f32.mrb[0].mxu0
  %v2477 = vpop.f32.mrb[0].mxu0
  %v2478 = vpop.f32.mrb[0].mxu0
  %2479 = vdwg.mxu0
  %v2480 = vadd.f32 %v886, %v2475
  %v2481 = vmul.f32 %v2480, %v35
  %v2482 = vtanh.pop %v2481
  %v2483 = vmul.f32 %v2482, %v35
  %v2484 = vadd.f32 %v2483, %v36
  %v2485 = vmul.f32 %v2484, %v2416
  %2487 = vrot.lane.b32.xlu0 %v2484, 64
  %v2488 = vpop.permute.xlu0 %2487
  %v2490 = vmul.f32 %v2484, %v2488
  %2492 = vrot.lane.b32.xlu0 %v2490, 32
  %v2493 = vpop.permute.xlu0 %2492
  %v2495 = vadd.f32 %v2485, %v2493
  %v2496 = vtanh.pop %v2495
  %2498 = vrot.lane.b32.xlu0 %v2496, 64
  %v2499 = vpop.permute.xlu0 %2498
  %v2501 = vmul.f32 %v2484, %v2499
  %v2502 = vmul.f32 %v2501, %v2263
  %2504 = vrot.lane.b32.xlu0 %v2502, 32
  %v2505 = vpop.permute.xlu0 %2504
  %v2507 = vsel %vm214, %v2505, 0.0
  %2508 = vadd.xlane.f32.xlu0 %v2507
  %v2509 = vpop.xlane.xlu0 %2508
  %vm2510 = vcmask 31768
  %2511 = vst.msk [vmem:[#allocation2] sm:$0xff] %vm2510, %v2509
  %v2512 = vpack.c.bf16 %v2501, %v2501
  %2514 = vrot.lane.b32.xlu0 %v2512, 32
  %v2515 = vpop.permute.xlu0 %2514
  %v2517 = vsel %vm214, %v2515, 0
  %2519 = vmatprep.subr.bf16.mxu0 0
  %2520 = vmatpush1.bf16.msra.mxu0 %v2191
  %2521 = vmatprep.subr.bf16.mxu0 0
  %2522 = vmatpush1.bf16.msra.mxu0 %v2192
  %2523 = vmatprep.subr.bf16.mxu0 0
  %2524 = vmatpush1.bf16.msra.mxu0 0
  %2525 = vmatprep.subr.bf16.mxu0 0
  %2526 = vmatpush1.bf16.msra.mxu0 0
  %2527 = vmatprep.subr.bf16.mxu0 0
  %2528 = vmatpush1.bf16.msra.mxu0 0
  %2529 = vmatprep.subr.bf16.mxu0 0
  %2530 = vmatpush1.bf16.msra.mxu0 0
  %2531 = vmatprep.subr.bf16.mxu0 0
  %2532 = vmatpush1.bf16.msra.mxu0 0
  %2533 = vmatprep.subr.bf16.mxu0 0
  %2534 = vmatpush1.bf16.msra.mxu0 0
  %2535 = vmatprep.subr.bf16.mxu0 0
  %2536 = vmatpush1.bf16.msra.mxu0 0
  %2537 = vmatprep.subr.bf16.mxu0 0
  %2538 = vmatpush1.bf16.msra.mxu0 0
  %2539 = vmatprep.subr.bf16.mxu0 0
  %2540 = vmatpush1.bf16.msra.mxu0 0
  %2541 = vmatprep.subr.bf16.mxu0 0
  %2542 = vmatpush1.bf16.msra.mxu0 0
  %2543 = vmatprep.subr.bf16.mxu0 0
  %2544 = vmatpush1.bf16.msra.mxu0 0
  %2545 = vmatprep.subr.bf16.mxu0 0
  %2546 = vmatpush1.bf16.msra.mxu0 0
  %2547 = vmatprep.subr.bf16.mxu0 0
  %2548 = vmatpush1.bf16.msra.mxu0 0
  %2549 = vmatprep.subr.bf16.mxu0 0
  %2550 = vmatpush1.bf16.msra.mxu0 0
  %2551 = vmatprep.mubr.bf16.mxu0 0
  %2552 = vmatmul.mubr.bf16.gmra.mrb[0].mxu0 %v2517
  %v2553 = vpop.f32.mrb[0].mxu0
  %v2554 = vadd.f32 0.0, %v2553
  %v2555 = vpop.f32.mrb[0].mxu0
  %v2556 = vpop.f32.mrb[0].mxu0
  %v2557 = vpop.f32.mrb[0].mxu0
  %2558 = vdwg.mxu0
  %v2559 = vadd.f32 %v1047, %v2554
  %v2560 = vmul.f32 %v2559, %v35
  %v2561 = vtanh.pop %v2560
  %v2562 = vmul.f32 %v2561, %v35
  %v2563 = vadd.f32 %v2562, %v36
  %v2564 = vmul.f32 %v2563, %v2495
  %2566 = vrot.lane.b32.xlu0 %v2563, 64
  %v2567 = vpop.permute.xlu0 %2566
  %v2569 = vmul.f32 %v2563, %v2567
  %2571 = vrot.lane.b32.xlu0 %v2569, 32
  %v2572 = vpop.permute.xlu0 %2571
  %v2574 = vadd.f32 %v2564, %v2572
  %v2575 = vtanh.pop %v2574
  %2577 = vrot.lane.b32.xlu0 %v2575, 64
  %v2578 = vpop.permute.xlu0 %2577
  %v2580 = vmul.f32 %v2563, %v2578
  %v2581 = vmul.f32 %v2580, %v2263
  %2583 = vrot.lane.b32.xlu0 %v2581, 32
  %v2584 = vpop.permute.xlu0 %2583
  %v2586 = vsel %vm214, %v2584, 0.0
  %2587 = vadd.xlane.f32.xlu0 %v2586
  %v2588 = vpop.xlane.xlu0 %2587
  %vm2589 = vcmask 39968
  %2590 = vst.msk [vmem:[#allocation2] sm:$0xff] %vm2589, %v2588
  %v2591 = vpack.c.bf16 %v2580, %v2580
  %2593 = vrot.lane.b32.xlu0 %v2591, 32
  %v2594 = vpop.permute.xlu0 %2593
  %v2596 = vsel %vm214, %v2594, 0
  %2598 = vmatprep.subr.bf16.mxu0 0
  %2599 = vmatpush1.bf16.msra.mxu0 %v2191
  %2600 = vmatprep.subr.bf16.mxu0 0
  %2601 = vmatpush1.bf16.msra.mxu0 %v2192
  %2602 = vmatprep.subr.bf16.mxu0 0
  %2603 = vmatpush1.bf16.msra.mxu0 0
  %2604 = vmatprep.subr.bf16.mxu0 0
  %2605 = vmatpush1.bf16.msra.mxu0 0
  %2606 = vmatprep.subr.bf16.mxu0 0
  %2607 = vmatpush1.bf16.msra.mxu0 0
  %2608 = vmatprep.subr.bf16.mxu0 0
  %2609 = vmatpush1.bf16.msra.mxu0 0
  %2610 = vmatprep.subr.bf16.mxu0 0
  %2611 = vmatpush1.bf16.msra.mxu0 0
  %2612 = vmatprep.subr.bf16.mxu0 0
  %2613 = vmatpush1.bf16.msra.mxu0 0
  %2614 = vmatprep.subr.bf16.mxu0 0
  %2615 = vmatpush1.bf16.msra.mxu0 0
  %2616 = vmatprep.subr.bf16.mxu0 0
  %2617 = vmatpush1.bf16.msra.mxu0 0
  %2618 = vmatprep.subr.bf16.mxu0 0
  %2619 = vmatpush1.bf16.msra.mxu0 0
  %2620 = vmatprep.subr.bf16.mxu0 0
  %2621 = vmatpush1.bf16.msra.mxu0 0
  %2622 = vmatprep.subr.bf16.mxu0 0
  %2623 = vmatpush1.bf16.msra.mxu0 0
  %2624 = vmatprep.subr.bf16.mxu0 0
  %2625 = vmatpush1.bf16.msra.mxu0 0
  %2626 = vmatprep.subr.bf16.mxu0 0
  %2627 = vmatpush1.bf16.msra.mxu0 0
  %2628 = vmatprep.subr.bf16.mxu0 0
  %2629 = vmatpush1.bf16.msra.mxu0 0
  %2630 = vmatprep.mubr.bf16.mxu0 0
  %2631 = vmatmul.mubr.bf16.gmra.mrb[0].mxu0 %v2596
  %v2632 = vpop.f32.mrb[0].mxu0
  %v2633 = vadd.f32 0.0, %v2632
  %v2634 = vpop.f32.mrb[0].mxu0
  %v2635 = vpop.f32.mrb[0].mxu0
  %v2636 = vpop.f32.mrb[0].mxu0
  %2637 = vdwg.mxu0
  %v2638 = vadd.f32 %v1208, %v2633
  %v2639 = vmul.f32 %v2638, %v35
  %v2640 = vtanh.pop %v2639
  %v2641 = vmul.f32 %v2640, %v35
  %v2642 = vadd.f32 %v2641, %v36
  %v2643 = vmul.f32 %v2642, %v2574
  %2645 = vrot.lane.b32.xlu0 %v2642, 64
  %v2646 = vpop.permute.xlu0 %2645
  %v2648 = vmul.f32 %v2642, %v2646
  %2650 = vrot.lane.b32.xlu0 %v2648, 32
  %v2651 = vpop.permute.xlu0 %2650
  %v2653 = vadd.f32 %v2643, %v2651
  %v2654 = vtanh.pop %v2653
  %2656 = vrot.lane.b32.xlu0 %v2654, 64
  %v2657 = vpop.permute.xlu0 %2656
  %v2659 = vmul.f32 %v2642, %v2657
  %v2660 = vmul.f32 %v2659, %v2263
  %2662 = vrot.lane.b32.xlu0 %v2660, 32
  %v2663 = vpop.permute.xlu0 %2662
  %v2665 = vsel %vm214, %v2663, 0.0
  %2666 = vadd.xlane.f32.xlu0 %v2665
  %v2667 = vpop.xlane.xlu0 %2666
  %vm2668 = vcmask 48168
  %2669 = vst.msk [vmem:[#allocation2] sm:$0xff] %vm2668, %v2667
  %v2670 = vpack.c.bf16 %v2659, %v2659
  %2672 = vrot.lane.b32.xlu0 %v2670, 32
  %v2673 = vpop.permute.xlu0 %2672
  %v2675 = vsel %vm214, %v2673, 0
  %2677 = vmatprep.subr.bf16.mxu0 0
  %2678 = vmatpush1.bf16.msra.mxu0 %v2191
  %2679 = vmatprep.subr.bf16.mxu0 0
  %2680 = vmatpush1.bf16.msra.mxu0 %v2192
  %2681 = vmatprep.subr.bf16.mxu0 0
  %2682 = vmatpush1.bf16.msra.mxu0 0
  %2683 = vmatprep.subr.bf16.mxu0 0
  %2684 = vmatpush1.bf16.msra.mxu0 0
  %2685 = vmatprep.subr.bf16.mxu0 0
  %2686 = vmatpush1.bf16.msra.mxu0 0
  %2687 = vmatprep.subr.bf16.mxu0 0
  %2688 = vmatpush1.bf16.msra.mxu0 0
  %2689 = vmatprep.subr.bf16.mxu0 0
  %2690 = vmatpush1.bf16.msra.mxu0 0
  %2691 = vmatprep.subr.bf16.mxu0 0
  %2692 = vmatpush1.bf16.msra.mxu0 0
  %2693 = vmatprep.subr.bf16.mxu0 0
  %2694 = vmatpush1.bf16.msra.mxu0 0
  %2695 = vmatprep.subr.bf16.mxu0 0
  %2696 = vmatpush1.bf16.msra.mxu0 0
  %2697 = vmatprep.subr.bf16.mxu0 0
  %2698 = vmatpush1.bf16.msra.mxu0 0
  %2699 = vmatprep.subr.bf16.mxu0 0
  %2700 = vmatpush1.bf16.msra.mxu0 0
  %2701 = vmatprep.subr.bf16.mxu0 0
  %2702 = vmatpush1.bf16.msra.mxu0 0
  %2703 = vmatprep.subr.bf16.mxu0 0
  %2704 = vmatpush1.bf16.msra.mxu0 0
  %2705 = vmatprep.subr.bf16.mxu0 0
  %2706 = vmatpush1.bf16.msra.mxu0 0
  %2707 = vmatprep.subr.bf16.mxu0 0
  %2708 = vmatpush1.bf16.msra.mxu0 0
  %2709 = vmatprep.mubr.bf16.mxu0 0
  %2710 = vmatmul.mubr.bf16.gmra.mrb[0].mxu0 %v2675
  %v2711 = vpop.f32.mrb[0].mxu0
  %v2712 = vadd.f32 0.0, %v2711
  %v2713 = vpop.f32.mrb[0].mxu0
  %v2714 = vpop.f32.mrb[0].mxu0
  %v2715 = vpop.f32.mrb[0].mxu0
  %2716 = vdwg.mxu0
  %v2717 = vadd.f32 %v1369, %v2712
  %v2718 = vmul.f32 %v2717, %v35
  %v2719 = vtanh.pop %v2718
  %v2720 = vmul.f32 %v2719, %v35
  %v2721 = vadd.f32 %v2720, %v36
  %v2722 = vmul.f32 %v2721, %v2653
  %2724 = vrot.lane.b32.xlu0 %v2721, 64
  %v2725 = vpop.permute.xlu0 %2724
  %v2727 = vmul.f32 %v2721, %v2725
  %2729 = vrot.lane.b32.xlu0 %v2727, 32
  %v2730 = vpop.permute.xlu0 %2729
  %v2732 = vadd.f32 %v2722, %v2730
  %v2733 = vtanh.pop %v2732
  %2735 = vrot.lane.b32.xlu0 %v2733, 64
  %v2736 = vpop.permute.xlu0 %2735
  %v2738 = vmul.f32 %v2721, %v2736
  %v2739 = vmul.f32 %v2738, %v2263
  %2741 = vrot.lane.b32.xlu0 %v2739, 32
  %v2742 = vpop.permute.xlu0 %2741
  %v2744 = vsel %vm214, %v2742, 0.0
  %2745 = vadd.xlane.f32.xlu0 %v2744
  %v2746 = vpop.xlane.xlu0 %2745
  %vm2747 = vcmask 56368
  %2748 = vst.msk [vmem:[#allocation2] sm:$0xff] %vm2747, %v2746
  %v2749 = vpack.c.bf16 %v2738, %v2738
  %2751 = vrot.lane.b32.xlu0 %v2749, 32
  %v2752 = vpop.permute.xlu0 %2751
  %v2754 = vsel %vm214, %v2752, 0
  %2756 = vmatprep.subr.bf16.mxu0 0
  %2757 = vmatpush1.bf16.msra.mxu0 %v2191
  %2758 = vmatprep.subr.bf16.mxu0 0
  %2759 = vmatpush1.bf16.msra.mxu0 %v2192
  %2760 = vmatprep.subr.bf16.mxu0 0
  %2761 = vmatpush1.bf16.msra.mxu0 0
  %2762 = vmatprep.subr.bf16.mxu0 0
  %2763 = vmatpush1.bf16.msra.mxu0 0
  %2764 = vmatprep.subr.bf16.mxu0 0
  %2765 = vmatpush1.bf16.msra.mxu0 0
  %2766 = vmatprep.subr.bf16.mxu0 0
  %2767 = vmatpush1.bf16.msra.mxu0 0
  %2768 = vmatprep.subr.bf16.mxu0 0
  %2769 = vmatpush1.bf16.msra.mxu0 0
  %2770 = vmatprep.subr.bf16.mxu0 0
  %2771 = vmatpush1.bf16.msra.mxu0 0
  %2772 = vmatprep.subr.bf16.mxu0 0
  %2773 = vmatpush1.bf16.msra.mxu0 0
  %2774 = vmatprep.subr.bf16.mxu0 0
  %2775 = vmatpush1.bf16.msra.mxu0 0
  %2776 = vmatprep.subr.bf16.mxu0 0
  %2777 = vmatpush1.bf16.msra.mxu0 0
  %2778 = vmatprep.subr.bf16.mxu0 0
  %2779 = vmatpush1.bf16.msra.mxu0 0
  %2780 = vmatprep.subr.bf16.mxu0 0
  %2781 = vmatpush1.bf16.msra.mxu0 0
  %2782 = vmatprep.subr.bf16.mxu0 0
  %2783 = vmatpush1.bf16.msra.mxu0 0
  %2784 = vmatprep.subr.bf16.mxu0 0
  %2785 = vmatpush1.bf16.msra.mxu0 0
  %2786 = vmatprep.subr.bf16.mxu0 0
  %2787 = vmatpush1.bf16.msra.mxu0 0
  %2788 = vmatprep.mubr.bf16.mxu0 0
  %2789 = vmatmul.mubr.bf16.gmra.mrb[0].mxu0 %v2754
  %v2790 = vpop.f32.mrb[0].mxu0
  %v2791 = vadd.f32 0.0, %v2790
  %v2792 = vpop.f32.mrb[0].mxu0
  %v2793 = vpop.f32.mrb[0].mxu0
  %v2794 = vpop.f32.mrb[0].mxu0
  %2795 = vdwg.mxu0
  %v2796 = vadd.f32 %v1530, %v2791
  %v2797 = vmul.f32 %v2796, %v35
  %v2798 = vtanh.pop %v2797
  %v2799 = vmul.f32 %v2798, %v35
  %v2800 = vadd.f32 %v2799, %v36
  %v2801 = vmul.f32 %v2800, %v2732
  %2803 = vrot.lane.b32.xlu0 %v2800, 64
  %v2804 = vpop.permute.xlu0 %2803
  %v2806 = vmul.f32 %v2800, %v2804
  %2808 = vrot.lane.b32.xlu0 %v2806, 32
  %v2809 = vpop.permute.xlu0 %2808
  %v2811 = vadd.f32 %v2801, %v2809
  %v2812 = vtanh.pop %v2811
  %2814 = vrot.lane.b32.xlu0 %v2812, 64
  %v2815 = vpop.permute.xlu0 %2814
  %v2817 = vmul.f32 %v2800, %v2815
  %v2818 = vmul.f32 %v2817, %v2263
  %2820 = vrot.lane.b32.xlu0 %v2818, 32
  %v2821 = vpop.permute.xlu0 %2820
  %v2823 = vsel %vm214, %v2821, 0.0
  %2824 = vadd.xlane.f32.xlu0 %v2823
  %v2825 = vpop.xlane.xlu0 %2824
  %vm2826 = vcmask 64568
  %2827 = vst.msk [vmem:[#allocation2] sm:$0xff] %vm2826, %v2825
  %v2828 = vpack.c.bf16 %v2817, %v2817
  %2830 = vrot.lane.b32.xlu0 %v2828, 32
  %v2831 = vpop.permute.xlu0 %2830
  %v2833 = vsel %vm214, %v2831, 0
  %2835 = vmatprep.subr.bf16.mxu0 0
  %2836 = vmatpush1.bf16.msra.mxu0 %v2191
  %2837 = vmatprep.subr.bf16.mxu0 0
  %2838 = vmatpush1.bf16.msra.mxu0 %v2192
  %2839 = vmatprep.subr.bf16.mxu0 0
  %2840 = vmatpush1.bf16.msra.mxu0 0
  %2841 = vmatprep.subr.bf16.mxu0 0
  %2842 = vmatpush1.bf16.msra.mxu0 0
  %2843 = vmatprep.subr.bf16.mxu0 0
  %2844 = vmatpush1.bf16.msra.mxu0 0
  %2845 = vmatprep.subr.bf16.mxu0 0
  %2846 = vmatpush1.bf16.msra.mxu0 0
  %2847 = vmatprep.subr.bf16.mxu0 0
  %2848 = vmatpush1.bf16.msra.mxu0 0
  %2849 = vmatprep.subr.bf16.mxu0 0
  %2850 = vmatpush1.bf16.msra.mxu0 0
  %2851 = vmatprep.subr.bf16.mxu0 0
  %2852 = vmatpush1.bf16.msra.mxu0 0
  %2853 = vmatprep.subr.bf16.mxu0 0
  %2854 = vmatpush1.bf16.msra.mxu0 0
  %2855 = vmatprep.subr.bf16.mxu0 0
  %2856 = vmatpush1.bf16.msra.mxu0 0
  %2857 = vmatprep.subr.bf16.mxu0 0
  %2858 = vmatpush1.bf16.msra.mxu0 0
  %2859 = vmatprep.subr.bf16.mxu0 0
  %2860 = vmatpush1.bf16.msra.mxu0 0
  %2861 = vmatprep.subr.bf16.mxu0 0
  %2862 = vmatpush1.bf16.msra.mxu0 0
  %2863 = vmatprep.subr.bf16.mxu0 0
  %2864 = vmatpush1.bf16.msra.mxu0 0
  %2865 = vmatprep.subr.bf16.mxu0 0
  %2866 = vmatpush1.bf16.msra.mxu0 0
  %2867 = vmatprep.mubr.bf16.mxu0 0
  %2868 = vmatmul.mubr.bf16.gmra.mrb[0].mxu0 %v2833
  %v2869 = vpop.f32.mrb[0].mxu0
  %v2870 = vadd.f32 0.0, %v2869
  %v2871 = vpop.f32.mrb[0].mxu0
  %v2872 = vpop.f32.mrb[0].mxu0
  %v2873 = vpop.f32.mrb[0].mxu0
  %2874 = vdwg.mxu0
  %v2875 = vadd.f32 %v1691, %v2870
  %v2876 = vmul.f32 %v2875, %v35
  %v2877 = vtanh.pop %v2876
  %v2878 = vmul.f32 %v2877, %v35
  %v2879 = vadd.f32 %v2878, %v36
  %v2880 = vmul.f32 %v2879, %v2811
  %2882 = vrot.lane.b32.xlu0 %v2879, 64
  %v2883 = vpop.permute.xlu0 %2882
  %v2885 = vmul.f32 %v2879, %v2883
  %2887 = vrot.lane.b32.xlu0 %v2885, 32
  %v2888 = vpop.permute.xlu0 %2887
  %v2890 = vadd.f32 %v2880, %v2888
  %v2891 = vtanh.pop %v2890
  %2893 = vrot.lane.b32.xlu0 %v2891, 64
  %v2894 = vpop.permute.xlu0 %2893
  %v2896 = vmul.f32 %v2879, %v2894
  %v2897 = vmul.f32 %v2896, %v2263
  %2899 = vrot.lane.b32.xlu0 %v2897, 32
  %v2900 = vpop.permute.xlu0 %2899
  %v2902 = vsel %vm214, %v2900, 0.0
  %2903 = vadd.xlane.f32.xlu0 %v2902
  %v2904 = vpop.xlane.xlu0 %2903
  %vm2905 = vcmask 72768
  %2906 = vst.msk [vmem:[#allocation2] sm:$0xff] %vm2905, %v2904
  %v2907 = vpack.c.bf16 %v2896, %v2896
  %2909 = vrot.lane.b32.xlu0 %v2907, 32
  %v2910 = vpop.permute.xlu0 %2909
  %v2912 = vsel %vm214, %v2910, 0
  %2914 = vmatprep.subr.bf16.mxu0 0
  %2915 = vmatpush1.bf16.msra.mxu0 %v2191
  %2916 = vmatprep.subr.bf16.mxu0 0
  %2917 = vmatpush1.bf16.msra.mxu0 %v2192
  %2918 = vmatprep.subr.bf16.mxu0 0
  %2919 = vmatpush1.bf16.msra.mxu0 0
  %2920 = vmatprep.subr.bf16.mxu0 0
  %2921 = vmatpush1.bf16.msra.mxu0 0
  %2922 = vmatprep.subr.bf16.mxu0 0
  %2923 = vmatpush1.bf16.msra.mxu0 0
  %2924 = vmatprep.subr.bf16.mxu0 0
  %2925 = vmatpush1.bf16.msra.mxu0 0
  %2926 = vmatprep.subr.bf16.mxu0 0
  %2927 = vmatpush1.bf16.msra.mxu0 0
  %2928 = vmatprep.subr.bf16.mxu0 0
  %2929 = vmatpush1.bf16.msra.mxu0 0
  %2930 = vmatprep.subr.bf16.mxu0 0
  %2931 = vmatpush1.bf16.msra.mxu0 0
  %2932 = vmatprep.subr.bf16.mxu0 0
  %2933 = vmatpush1.bf16.msra.mxu0 0
  %2934 = vmatprep.subr.bf16.mxu0 0
  %2935 = vmatpush1.bf16.msra.mxu0 0
  %2936 = vmatprep.subr.bf16.mxu0 0
  %2937 = vmatpush1.bf16.msra.mxu0 0
  %2938 = vmatprep.subr.bf16.mxu0 0
  %2939 = vmatpush1.bf16.msra.mxu0 0
  %2940 = vmatprep.subr.bf16.mxu0 0
  %2941 = vmatpush1.bf16.msra.mxu0 0
  %2942 = vmatprep.subr.bf16.mxu0 0
  %2943 = vmatpush1.bf16.msra.mxu0 0
  %2944 = vmatprep.subr.bf16.mxu0 0
  %2945 = vmatpush1.bf16.msra.mxu0 0
  %2946 = vmatprep.mubr.bf16.mxu0 0
  %2947 = vmatmul.mubr.bf16.gmra.mrb[0].mxu0 %v2912
  %v2948 = vpop.f32.mrb[0].mxu0
  %v2949 = vadd.f32 0.0, %v2948
  %v2950 = vpop.f32.mrb[0].mxu0
  %v2951 = vpop.f32.mrb[0].mxu0
  %v2952 = vpop.f32.mrb[0].mxu0
  %2953 = vdwg.mxu0
  %v2954 = vadd.f32 %v1852, %v2949
  %v2955 = vmul.f32 %v2954, %v35
  %v2956 = vtanh.pop %v2955
  %v2957 = vmul.f32 %v2956, %v35
  %v2958 = vadd.f32 %v2957, %v36
  %v2959 = vmul.f32 %v2958, %v2890
  %2961 = vrot.lane.b32.xlu0 %v2958, 64
  %v2962 = vpop.permute.xlu0 %2961
  %v2964 = vmul.f32 %v2958, %v2962
  %2966 = vrot.lane.b32.xlu0 %v2964, 32
  %v2967 = vpop.permute.xlu0 %2966
  %v2969 = vadd.f32 %v2959, %v2967
  %v2970 = vtanh.pop %v2969
  %2972 = vrot.lane.b32.xlu0 %v2970, 64
  %v2973 = vpop.permute.xlu0 %2972
  %v2975 = vmul.f32 %v2958, %v2973
  %v2976 = vmul.f32 %v2975, %v2263
  %2978 = vrot.lane.b32.xlu0 %v2976, 32
  %v2979 = vpop.permute.xlu0 %2978
  %v2981 = vsel %vm214, %v2979, 0.0
  %2982 = vadd.xlane.f32.xlu0 %v2981
  %v2983 = vpop.xlane.xlu0 %2982
  %vm2984 = vcmask 80968
  %2985 = vst.msk [vmem:[#allocation2] sm:$0xff] %vm2984, %v2983
  %v2986 = vpack.c.bf16 %v2975, %v2975
  %2988 = vrot.lane.b32.xlu0 %v2986, 32
  %v2989 = vpop.permute.xlu0 %2988
  %v2991 = vsel %vm214, %v2989, 0
  %2993 = vmatprep.subr.bf16.mxu0 0
  %2994 = vmatpush1.bf16.msra.mxu0 %v2191
  %2995 = vmatprep.subr.bf16.mxu0 0
  %2996 = vmatpush1.bf16.msra.mxu0 %v2192
  %2997 = vmatprep.subr.bf16.mxu0 0
  %2998 = vmatpush1.bf16.msra.mxu0 0
  %2999 = vmatprep.subr.bf16.mxu0 0
  %3000 = vmatpush1.bf16.msra.mxu0 0
  %3001 = vmatprep.subr.bf16.mxu0 0
  %3002 = vmatpush1.bf16.msra.mxu0 0
  %3003 = vmatprep.subr.bf16.mxu0 0
  %3004 = vmatpush1.bf16.msra.mxu0 0
  %3005 = vmatprep.subr.bf16.mxu0 0
  %3006 = vmatpush1.bf16.msra.mxu0 0
  %3007 = vmatprep.subr.bf16.mxu0 0
  %3008 = vmatpush1.bf16.msra.mxu0 0
  %3009 = vmatprep.subr.bf16.mxu0 0
  %3010 = vmatpush1.bf16.msra.mxu0 0
  %3011 = vmatprep.subr.bf16.mxu0 0
  %3012 = vmatpush1.bf16.msra.mxu0 0
  %3013 = vmatprep.subr.bf16.mxu0 0
  %3014 = vmatpush1.bf16.msra.mxu0 0
  %3015 = vmatprep.subr.bf16.mxu0 0
  %3016 = vmatpush1.bf16.msra.mxu0 0
  %3017 = vmatprep.subr.bf16.mxu0 0
  %3018 = vmatpush1.bf16.msra.mxu0 0
  %3019 = vmatprep.subr.bf16.mxu0 0
  %3020 = vmatpush1.bf16.msra.mxu0 0
  %3021 = vmatprep.subr.bf16.mxu0 0
  %3022 = vmatpush1.bf16.msra.mxu0 0
  %3023 = vmatprep.subr.bf16.mxu0 0
  %3024 = vmatpush1.bf16.msra.mxu0 0
  %3025 = vmatprep.mubr.bf16.mxu0 0
  %3026 = vmatmul.mubr.bf16.gmra.mrb[0].mxu0 %v2991
  %v3027 = vpop.f32.mrb[0].mxu0
  %v3028 = vadd.f32 0.0, %v3027
  %v3029 = vpop.f32.mrb[0].mxu0
  %v3030 = vpop.f32.mrb[0].mxu0
  %v3031 = vpop.f32.mrb[0].mxu0
  %3032 = vdwg.mxu0
  %v3033 = vadd.f32 %v2013, %v3028
  %v3034 = vmul.f32 %v3033, %v35
  %v3035 = vtanh.pop %v3034
  %v3036 = vmul.f32 %v3035, %v35
  %v3037 = vadd.f32 %v3036, %v36
  %v3038 = vmul.f32 %v3037, %v2969
  %3040 = vrot.lane.b32.xlu0 %v3037, 64
  %v3041 = vpop.permute.xlu0 %3040
  %v3043 = vmul.f32 %v3037, %v3041
  %3045 = vrot.lane.b32.xlu0 %v3043, 32
  %v3046 = vpop.permute.xlu0 %3045
  %v3048 = vadd.f32 %v3038, %v3046
  %v3049 = vtanh.pop %v3048
  %3051 = vrot.lane.b32.xlu0 %v3049, 64
  %v3052 = vpop.permute.xlu0 %3051
  %v3054 = vmul.f32 %v3037, %v3052
  %v3055 = vmul.f32 %v3054, %v2263
  %3057 = vrot.lane.b32.xlu0 %v3055, 32
  %v3058 = vpop.permute.xlu0 %3057
  %v3060 = vsel %vm214, %v3058, 0.0
  %3061 = vadd.xlane.f32.xlu0 %v3060
  %v3062 = vpop.xlane.xlu0 %3061
  %vm3063 = vcmask 89168
  %3064 = vst.msk [vmem:[#allocation2] sm:$0xff] %vm3063, %v3062
  %v3065 = vpack.c.bf16 %v3054, %v3054
  %3067 = vrot.lane.b32.xlu0 %v3065, 32
  %v3068 = vpop.permute.xlu0 %3067
  %v3070 = vsel %vm214, %v3068, 0
  %3072 = vmatprep.subr.bf16.mxu0 0
  %3073 = vmatpush1.bf16.msra.mxu0 %v2191
  %3074 = vmatprep.subr.bf16.mxu0 0
  %3075 = vmatpush1.bf16.msra.mxu0 %v2192
  %3076 = vmatprep.subr.bf16.mxu0 0
  %3077 = vmatpush1.bf16.msra.mxu0 0
  %3078 = vmatprep.subr.bf16.mxu0 0
  %3079 = vmatpush1.bf16.msra.mxu0 0
  %3080 = vmatprep.subr.bf16.mxu0 0
  %3081 = vmatpush1.bf16.msra.mxu0 0
  %3082 = vmatprep.subr.bf16.mxu0 0
  %3083 = vmatpush1.bf16.msra.mxu0 0
  %3084 = vmatprep.subr.bf16.mxu0 0
  %3085 = vmatpush1.bf16.msra.mxu0 0
  %3086 = vmatprep.subr.bf16.mxu0 0
  %3087 = vmatpush1.bf16.msra.mxu0 0
  %3088 = vmatprep.subr.bf16.mxu0 0
  %3089 = vmatpush1.bf16.msra.mxu0 0
  %3090 = vmatprep.subr.bf16.mxu0 0
  %3091 = vmatpush1.bf16.msra.mxu0 0
  %3092 = vmatprep.subr.bf16.mxu0 0
  %3093 = vmatpush1.bf16.msra.mxu0 0
  %3094 = vmatprep.subr.bf16.mxu0 0
  %3095 = vmatpush1.bf16.msra.mxu0 0
  %3096 = vmatprep.subr.bf16.mxu0 0
  %3097 = vmatpush1.bf16.msra.mxu0 0
  %3098 = vmatprep.subr.bf16.mxu0 0
  %3099 = vmatpush1.bf16.msra.mxu0 0
  %3100 = vmatprep.subr.bf16.mxu0 0
  %3101 = vmatpush1.bf16.msra.mxu0 0
  %3102 = vmatprep.subr.bf16.mxu0 0
  %3103 = vmatpush1.bf16.msra.mxu0 0
  %3104 = vmatprep.mubr.bf16.mxu0 0
  %3105 = vmatmul.mubr.bf16.gmra.mrb[0].mxu0 %v3070
  %v3106 = vpop.f32.mrb[0].mxu0
  %v3107 = vadd.f32 0.0, %v3106
  %v3108 = vpop.f32.mrb[0].mxu0
  %v3109 = vpop.f32.mrb[0].mxu0
  %v3110 = vpop.f32.mrb[0].mxu0
  %3111 = vdwg.mxu0
  %v3112 = vadd.f32 %v2174, %v3107
  %v3113 = vmul.f32 %v3112, %v35
  %v3114 = vtanh.pop %v3113
  %v3115 = vmul.f32 %v3114, %v35
  %v3116 = vadd.f32 %v3115, %v36
  %v3117 = vmul.f32 %v3116, %v3048
  %3119 = vrot.lane.b32.xlu0 %v3116, 64
  %v3120 = vpop.permute.xlu0 %3119
  %v3122 = vmul.f32 %v3116, %v3120
  %3124 = vrot.lane.b32.xlu0 %v3122, 32
  %v3125 = vpop.permute.xlu0 %3124
  %v3127 = vadd.f32 %v3117, %v3125
  %v3128 = vtanh.pop %v3127
  %3130 = vrot.lane.b32.xlu0 %v3128, 64
  %v3131 = vpop.permute.xlu0 %3130
  %v3133 = vmul.f32 %v3116, %v3131
  %v3134 = vmul.f32 %v3133, %v2263
  %3136 = vrot.lane.b32.xlu0 %v3134, 32
  %v3137 = vpop.permute.xlu0 %3136
  %v3139 = vsel %vm214, %v3137, 0.0
  %3140 = vadd.xlane.f32.xlu0 %v3139
  %v3141 = vpop.xlane.xlu0 %3140
  %vm3142 = vcmask 97368
  %3143 = vst.msk [vmem:[#allocation2] sm:$0xff] %vm3142, %v3141
  %v3144 = vld [vmem:[%s7] sm:$0x3f]
  %v3145 = vld [vmem:[#allocation2] sm:$0xff]
  %3147 = vset.pattern.permute.xlu0 8
  %3148 = vperm.xlu0 %3147, %v3144
  %v3149 = vpop.permute.xlu0 %3148
  %v3151 = vsel %vm98, %v3144, 0
  %3153 = vmatprep.subr.mxu0 0.0
  %3154 = vmatpush1.msra.mxu0 %v3145
  %3155 = vmatprep.subr.mxu0 0.0
  %3156 = vmatpush1.msra.mxu0 0.0
  %3157 = vmatprep.subr.mxu0 0.0
  %3158 = vmatpush1.msra.mxu0 0.0
  %3159 = vmatprep.subr.mxu0 0.0
  %3160 = vmatpush1.msra.mxu0 0.0
  %3161 = vmatprep.subr.mxu0 0.0
  %3162 = vmatpush1.msra.mxu0 0.0
  %3163 = vmatprep.subr.mxu0 0.0
  %3164 = vmatpush1.msra.mxu0 0.0
  %3165 = vmatprep.subr.mxu0 0.0
  %3166 = vmatpush1.msra.mxu0 0.0
  %3167 = vmatprep.subr.mxu0 0.0
  %3168 = vmatpush1.msra.mxu0 0.0
  %3169 = vmatprep.subr.mxu0 0.0
  %3170 = vmatpush1.msra.mxu0 0.0
  %3171 = vmatprep.subr.mxu0 0.0
  %3172 = vmatpush1.msra.mxu0 0.0
  %3173 = vmatprep.subr.mxu0 0.0
  %3174 = vmatpush1.msra.mxu0 0.0
  %3175 = vmatprep.subr.mxu0 0.0
  %3176 = vmatpush1.msra.mxu0 0.0
  %3177 = vmatprep.subr.mxu0 0.0
  %3178 = vmatpush1.msra.mxu0 0.0
  %3179 = vmatprep.subr.mxu0 0.0
  %3180 = vmatpush1.msra.mxu0 0.0
  %3181 = vmatprep.subr.mxu0 0.0
  %3182 = vmatpush1.msra.mxu0 0.0
  %3183 = vmatprep.subr.mxu0 0.0
  %3184 = vmatpush1.msra.mxu0 0.0
  %3185 = vmatprep.subr.mxu0 0.0
  %3186 = vmatpush1.msra.mxu0 0.0
  %3187 = vmatprep.subr.mxu0 0.0
  %3188 = vmatpush1.msra.mxu0 0.0
  %3189 = vmatprep.subr.mxu0 0.0
  %3190 = vmatpush1.msra.mxu0 0.0
  %3191 = vmatprep.subr.mxu0 0.0
  %3192 = vmatpush1.msra.mxu0 0.0
  %3193 = vmatprep.subr.mxu0 0.0
  %3194 = vmatpush1.msra.mxu0 0.0
  %3195 = vmatprep.subr.mxu0 0.0
  %3196 = vmatpush1.msra.mxu0 0.0
  %3197 = vmatprep.subr.mxu0 0.0
  %3198 = vmatpush1.msra.mxu0 0.0
  %3199 = vmatprep.subr.mxu0 0.0
  %3200 = vmatpush1.msra.mxu0 0.0
  %3201 = vmatprep.subr.mxu0 0.0
  %3202 = vmatpush1.msra.mxu0 0.0
  %3203 = vmatprep.subr.mxu0 0.0
  %3204 = vmatpush1.msra.mxu0 0.0
  %3205 = vmatprep.subr.mxu0 0.0
  %3206 = vmatpush1.msra.mxu0 0.0
  %3207 = vmatprep.subr.mxu0 0.0
  %3208 = vmatpush1.msra.mxu0 0.0
  %3209 = vmatprep.subr.mxu0 0.0
  %3210 = vmatpush1.msra.mxu0 0.0
  %3211 = vmatprep.subr.mxu0 0.0
  %3212 = vmatpush1.msra.mxu0 0.0
  %3213 = vmatprep.subr.mxu0 0.0
  %3214 = vmatpush1.msra.mxu0 0.0
  %3215 = vmatprep.subr.mxu0 0.0
  %3216 = vmatpush1.msra.mxu0 0.0
  %3217 = vmatprep.mubr.f32.mxu0 0.0
  %3218 = vmatmul.mubr.f32.gmra.mrb[0].mxu0 %v3151
  %v3219 = vpop.f32.mrb[0].mxu0
  %v3220 = vadd.f32 %v3149, %v3219
  %v3221 = vpop.f32.mrb[0].mxu0
  %3222 = vdwg.mxu0
  %v3223 = vmin.f32 %v3220, 0.0
  %v3224 = vmul.f32 %v3223, 1.442695
  %v3225 = vpow.pop %v3224
  %v3226 = vsub.f32 %v3225, 1.0
  %v3227 = vmul.f32 %v3226, 1.6732632
  %vm3228 = vcmp.gt.f32.partialorder %v3220, 0.0
  %v3229 = vsel %vm3228, %v3220, %v3227
  %v3230 = vmul.f32 %v3229, 1.050701
  %vm3231 = vcmask 95232
  %3232 = vst.msk [vmem:[%s8] sm:$0x3f] %vm3231, %v3230
  // Predicated region
  $region34: #{seq2seq_forward.1} parent=0 // pred_check
    _
  $region35: #{seq2seq_forward.1} parent=0 // pred_check_branch
    %3234 = sbr.rel (0) target = $region37
  $region36: #{seq2seq_forward.1} parent=0 // pred_region
    _
  $region37: #{seq2seq_forward.1} parent=0 // pred_fallthru
    _
  // Predicated region
  $region38: #{seq2seq_forward.1} parent=0 // pred_check
    _
  $region39: #{seq2seq_forward.1} parent=0 // pred_check_branch
    %3236 = sbr.rel (0) target = $region41
  $region40: #{seq2seq_forward.1} parent=0 // pred_region
    _
  $region41: #{seq2seq_forward.1} parent=0 // pred_fallthru
    _

</llo_original>
